<compile_context>
chip_gen: v7x
topology: tpu7x:2x2x1
jax: 0.10.0
libtpu: 0.0.40
codegen_flags: <defaults>
</compile_context>

<pallas_src>
import functools

import jax
import jax.numpy as jnp
from jax.experimental import pallas as pl
from jax.experimental.pallas import tpu as pltpu

_MXU_DTYPE = jnp.bfloat16            # MXU operand / activation dtype
_BN_EPS = 1e-5
_LRELU_SLOPE = 0.2
_FUSED_M_MAX = 4096                  # beyond this prefer tiled parallel-M path


# ------------------------------ small helpers ------------------------------ #
def _round_up(x, m):
    return (x + m - 1) // m * m


def _tpu_vmem_capacity():
    try:
        cap = int(getattr(pltpu.get_tpu_info(), "vmem_capacity_bytes", 0))
        if cap > 0:
            return cap
    except Exception:
        pass
    return 64 * 1024 * 1024          # conservative default (v7x per-TC VMEM)


_VMEM_CAP = _tpu_vmem_capacity()
_VMEM_LIMIT = int(min(_VMEM_CAP * 3 // 4, 96 * 1024 * 1024))
_FUSED_BUDGET = int(min(_VMEM_CAP // 2, 64 * 1024 * 1024))


def _compiler_params(semantics):
    return pltpu.CompilerParams(dimension_semantics=semantics,
                                vmem_limit_bytes=_VMEM_LIMIT)


def _fused_resident_bytes(m, tk, c, head):
    b = 3 * m * c * 4        # f32 accumulator + BN/LeakyReLU epilogue temps
    b += m * c * 2           # bf16 output block
    b += 2 * m * tk * 2      # double-buffered bf16 A tiles
    b += 2 * tk * c * 2      # double-buffered bf16 B tiles
    b += 16 * c * 4          # gamma / beta / head weight / pool slack
    if head:
        b += m * c * 4 + m * 4   # head epilogue temporaries
    return b


def _choose_fused_tk(kdim, m, c, head):
    """Prefer whole-K (single step, no accumulation); else the largest 128-
    multiple divisor that fits; else None -> tiled fallback."""
    cands = [kdim] + [t for t in (512, 256, 128) if kdim % t == 0 and t < kdim]
    for t in cands:
        if _fused_resident_bytes(m, t, c, head) <= _FUSED_BUDGET:
            return t, kdim // t
    return None, None


def _pick_tiled_tk(kdim):
    for t in (512, 256, 128):
        if kdim % t == 0:
            return t
    return kdim              # K equal to the full dim is always a legal block


def _pick_tm(m):
    if m >= 512:
        return 512
    if m >= 256:
        return 256
    return _round_up(max(m, 16), 16)     # bf16 sublane packing


def _bn_lrelu_math(y, gamma, beta):
    """Training-mode BatchNorm (biased var) + LeakyReLU(0.2); y is f32 [M, C]."""
    mean = jnp.mean(y, axis=0, keepdims=True)
    var = jnp.mean(jnp.square(y - mean), axis=0, keepdims=True)
    z = (y - mean) * jax.lax.rsqrt(var + _BN_EPS) * gamma + beta
    return jnp.where(z >= 0.0, z, _LRELU_SLOPE * z)


def _head_math(act, wh, pool):
    """AdaptiveAvgPool2d((1,1)) + 1x1 conv (bias=False) + sigmoid.
    pool is the constant [N, M] averaging matrix (passed in, not rebuilt
    in-kernel).  act@wh first -> [M,1] avoids the big mostly-zero matmul."""
    t = jnp.dot(act, wh, preferred_element_type=jnp.float32)        # [M, 1]
    logits = jnp.dot(pool, t, preferred_element_type=jnp.float32)   # [N, 1]
    return jax.nn.sigmoid(logits)


# --------------------- fused conv + BN + LeakyReLU kernels ------------------ #
def _conv_bn_lrelu_single_kernel(a_ref, b_ref, g_ref, bt_ref, o_ref):
    y = jnp.dot(a_ref[...], b_ref[...], preferred_element_type=jnp.float32)
    o_ref[...] = _bn_lrelu_math(y, g_ref[...], bt_ref[...]).astype(o_ref.dtype)


def _conv_bn_lrelu_multi_kernel(a_ref, b_ref, g_ref, bt_ref, o_ref, acc_ref):
    k = pl.program_id(0)

    @pl.when(k == 0)
    def _():
        acc_ref[...] = jnp.zeros_like(acc_ref)

    acc_ref[...] += jnp.dot(a_ref[...], b_ref[...],
                            preferred_element_type=jnp.float32)

    @pl.when(k == pl.num_programs(0) - 1)
    def _():
        o_ref[...] = _bn_lrelu_math(acc_ref[...], g_ref[...],
                                    bt_ref[...]).astype(o_ref.dtype)


def _conv_bn_lrelu_head_single_kernel(a_ref, b_ref, g_ref, bt_ref, wh_ref,
                                      pool_ref, o_ref):
    y = jnp.dot(a_ref[...], b_ref[...], preferred_element_type=jnp.float32)
    act = _bn_lrelu_math(y, g_ref[...], bt_ref[...])
    o_ref[...] = _head_math(act, wh_ref[...], pool_ref[...])


def _conv_bn_lrelu_head_multi_kernel(a_ref, b_ref, g_ref, bt_ref, wh_ref,
                                     pool_ref, o_ref, acc_ref):
    k = pl.program_id(0)

    @pl.when(k == 0)
    def _():
        acc_ref[...] = jnp.zeros_like(acc_ref)

    acc_ref[...] += jnp.dot(a_ref[...], b_ref[...],
                            preferred_element_type=jnp.float32)

    @pl.when(k == pl.num_programs(0) - 1)
    def _():
        act = _bn_lrelu_math(acc_ref[...], g_ref[...], bt_ref[...])
        o_ref[...] = _head_math(act, wh_ref[...], pool_ref[...])


def conv_block_fused(patches, wmat, gamma, beta, tk, head_w=None, pool=None):
    m, kdim = patches.shape
    c = wmat.shape[1]
    nk = kdim // tk
    a = patches.astype(_MXU_DTYPE)
    b = wmat.astype(_MXU_DTYPE)
    g = gamma.reshape(1, c).astype(jnp.float32)
    bt = beta.reshape(1, c).astype(jnp.float32)
    base_specs = [pl.BlockSpec((m, tk), lambda k: (0, k)),
                  pl.BlockSpec((tk, c), lambda k: (k, 0)),
                  pl.BlockSpec((1, c), lambda k: (0, 0)),
                  pl.BlockSpec((1, c), lambda k: (0, 0))]
    cparams = _compiler_params(("arbitrary",))

    if head_w is None:
        if nk == 1:
            return pl.pallas_call(
                _conv_bn_lrelu_single_kernel,
                out_shape=jax.ShapeDtypeStruct((m, c), _MXU_DTYPE),
                grid=(1,),
                in_specs=base_specs,
                out_specs=pl.BlockSpec((m, c), lambda k: (0, 0)),
                compiler_params=cparams,
            )(a, b, g, bt)
        return pl.pallas_call(
            _conv_bn_lrelu_multi_kernel,
            out_shape=jax.ShapeDtypeStruct((m, c), _MXU_DTYPE),
            grid=(nk,),
            in_specs=base_specs,
            out_specs=pl.BlockSpec((m, c), lambda k: (0, 0)),
            scratch_shapes=[pltpu.VMEM((m, c), jnp.float32)],
            compiler_params=cparams,
        )(a, b, g, bt)

    n = pool.shape[0]
    wh = head_w.astype(jnp.float32)
    poolf = pool.astype(jnp.float32)
    head_specs = base_specs + [pl.BlockSpec((c, 1), lambda k: (0, 0)),
                               pl.BlockSpec((n, m), lambda k: (0, 0))]
    if nk == 1:
        return pl.pallas_call(
            _conv_bn_lrelu_head_single_kernel,
            out_shape=jax.ShapeDtypeStruct((n, 1), jnp.float32),
            grid=(1,),
            in_specs=head_specs,
            out_specs=pl.BlockSpec((n, 1), lambda k: (0, 0)),
            compiler_params=cparams,
        )(a, b, g, bt, wh, poolf)
    return pl.pallas_call(
        _conv_bn_lrelu_head_multi_kernel,
        out_shape=jax.ShapeDtypeStruct((n, 1), jnp.float32),
        grid=(nk,),
        in_specs=head_specs,
        out_specs=pl.BlockSpec((n, 1), lambda k: (0, 0)),
        scratch_shapes=[pltpu.VMEM((m, c), jnp.float32)],
        compiler_params=cparams,
    )(a, b, g, bt, wh, poolf)


# ---------- scalable fallback: tiled matmul with fused BN partial stats ----- #
def _matmul_stats_kernel(a_ref, b_ref, y_ref, stats_ref):
    k = pl.program_id(1)

    @pl.when(k == 0)
    def _():
        y_ref[...] = jnp.zeros_like(y_ref)

    y_ref[...] += jnp.dot(a_ref[...], b_ref[...],
                          preferred_element_type=jnp.float32)

    @pl.when(k == pl.num_programs(1) - 1)
    def _():
        y = y_ref[...]
        c = y.shape[1]
        s = jnp.sum(y, axis=0, keepdims=True)
        ss = jnp.sum(y * y, axis=0, keepdims=True)
        rows = jax.lax.broadcasted_iota(jnp.int32, (8, c), 0)
        # per-M-tile partial stats packed lane-dense: sublane 0 = sum,
        # sublane 1 = sum of squares (removes the standalone stats pass)
        stats_ref[0] = (jnp.where(rows == 0, s, 0.0) +
                        jnp.where(rows == 1, ss, 0.0))


def conv_tiled_with_stats(patches, wmat, tm, tk):
    m, kdim = patches.shape
    c = wmat.shape[1]
    mp = _round_up(m, tm)
    if mp != m:
        # zero rows contribute nothing to the BN sums, sliced off afterwards
        patches = jnp.pad(patches, ((0, mp - m), (0, 0)))
    nm, nk = mp // tm, kdim // tk
    return pl.pallas_call(
        _matmul_stats_kernel,
        out_shape=(jax.ShapeDtypeStruct((mp, c), jnp.float32),
                   jax.ShapeDtypeStruct((nm, 8, c), jnp.float32)),
        grid=(nm, nk),
        in_specs=[pl.BlockSpec((tm, tk), lambda i, kk: (i, kk)),
                  pl.BlockSpec((tk, c), lambda i, kk: (kk, 0))],
        out_specs=(pl.BlockSpec((tm, c), lambda i, kk: (i, 0)),
                   pl.BlockSpec((1, 8, c), lambda i, kk: (i, 0, 0))),
        compiler_params=_compiler_params(("parallel", "arbitrary")),
    )(patches.astype(_MXU_DTYPE), wmat.astype(_MXU_DTYPE))


def _finish_stats(stats, m_real):
    s = jnp.sum(stats[:, 0, :], axis=0, keepdims=True)
    ss = jnp.sum(stats[:, 1, :], axis=0, keepdims=True)
    mean = s / m_real
    var = jnp.maximum(ss / m_real - mean * mean, 0.0)   # biased (train mode)
    return mean, var


def _scale_shift_lrelu_kernel(y_ref, scale_ref, shift_ref, o_ref):
    z = y_ref[...] * scale_ref[...] + shift_ref[...]
    o_ref[...] = jnp.where(z >= 0.0, z, _LRELU_SLOPE * z).astype(o_ref.dtype)


def bn_lrelu_tiled(y, mean, var, gamma, beta, tm):
    mp, c = y.shape
    rstd = jax.lax.rsqrt(var + _BN_EPS)
    g = gamma.reshape(1, c).astype(jnp.float32)
    b = beta.reshape(1, c).astype(jnp.float32)
    scale = g * rstd
    shift = b - mean * g * rstd
    return pl.pallas_call(
        _scale_shift_lrelu_kernel,
        out_shape=jax.ShapeDtypeStruct((mp, c), _MXU_DTYPE),
        grid=(mp // tm,),
        in_specs=[pl.BlockSpec((tm, c), lambda i: (i, 0)),
                  pl.BlockSpec((1, c), lambda i: (0, 0)),
                  pl.BlockSpec((1, c), lambda i: (0, 0))],
        out_specs=pl.BlockSpec((tm, c), lambda i: (i, 0)),
        compiler_params=_compiler_params(("parallel",)),
    )(y, scale, shift)


# ----------------- standalone head kernel (fallback path only) -------------- #
def _head_kernel(feat_ref, wh_ref, pool_ref, o_ref):
    act = feat_ref[...].astype(jnp.float32)
    o_ref[...] = _head_math(act, wh_ref[...], pool_ref[...])


def head_standalone(feat, wh, pool):
    m, c = feat.shape
    n = pool.shape[0]
    return pl.pallas_call(
        _head_kernel,
        out_shape=jax.ShapeDtypeStruct((n, 1), jnp.float32),
        grid=(1,),
        in_specs=[pl.BlockSpec((m, c), lambda i: (0, 0)),
                  pl.BlockSpec((c, 1), lambda i: (0, 0)),
                  pl.BlockSpec((n, m), lambda i: (0, 0))],
        out_specs=pl.BlockSpec((n, 1), lambda i: (0, 0)),
        compiler_params=_compiler_params(("arbitrary",)),
    )(feat, wh.astype(jnp.float32), pool.astype(jnp.float32))


# ----------------------------------- glue ----------------------------------- #
def im2col_nhwc(x, k=4, s=2, p=1):
    """x: [N, H, W, C] -> patches [N*Ho*Wo, Kh*Kw*C] (cols ordered kh,kw,cin)."""
    n, h, w, c = x.shape
    xp = jnp.pad(x, ((0, 0), (p, p), (p, p), (0, 0)))
    ho = (h + 2 * p - k) // s + 1
    wo = (w + 2 * p - k) // s + 1
    cols = [xp[:, kh:kh + s * ho:s, kw:kw + s * wo:s, :]
            for kh in range(k) for kw in range(k)]
    patches = jnp.concatenate(cols, axis=-1)          # [N, Ho, Wo, k*k*C]
    return patches.reshape(n * ho * wo, k * k * c), ho, wo


def init_params(key, nc=1, ndf=64):
    ks = jax.random.split(key, 4)

    def conv_w(k, cout, cin, ksz):
        fan_in = cin * ksz * ksz
        bound = 1.0 / jnp.sqrt(jnp.float32(fan_in))
        return jax.random.uniform(k, (cout, cin, ksz, ksz), jnp.float32,
                                  -bound, bound)

    chans = [(nc, ndf), (ndf, ndf * 2), (ndf * 2, ndf * 4)]
    blocks = []
    for i, (cin, cout) in enumerate(chans):
        w = conv_w(ks[i], cout, cin, 4)
        gamma = jnp.ones((cout,), jnp.float32)     # BatchNorm2d default weight
        beta = jnp.zeros((cout,), jnp.float32)     # BatchNorm2d default bias
        blocks.append((w, gamma, beta))
    final_w = conv_w(ks[3], 1, ndf * 4, 1)         # [1, ndf*4, 1, 1], bias=False
    return {"blocks": blocks, "final_w": final_w}


def discriminator_forward(x, params, force_tiled=False):
    """x: [N, nc, H, W] f32 (PyTorch NCHW) -> [N, 1] f32 sigmoid scores."""
    n = x.shape[0]
    # NOTE: activations run in bf16 (MXU dtype); conv inputs therefore differ
    # slightly from a full-f32 PyTorch reference.
    h = jnp.transpose(x, (0, 2, 3, 1)).astype(_MXU_DTYPE)     # NHWC internally
    nblocks = len(params["blocks"])
    out = None
    for li, (w, gamma, beta) in enumerate(params["blocks"]):
        cout = w.shape[0]
        cpad = max(_round_up(cout, 128), 128)      # lane-dense output stores
        patches, ho, wo = im2col_nhwc(h)
        wmat = w.transpose(2, 3, 1, 0).reshape(-1, cout)
        if cpad != cout:
            # zero-padded columns stay exactly zero through BN/LeakyReLU
            wmat = jnp.pad(wmat, ((0, 0), (0, cpad - cout)))
            gamma = jnp.pad(gamma, (0, cpad - cout))
            beta = jnp.pad(beta, (0, cpad - cout))
        m, kdim = patches.shape
        last = li == nblocks - 1
        hw = ho * wo

        wh = pool = None
        if last:
            wh = params["final_w"].reshape(cout, 1)
            if cpad != cout:
                wh = jnp.pad(wh, ((0, cpad - cout), (0, 0)))
            pool = (jnp.kron(jnp.eye(n, dtype=jnp.float32),
                             jnp.ones((1, hw), jnp.float32)) / hw)   # [N, M]

        tk, _nk = _choose_fused_tk(kdim, m, cpad, head=last)
        fused = (not force_tiled) and (tk is not None) and (m <= _FUSED_M_MAX)

        if fused:
            if last:
                out = conv_block_fused(patches, wmat, gamma, beta, tk,
                                       head_w=wh, pool=pool)
            else:
                y = conv_block_fused(patches, wmat, gamma, beta, tk)
                if cpad != cout:
                    y = y[:, :cout]
                h = y.reshape(n, ho, wo, cout)
        else:
            tm = _pick_tm(m)
            tk_t = _pick_tiled_tk(kdim)
            y, stats = conv_tiled_with_stats(patches, wmat, tm, tk_t)
            mean, var = _finish_stats(stats, m)
            y = bn_lrelu_tiled(y, mean, var, gamma, beta, tm)[:m]
            if last:
                out = head_standalone(y, wh, pool)
            else:
                if cpad != cout:
                    y = y[:, :cout]
                h = y.reshape(n, ho, wo, cout)
    return out


if __name__ == "__main__":
    nc_, ndf_ = 1, 64
    key = jax.random.PRNGKey(0)
    kx, kparams = jax.random.split(key)
    x = jax.random.normal(kx, (2, nc_, 16, 16), dtype=jnp.float32)
    params = init_params(kparams, nc=nc_, ndf=ndf_)

    # primary (fully fused, single-K-step) path: 3 pallas_calls total
    fwd = jax.jit(functools.partial(discriminator_forward, force_tiled=False))
    out = jax.block_until_ready(fwd(x, params))
    assert out.shape == (2, 1)
    assert bool(jnp.all(jnp.isfinite(out)))
    assert bool(jnp.all((out >= 0.0) & (out <= 1.0)))

    # also exercise the scalable tiled-M / fused-stats fallback and cross-check
    fwd_tiled = jax.jit(functools.partial(discriminator_forward,
                                          force_tiled=True))
    out_tiled = jax.block_until_ready(fwd_tiled(x, params))
    assert out_tiled.shape == (2, 1)
    assert bool(jnp.allclose(out, out_tiled, atol=5e-2, rtol=5e-2))

    print("KERNEL_OK")
</pallas_src>

<mosaic_0001>
module attributes {stable_mosaic.version = 11 : i64} {
  func.func @_conv_bn_lrelu_single_kernel(%arg0: i32, %arg1: memref<128x16xbf16, #tpu.memory_space<vmem>>, %arg2: memref<16x128xbf16, #tpu.memory_space<vmem>>, %arg3: memref<1x128xf32, #tpu.memory_space<vmem>>, %arg4: memref<1x128xf32, #tpu.memory_space<vmem>>, %arg5: memref<128x128xbf16, #tpu.memory_space<vmem>>) attributes {dimension_semantics = [#tpu.dimension_semantics<arbitrary>], iteration_bounds = array<i64: 1>, scalar_prefetch = 0 : i64, scratch_operands = 0 : i64, tpu.core_type = #tpu.core_type<tc>, window_params = [{transform_indices = @transform_0, window_bounds = array<i64: 128, 16>}, {transform_indices = @transform_1, window_bounds = array<i64: 16, 128>}, {pipeline_mode = #tpu.pipeline_mode<synchronous>, transform_indices = @transform_2, window_bounds = array<i64: 1, 128>}, {pipeline_mode = #tpu.pipeline_mode<synchronous>, transform_indices = @transform_3, window_bounds = array<i64: 1, 128>}, {pipeline_mode = #tpu.pipeline_mode<synchronous>, transform_indices = @transform_4, window_bounds = array<i64: 128, 128>}]} {
    %c0 = arith.constant 0 : index
    %c0_0 = arith.constant 0 : index
    %0 = vector.load %arg1[%c0, %c0_0] : memref<128x16xbf16, #tpu.memory_space<vmem>>, vector<128x16xbf16>
    %c0_1 = arith.constant 0 : index
    %c0_2 = arith.constant 0 : index
    %1 = vector.load %arg2[%c0_1, %c0_2] : memref<16x128xbf16, #tpu.memory_space<vmem>>, vector<16x128xbf16>
    %cst = arith.constant dense<0.000000e+00> : vector<128x128xf32>
    %2 = tpu.matmul %0, %1, %cst {dimension_numbers = #tpu.dot_dimension_numbers<[1], [0], [0], [1], [0, 0, 1, 1], [], []>} : vector<128x16xbf16>, vector<16x128xbf16>, vector<128x128xf32> -> vector<128x128xf32>
    %c0_3 = arith.constant 0 : index
    %c0_4 = arith.constant 0 : index
    %3 = vector.load %arg3[%c0_3, %c0_4] : memref<1x128xf32, #tpu.memory_space<vmem>>, vector<1x128xf32>
    %c0_5 = arith.constant 0 : index
    %c0_6 = arith.constant 0 : index
    %4 = vector.load %arg4[%c0_5, %c0_6] : memref<1x128xf32, #tpu.memory_space<vmem>>, vector<1x128xf32>
    %cst_7 = arith.constant dense<0.000000e+00> : vector<128xf32>
    %5 = vector.multi_reduction <add>, %2, %cst_7 [0] : vector<128x128xf32> to vector<128xf32>
    %6 = vector.shape_cast %5 : vector<128xf32> to vector<1x128xf32>
    %cst_8 = arith.constant 1.280000e+02 : f32
    %7 = vector.broadcast %cst_8 : f32 to vector<1x128xf32>
    %8 = arith.divf %6, %7 : vector<1x128xf32>
    %9 = vector.broadcast %8 : vector<1x128xf32> to vector<128x128xf32>
    %10 = arith.subf %2, %9 : vector<128x128xf32>
    %11 = arith.mulf %10, %10 : vector<128x128xf32>
    %cst_9 = arith.constant dense<0.000000e+00> : vector<128xf32>
    %12 = vector.multi_reduction <add>, %11, %cst_9 [0] : vector<128x128xf32> to vector<128xf32>
    %13 = vector.shape_cast %12 : vector<128xf32> to vector<1x128xf32>
    %cst_10 = arith.constant 1.280000e+02 : f32
    %14 = vector.broadcast %cst_10 : f32 to vector<1x128xf32>
    %15 = arith.divf %13, %14 : vector<1x128xf32>
    %16 = vector.broadcast %8 : vector<1x128xf32> to vector<128x128xf32>
    %17 = arith.subf %2, %16 : vector<128x128xf32>
    %cst_11 = arith.constant 9.99999974E-6 : f32
    %18 = vector.broadcast %cst_11 : f32 to vector<1x128xf32>
    %19 = arith.addf %15, %18 : vector<1x128xf32>
    %20 = math.rsqrt %19 : vector<1x128xf32>
    %21 = vector.broadcast %20 : vector<1x128xf32> to vector<128x128xf32>
    %22 = arith.mulf %17, %21 : vector<128x128xf32>
    %23 = vector.broadcast %3 : vector<1x128xf32> to vector<128x128xf32>
    %24 = arith.mulf %22, %23 : vector<128x128xf32>
    %25 = vector.broadcast %4 : vector<1x128xf32> to vector<128x128xf32>
    %26 = arith.addf %24, %25 : vector<128x128xf32>
    %cst_12 = arith.constant 0.000000e+00 : f32
    %27 = vector.broadcast %cst_12 : f32 to vector<128x128xf32>
    %28 = arith.cmpf oge, %26, %27 : vector<128x128xf32>
    %cst_13 = arith.constant 2.000000e-01 : f32
    %29 = vector.broadcast %cst_13 : f32 to vector<128x128xf32>
    %30 = arith.mulf %29, %26 : vector<128x128xf32>
    %31 = arith.select %28, %26, %30 : vector<128x128xi1>, vector<128x128xf32>
    %32 = arith.truncf %31 : vector<128x128xf32> to vector<128x128xbf16>
    %c0_14 = arith.constant 0 : index
    %c0_15 = arith.constant 0 : index
    %33 = vector.load %arg5[%c0_14, %c0_15] : memref<128x128xbf16, #tpu.memory_space<vmem>>, vector<128x128xbf16>
    tpu.vector_store %arg5[%c0_14, %c0_15], %32 {strides = array<i32>} : memref<128x128xbf16, #tpu.memory_space<vmem>>, vector<128x128xbf16>,
    return
  }
  func.func @transform_0(%arg0: i32) -> (i32, i32) {
    %c0_i32 = arith.constant 0 : i32
    %c0_i32_0 = arith.constant 0 : i32
    return %c0_i32, %arg0 : i32, i32
  }
  func.func @transform_1(%arg0: i32) -> (i32, i32) {
    %c0_i32 = arith.constant 0 : i32
    %c0_i32_0 = arith.constant 0 : i32
    return %arg0, %c0_i32 : i32, i32
  }
  func.func @transform_2(%arg0: i32) -> (i32, i32) {
    %c0_i32 = arith.constant 0 : i32
    %c0_i32_0 = arith.constant 0 : i32
    %c0_i32_1 = arith.constant 0 : i32
    return %c0_i32, %c0_i32_0 : i32, i32
  }
  func.func @transform_3(%arg0: i32) -> (i32, i32) {
    %c0_i32 = arith.constant 0 : i32
    %c0_i32_0 = arith.constant 0 : i32
    %c0_i32_1 = arith.constant 0 : i32
    return %c0_i32, %c0_i32_0 : i32, i32
  }
  func.func @transform_4(%arg0: i32) -> (i32, i32) {
    %c0_i32 = arith.constant 0 : i32
    %c0_i32_0 = arith.constant 0 : i32
    %c0_i32_1 = arith.constant 0 : i32
    return %c0_i32, %c0_i32_0 : i32, i32
  }
}

module attributes {stable_mosaic.version = 11 : i64} {
  func.func @_conv_bn_lrelu_single_kernel(%arg0: i32, %arg1: memref<32x1024xbf16, #tpu.memory_space<vmem>>, %arg2: memref<1024x128xbf16, #tpu.memory_space<vmem>>, %arg3: memref<1x128xf32, #tpu.memory_space<vmem>>, %arg4: memref<1x128xf32, #tpu.memory_space<vmem>>, %arg5: memref<32x128xbf16, #tpu.memory_space<vmem>>) attributes {dimension_semantics = [#tpu.dimension_semantics<arbitrary>], iteration_bounds = array<i64: 1>, scalar_prefetch = 0 : i64, scratch_operands = 0 : i64, tpu.core_type = #tpu.core_type<tc>, window_params = [{transform_indices = @transform_0, window_bounds = array<i64: 32, 1024>}, {transform_indices = @transform_1, window_bounds = array<i64: 1024, 128>}, {pipeline_mode = #tpu.pipeline_mode<synchronous>, transform_indices = @transform_2, window_bounds = array<i64: 1, 128>}, {pipeline_mode = #tpu.pipeline_mode<synchronous>, transform_indices = @transform_3, window_bounds = array<i64: 1, 128>}, {pipeline_mode = #tpu.pipeline_mode<synchronous>, transform_indices = @transform_4, window_bounds = array<i64: 32, 128>}]} {
    %c0 = arith.constant 0 : index
    %c0_0 = arith.constant 0 : index
    %0 = vector.load %arg1[%c0, %c0_0] : memref<32x1024xbf16, #tpu.memory_space<vmem>>, vector<32x1024xbf16>
    %c0_1 = arith.constant 0 : index
    %c0_2 = arith.constant 0 : index
    %1 = vector.load %arg2[%c0_1, %c0_2] : memref<1024x128xbf16, #tpu.memory_space<vmem>>, vector<1024x128xbf16>
    %cst = arith.constant dense<0.000000e+00> : vector<32x128xf32>
    %2 = tpu.matmul %0, %1, %cst {dimension_numbers = #tpu.dot_dimension_numbers<[1], [0], [0], [1], [0, 0, 1, 1], [], []>} : vector<32x1024xbf16>, vector<1024x128xbf16>, vector<32x128xf32> -> vector<32x128xf32>
    %c0_3 = arith.constant 0 : index
    %c0_4 = arith.constant 0 : index
    %3 = vector.load %arg3[%c0_3, %c0_4] : memref<1x128xf32, #tpu.memory_space<vmem>>, vector<1x128xf32>
    %c0_5 = arith.constant 0 : index
    %c0_6 = arith.constant 0 : index
    %4 = vector.load %arg4[%c0_5, %c0_6] : memref<1x128xf32, #tpu.memory_space<vmem>>, vector<1x128xf32>
    %cst_7 = arith.constant dense<0.000000e+00> : vector<128xf32>
    %5 = vector.multi_reduction <add>, %2, %cst_7 [0] : vector<32x128xf32> to vector<128xf32>
    %6 = vector.shape_cast %5 : vector<128xf32> to vector<1x128xf32>
    %cst_8 = arith.constant 3.200000e+01 : f32
    %7 = vector.broadcast %cst_8 : f32 to vector<1x128xf32>
    %8 = arith.divf %6, %7 : vector<1x128xf32>
    %9 = vector.broadcast %8 : vector<1x128xf32> to vector<32x128xf32>
    %10 = arith.subf %2, %9 : vector<32x128xf32>
    %11 = arith.mulf %10, %10 : vector<32x128xf32>
    %cst_9 = arith.constant dense<0.000000e+00> : vector<128xf32>
    %12 = vector.multi_reduction <add>, %11, %cst_9 [0] : vector<32x128xf32> to vector<128xf32>
    %13 = vector.shape_cast %12 : vector<128xf32> to vector<1x128xf32>
    %cst_10 = arith.constant 3.200000e+01 : f32
    %14 = vector.broadcast %cst_10 : f32 to vector<1x128xf32>
    %15 = arith.divf %13, %14 : vector<1x128xf32>
    %16 = vector.broadcast %8 : vector<1x128xf32> to vector<32x128xf32>
    %17 = arith.subf %2, %16 : vector<32x128xf32>
    %cst_11 = arith.constant 9.99999974E-6 : f32
    %18 = vector.broadcast %cst_11 : f32 to vector<1x128xf32>
    %19 = arith.addf %15, %18 : vector<1x128xf32>
    %20 = math.rsqrt %19 : vector<1x128xf32>
    %21 = vector.broadcast %20 : vector<1x128xf32> to vector<32x128xf32>
    %22 = arith.mulf %17, %21 : vector<32x128xf32>
    %23 = vector.broadcast %3 : vector<1x128xf32> to vector<32x128xf32>
    %24 = arith.mulf %22, %23 : vector<32x128xf32>
    %25 = vector.broadcast %4 : vector<1x128xf32> to vector<32x128xf32>
    %26 = arith.addf %24, %25 : vector<32x128xf32>
    %cst_12 = arith.constant 0.000000e+00 : f32
    %27 = vector.broadcast %cst_12 : f32 to vector<32x128xf32>
    %28 = arith.cmpf oge, %26, %27 : vector<32x128xf32>
    %cst_13 = arith.constant 2.000000e-01 : f32
    %29 = vector.broadcast %cst_13 : f32 to vector<32x128xf32>
    %30 = arith.mulf %29, %26 : vector<32x128xf32>
    %31 = arith.select %28, %26, %30 : vector<32x128xi1>, vector<32x128xf32>
    %32 = arith.truncf %31 : vector<32x128xf32> to vector<32x128xbf16>
    %c0_14 = arith.constant 0 : index
    %c0_15 = arith.constant 0 : index
    %33 = vector.load %arg5[%c0_14, %c0_15] : memref<32x128xbf16, #tpu.memory_space<vmem>>, vector<32x128xbf16>
    tpu.vector_store %arg5[%c0_14, %c0_15], %32 {strides = array<i32>} : memref<32x128xbf16, #tpu.memory_space<vmem>>, vector<32x128xbf16>,
    return
  }
  func.func @transform_0(%arg0: i32) -> (i32, i32) {
    %c0_i32 = arith.constant 0 : i32
    %c0_i32_0 = arith.constant 0 : i32
    return %c0_i32, %arg0 : i32, i32
  }
  func.func @transform_1(%arg0: i32) -> (i32, i32) {
    %c0_i32 = arith.constant 0 : i32
    %c0_i32_0 = arith.constant 0 : i32
    return %arg0, %c0_i32 : i32, i32
  }
  func.func @transform_2(%arg0: i32) -> (i32, i32) {
    %c0_i32 = arith.constant 0 : i32
    %c0_i32_0 = arith.constant 0 : i32
    %c0_i32_1 = arith.constant 0 : i32
    return %c0_i32, %c0_i32_0 : i32, i32
  }
  func.func @transform_3(%arg0: i32) -> (i32, i32) {
    %c0_i32 = arith.constant 0 : i32
    %c0_i32_0 = arith.constant 0 : i32
    %c0_i32_1 = arith.constant 0 : i32
    return %c0_i32, %c0_i32_0 : i32, i32
  }
  func.func @transform_4(%arg0: i32) -> (i32, i32) {
    %c0_i32 = arith.constant 0 : i32
    %c0_i32_0 = arith.constant 0 : i32
    %c0_i32_1 = arith.constant 0 : i32
    return %c0_i32, %c0_i32_0 : i32, i32
  }
}

module attributes {stable_mosaic.version = 11 : i64} {
  func.func @_conv_bn_lrelu_head_single_kernel(%arg0: i32, %arg1: memref<8x2048xbf16, #tpu.memory_space<vmem>>, %arg2: memref<2048x256xbf16, #tpu.memory_space<vmem>>, %arg3: memref<1x256xf32, #tpu.memory_space<vmem>>, %arg4: memref<1x256xf32, #tpu.memory_space<vmem>>, %arg5: memref<256x1xf32, #tpu.memory_space<vmem>>, %arg6: memref<2x8xf32, #tpu.memory_space<vmem>>, %arg7: memref<2x1xf32, #tpu.memory_space<vmem>>) attributes {dimension_semantics = [#tpu.dimension_semantics<arbitrary>], iteration_bounds = array<i64: 1>, scalar_prefetch = 0 : i64, scratch_operands = 0 : i64, tpu.core_type = #tpu.core_type<tc>, window_params = [{transform_indices = @transform_0, window_bounds = array<i64: 8, 2048>}, {transform_indices = @transform_1, window_bounds = array<i64: 2048, 256>}, {pipeline_mode = #tpu.pipeline_mode<synchronous>, transform_indices = @transform_2, window_bounds = array<i64: 1, 256>}, {pipeline_mode = #tpu.pipeline_mode<synchronous>, transform_indices = @transform_3, window_bounds = array<i64: 1, 256>}, {pipeline_mode = #tpu.pipeline_mode<synchronous>, transform_indices = @transform_4, window_bounds = array<i64: 256, 1>}, {pipeline_mode = #tpu.pipeline_mode<synchronous>, transform_indices = @transform_5, window_bounds = array<i64: 2, 8>}, {pipeline_mode = #tpu.pipeline_mode<synchronous>, transform_indices = @transform_6, window_bounds = array<i64: 2, 1>}]} {
    %c0 = arith.constant 0 : index
    %c0_0 = arith.constant 0 : index
    %0 = vector.load %arg1[%c0, %c0_0] : memref<8x2048xbf16, #tpu.memory_space<vmem>>, vector<8x2048xbf16>
    %c0_1 = arith.constant 0 : index
    %c0_2 = arith.constant 0 : index
    %1 = vector.load %arg2[%c0_1, %c0_2] : memref<2048x256xbf16, #tpu.memory_space<vmem>>, vector<2048x256xbf16>
    %cst = arith.constant dense<0.000000e+00> : vector<8x256xf32>
    %2 = tpu.matmul %0, %1, %cst {dimension_numbers = #tpu.dot_dimension_numbers<[1], [0], [0], [1], [0, 0, 1, 1], [], []>} : vector<8x2048xbf16>, vector<2048x256xbf16>, vector<8x256xf32> -> vector<8x256xf32>
    %c0_3 = arith.constant 0 : index
    %c0_4 = arith.constant 0 : index
    %3 = vector.load %arg3[%c0_3, %c0_4] : memref<1x256xf32, #tpu.memory_space<vmem>>, vector<1x256xf32>
    %c0_5 = arith.constant 0 : index
    %c0_6 = arith.constant 0 : index
    %4 = vector.load %arg4[%c0_5, %c0_6] : memref<1x256xf32, #tpu.memory_space<vmem>>, vector<1x256xf32>
    %cst_7 = arith.constant dense<0.000000e+00> : vector<256xf32>
    %5 = vector.multi_reduction <add>, %2, %cst_7 [0] : vector<8x256xf32> to vector<256xf32>
    %6 = vector.shape_cast %5 : vector<256xf32> to vector<1x256xf32>
    %cst_8 = arith.constant 8.000000e+00 : f32
    %7 = vector.broadcast %cst_8 : f32 to vector<1x256xf32>
    %8 = arith.divf %6, %7 : vector<1x256xf32>
    %9 = vector.broadcast %8 : vector<1x256xf32> to vector<8x256xf32>
    %10 = arith.subf %2, %9 : vector<8x256xf32>
    %11 = arith.mulf %10, %10 : vector<8x256xf32>
    %cst_9 = arith.constant dense<0.000000e+00> : vector<256xf32>
    %12 = vector.multi_reduction <add>, %11, %cst_9 [0] : vector<8x256xf32> to vector<256xf32>
    %13 = vector.shape_cast %12 : vector<256xf32> to vector<1x256xf32>
    %cst_10 = arith.constant 8.000000e+00 : f32
    %14 = vector.broadcast %cst_10 : f32 to vector<1x256xf32>
    %15 = arith.divf %13, %14 : vector<1x256xf32>
    %16 = vector.broadcast %8 : vector<1x256xf32> to vector<8x256xf32>
    %17 = arith.subf %2, %16 : vector<8x256xf32>
    %cst_11 = arith.constant 9.99999974E-6 : f32
    %18 = vector.broadcast %cst_11 : f32 to vector<1x256xf32>
    %19 = arith.addf %15, %18 : vector<1x256xf32>
    %20 = math.rsqrt %19 : vector<1x256xf32>
    %21 = vector.broadcast %20 : vector<1x256xf32> to vector<8x256xf32>
    %22 = arith.mulf %17, %21 : vector<8x256xf32>
    %23 = vector.broadcast %3 : vector<1x256xf32> to vector<8x256xf32>
    %24 = arith.mulf %22, %23 : vector<8x256xf32>
    %25 = vector.broadcast %4 : vector<1x256xf32> to vector<8x256xf32>
    %26 = arith.addf %24, %25 : vector<8x256xf32>
    %cst_12 = arith.constant 0.000000e+00 : f32
    %27 = vector.broadcast %cst_12 : f32 to vector<8x256xf32>
    %28 = arith.cmpf oge, %26, %27 : vector<8x256xf32>
    %cst_13 = arith.constant 2.000000e-01 : f32
    %29 = vector.broadcast %cst_13 : f32 to vector<8x256xf32>
    %30 = arith.mulf %29, %26 : vector<8x256xf32>
    %31 = arith.select %28, %26, %30 : vector<8x256xi1>, vector<8x256xf32>
    %c0_14 = arith.constant 0 : index
    %c0_15 = arith.constant 0 : index
    %32 = vector.load %arg5[%c0_14, %c0_15] : memref<256x1xf32, #tpu.memory_space<vmem>>, vector<256x1xf32>
    %c0_16 = arith.constant 0 : index
    %c0_17 = arith.constant 0 : index
    %33 = vector.load %arg6[%c0_16, %c0_17] : memref<2x8xf32, #tpu.memory_space<vmem>>, vector<2x8xf32>
    %cst_18 = arith.constant dense<0.000000e+00> : vector<8x1xf32>
    %34 = tpu.matmul %31, %32, %cst_18 {dimension_numbers = #tpu.dot_dimension_numbers<[1], [0], [0], [1], [0, 0, 1, 1], [], []>} : vector<8x256xf32>, vector<256x1xf32>, vector<8x1xf32> -> vector<8x1xf32>
    %cst_19 = arith.constant dense<0.000000e+00> : vector<2x1xf32>
    %35 = tpu.matmul %33, %34, %cst_19 {dimension_numbers = #tpu.dot_dimension_numbers<[1], [0], [0], [1], [0, 0, 1, 1], [], []>} : vector<2x8xf32>, vector<8x1xf32>, vector<2x1xf32> -> vector<2x1xf32>
    %36 = arith.negf %35 : vector<2x1xf32>
    %37 = math.exp %36 : vector<2x1xf32>
    %cst_20 = arith.constant 1.000000e+00 : f32
    %38 = vector.broadcast %cst_20 : f32 to vector<2x1xf32>
    %39 = arith.addf %38, %37 : vector<2x1xf32>
    %40 = arith.divf %38, %39 : vector<2x1xf32>
    %c0_21 = arith.constant 0 : index
    %c0_22 = arith.constant 0 : index
    %41 = vector.load %arg7[%c0_21, %c0_22] : memref<2x1xf32, #tpu.memory_space<vmem>>, vector<2x1xf32>
    tpu.vector_store %arg7[%c0_21, %c0_22], %40 {strides = array<i32>} : memref<2x1xf32, #tpu.memory_space<vmem>>, vector<2x1xf32>,
    return
  }
  func.func @transform_0(%arg0: i32) -> (i32, i32) {
    %c0_i32 = arith.constant 0 : i32
    %c0_i32_0 = arith.constant 0 : i32
    return %c0_i32, %arg0 : i32, i32
  }
  func.func @transform_1(%arg0: i32) -> (i32, i32) {
    %c0_i32 = arith.constant 0 : i32
    %c0_i32_0 = arith.constant 0 : i32
    return %arg0, %c0_i32 : i32, i32
  }
  func.func @transform_2(%arg0: i32) -> (i32, i32) {
    %c0_i32 = arith.constant 0 : i32
    %c0_i32_0 = arith.constant 0 : i32
    %c0_i32_1 = arith.constant 0 : i32
    return %c0_i32, %c0_i32_0 : i32, i32
  }
  func.func @transform_3(%arg0: i32) -> (i32, i32) {
    %c0_i32 = arith.constant 0 : i32
    %c0_i32_0 = arith.constant 0 : i32
    %c0_i32_1 = arith.constant 0 : i32
    return %c0_i32, %c0_i32_0 : i32, i32
  }
  func.func @transform_4(%arg0: i32) -> (i32, i32) {
    %c0_i32 = arith.constant 0 : i32
    %c0_i32_0 = arith.constant 0 : i32
    %c0_i32_1 = arith.constant 0 : i32
    return %c0_i32, %c0_i32_0 : i32, i32
  }
  func.func @transform_5(%arg0: i32) -> (i32, i32) {
    %c0_i32 = arith.constant 0 : i32
    %c0_i32_0 = arith.constant 0 : i32
    %c0_i32_1 = arith.constant 0 : i32
    return %c0_i32, %c0_i32_0 : i32, i32
  }
  func.func @transform_6(%arg0: i32) -> (i32, i32) {
    %c0_i32 = arith.constant 0 : i32
    %c0_i32_0 = arith.constant 0 : i32
    %c0_i32_1 = arith.constant 0 : i32
    return %c0_i32, %c0_i32_0 : i32, i32
  }
}

</mosaic_0001>

<llo_original>
// kernel: discriminator_forward.3
$region0: #{discriminator_forward.3}
  #allocation0 [shape = 'u32[]', space=smem, size = 0x4, offset = 0x4, fixed_abs, tag = 'smem constant byte address 0x4 - core index']
  #allocation1 [shape = 'u32[144,128]{1,0:T(1,128)}', space=vmem, size = 0x12000, scoped, tag = 'internal scratch']
  %s0 = inlined_call_operand.vmem [shape: bf16[128,16], index: 0, kind: input, shape index: {}]
  %s1 = inlined_call_operand.vmem [shape: bf16[16,128], index: 1, kind: input, shape index: {}]
  %s2 = inlined_call_operand.vmem [shape: f32[1,128], index: 2, kind: input, shape index: {}]
  %s3 = inlined_call_operand.vmem [shape: f32[1,128], index: 3, kind: input, shape index: {}]
  %s4 = inlined_call_operand.vmem [shape: bf16[128,128], index: 4, kind: output, shape index: {}]
  %s5 = sld [smem:[#allocation0]]
  $region26: #{discriminator_forward.3} parent=0
    _
  %s7 = ssub.s32 1, %s5
  %s8 = scalar_select 0, %s7, %s5
  // Predicated region
  $region2: #{discriminator_forward.3} parent=0 // pred_check
    _
  $region3: #{discriminator_forward.3} parent=0 // pred_check_branch
    %10 = sbr.rel (0) target = $region5
  $region4: #{discriminator_forward.3} parent=0 // pred_region
    _
  $region5: #{discriminator_forward.3} parent=0 // pred_fallthru
    _
  // Predicated region
  $region6: #{discriminator_forward.3} parent=0 // pred_check
    _
  $region7: #{discriminator_forward.3} parent=0 // pred_check_branch
    %12 = sbr.rel (0) target = $region9
  $region8: #{discriminator_forward.3} parent=0 // pred_region
    _
  $region9: #{discriminator_forward.3} parent=0 // pred_fallthru
    _
  // Predicated region
  $region10: #{discriminator_forward.3} parent=0 // pred_check
    _
  $region11: #{discriminator_forward.3} parent=0 // pred_check_branch
    %14 = sbr.rel (0) target = $region13
  $region12: #{discriminator_forward.3} parent=0 // pred_region
    _
  $region13: #{discriminator_forward.3} parent=0 // pred_fallthru
    _
  // Predicated region
  $region14: #{discriminator_forward.3} parent=0 // pred_check
    _
  $region15: #{discriminator_forward.3} parent=0 // pred_check_branch
    %16 = sbr.rel (0) target = $region17
  $region16: #{discriminator_forward.3} parent=0 // pred_region
    _
  $region17: #{discriminator_forward.3} parent=0 // pred_fallthru
    _
  %v18 = vld [vmem:[%s0] sm:$0xf]
  %v19 = vld [vmem:[%s0 + $0x4] sm:$0xf]
  %v20 = vld [vmem:[%s0 + $0x8] sm:$0xf]
  %v21 = vld [vmem:[%s0 + $0xc] sm:$0xf]
  %v22 = vld [vmem:[%s0 + $0x10] sm:$0xf]
  %v23 = vld [vmem:[%s0 + $0x14] sm:$0xf]
  %v24 = vld [vmem:[%s0 + $0x18] sm:$0xf]
  %v25 = vld [vmem:[%s0 + $0x1c] sm:$0xf]
  %v26 = vld [vmem:[%s0 + $0x20] sm:$0xf]
  %v27 = vld [vmem:[%s0 + $0x24] sm:$0xf]
  %v28 = vld [vmem:[%s0 + $0x28] sm:$0xf]
  %v29 = vld [vmem:[%s0 + $0x2c] sm:$0xf]
  %v30 = vld [vmem:[%s0 + $0x30] sm:$0xf]
  %v31 = vld [vmem:[%s0 + $0x34] sm:$0xf]
  %v32 = vld [vmem:[%s0 + $0x38] sm:$0xf]
  %v33 = vld [vmem:[%s0 + $0x3c] sm:$0xf]
  %v34 = vld [vmem:[%s1] sm:$0xf]
  %v35 = vld [vmem:[%s1 + $0x4] sm:$0xf]
  %v52 = vunpack.c.l.b16 %v18
  %v53 = vunpack.c.l.b16 %v19
  %v54 = vunpack.c.l.b16 %v20
  %v55 = vunpack.c.l.b16 %v21
  %v56 = vunpack.c.l.b16 %v22
  %v57 = vunpack.c.l.b16 %v23
  %v58 = vunpack.c.l.b16 %v24
  %v59 = vunpack.c.l.b16 %v25
  %v60 = vunpack.c.l.b16 %v26
  %v61 = vunpack.c.l.b16 %v27
  %v62 = vunpack.c.l.b16 %v28
  %v63 = vunpack.c.l.b16 %v29
  %v64 = vunpack.c.l.b16 %v30
  %v65 = vunpack.c.l.b16 %v31
  %v66 = vunpack.c.l.b16 %v32
  %v67 = vunpack.c.l.b16 %v33
  %v68 = vpack.c.b16 %v53, %v52
  %v69 = vpack.c.b16 %v55, %v54
  %v70 = vpack.c.b16 %v57, %v56
  %v71 = vpack.c.b16 %v59, %v58
  %v72 = vpack.c.b16 %v61, %v60
  %v73 = vpack.c.b16 %v63, %v62
  %v74 = vpack.c.b16 %v65, %v64
  %v75 = vpack.c.b16 %v67, %v66
  %v78 = vunpack.c.l.b16 %v34
  %v79 = vunpack.c.l.b16 %v35
  %v80 = vpack.c.b16 %v79, %v78
  %vm82 = vcmask 130048
  %v84 = vsel %vm82, %v68, 0
  %v87 = vsel %vm82, %v69, 0
  %v90 = vsel %vm82, %v70, 0
  %v93 = vsel %vm82, %v71, 0
  %v96 = vsel %vm82, %v72, 0
  %v99 = vsel %vm82, %v73, 0
  %v102 = vsel %vm82, %v74, 0
  %v105 = vsel %vm82, %v75, 0
  %107 = vmatprep.subr.bf16.mxu0 0
  %108 = vmatpush1.bf16.msra.mxu0 %v80
  %109 = vmatprep.subr.bf16.mxu0 0
  %110 = vmatpush1.bf16.msra.mxu0 0
  %111 = vmatprep.subr.bf16.mxu0 0
  %112 = vmatpush1.bf16.msra.mxu0 0
  %113 = vmatprep.subr.bf16.mxu0 0
  %114 = vmatpush1.bf16.msra.mxu0 0
  %115 = vmatprep.subr.bf16.mxu0 0
  %116 = vmatpush1.bf16.msra.mxu0 0
  %117 = vmatprep.subr.bf16.mxu0 0
  %118 = vmatpush1.bf16.msra.mxu0 0
  %119 = vmatprep.subr.bf16.mxu0 0
  %120 = vmatpush1.bf16.msra.mxu0 0
  %121 = vmatprep.subr.bf16.mxu0 0
  %122 = vmatpush1.bf16.msra.mxu0 0
  %123 = vmatprep.subr.bf16.mxu0 0
  %124 = vmatpush1.bf16.msra.mxu0 0
  %125 = vmatprep.subr.bf16.mxu0 0
  %126 = vmatpush1.bf16.msra.mxu0 0
  %127 = vmatprep.subr.bf16.mxu0 0
  %128 = vmatpush1.bf16.msra.mxu0 0
  %129 = vmatprep.subr.bf16.mxu0 0
  %130 = vmatpush1.bf16.msra.mxu0 0
  %131 = vmatprep.subr.bf16.mxu0 0
  %132 = vmatpush1.bf16.msra.mxu0 0
  %133 = vmatprep.subr.bf16.mxu0 0
  %134 = vmatpush1.bf16.msra.mxu0 0
  %135 = vmatprep.subr.bf16.mxu0 0
  %136 = vmatpush1.bf16.msra.mxu0 0
  %137 = vmatprep.subr.bf16.mxu0 0
  %138 = vmatpush1.bf16.msra.mxu0 0
  %139 = vmatprep.mubr.bf16.mxu0 0
  %140 = vmatmul.mubr.bf16.gmra.mrb[0].mxu0 %v84
  %v141 = vpop.f32.mrb[0].mxu0
  %v142 = vadd.f32 0.0, %v141
  %v143 = vpop.f32.mrb[0].mxu0
  %v144 = vpop.f32.mrb[0].mxu0
  %v145 = vadd.f32 0.0, %v144
  %v146 = vpop.f32.mrb[0].mxu0
  %147 = vmatprep.mubr.bf16.mxu0 0
  %148 = vmatmul.mubr.bf16.gmra.mrb[0].mxu0 %v87
  %v149 = vpop.f32.mrb[0].mxu0
  %v150 = vadd.f32 0.0, %v149
  %v151 = vpop.f32.mrb[0].mxu0
  %v152 = vpop.f32.mrb[0].mxu0
  %v153 = vadd.f32 0.0, %v152
  %v154 = vpop.f32.mrb[0].mxu0
  %155 = vmatprep.mubr.bf16.mxu0 0
  %156 = vmatmul.mubr.bf16.gmra.mrb[0].mxu0 %v90
  %v157 = vpop.f32.mrb[0].mxu0
  %v158 = vadd.f32 0.0, %v157
  %v159 = vpop.f32.mrb[0].mxu0
  %v160 = vpop.f32.mrb[0].mxu0
  %v161 = vadd.f32 0.0, %v160
  %v162 = vpop.f32.mrb[0].mxu0
  %163 = vmatprep.mubr.bf16.mxu0 0
  %164 = vmatmul.mubr.bf16.gmra.mrb[0].mxu0 %v93
  %v165 = vpop.f32.mrb[0].mxu0
  %v166 = vadd.f32 0.0, %v165
  %v167 = vpop.f32.mrb[0].mxu0
  %v168 = vpop.f32.mrb[0].mxu0
  %v169 = vadd.f32 0.0, %v168
  %v170 = vpop.f32.mrb[0].mxu0
  %171 = vmatprep.mubr.bf16.mxu0 0
  %172 = vmatmul.mubr.bf16.gmra.mrb[0].mxu0 %v96
  %v173 = vpop.f32.mrb[0].mxu0
  %v174 = vadd.f32 0.0, %v173
  %v175 = vpop.f32.mrb[0].mxu0
  %v176 = vpop.f32.mrb[0].mxu0
  %v177 = vadd.f32 0.0, %v176
  %v178 = vpop.f32.mrb[0].mxu0
  %179 = vmatprep.mubr.bf16.mxu0 0
  %180 = vmatmul.mubr.bf16.gmra.mrb[0].mxu0 %v99
  %v181 = vpop.f32.mrb[0].mxu0
  %v182 = vadd.f32 0.0, %v181
  %v183 = vpop.f32.mrb[0].mxu0
  %v184 = vpop.f32.mrb[0].mxu0
  %v185 = vadd.f32 0.0, %v184
  %v186 = vpop.f32.mrb[0].mxu0
  %187 = vmatprep.mubr.bf16.mxu0 0
  %188 = vmatmul.mubr.bf16.gmra.mrb[0].mxu0 %v102
  %v189 = vpop.f32.mrb[0].mxu0
  %v190 = vadd.f32 0.0, %v189
  %v191 = vpop.f32.mrb[0].mxu0
  %v192 = vpop.f32.mrb[0].mxu0
  %v193 = vadd.f32 0.0, %v192
  %v194 = vpop.f32.mrb[0].mxu0
  %195 = vmatprep.mubr.bf16.mxu0 0
  %196 = vmatmul.mubr.bf16.gmra.mrb[0].mxu0 %v105
  %v197 = vpop.f32.mrb[0].mxu0
  %v198 = vadd.f32 0.0, %v197
  %v199 = vpop.f32.mrb[0].mxu0
  %v200 = vpop.f32.mrb[0].mxu0
  %v201 = vadd.f32 0.0, %v200
  %v202 = vpop.f32.mrb[0].mxu0
  %203 = vdwg.mxu0
  %v204 = vld [vmem:[%s2] sm:$0x1]
  %v205 = vld [vmem:[%s3] sm:$0x1]
  %v206 = vadd.f32 %v142, %v145
  %v207 = vadd.f32 %v206, %v150
  %v208 = vadd.f32 %v207, %v153
  %v209 = vadd.f32 %v208, %v158
  %v210 = vadd.f32 %v209, %v161
  %v211 = vadd.f32 %v210, %v166
  %v212 = vadd.f32 %v211, %v169
  %v213 = vadd.f32 %v212, %v174
  %v214 = vadd.f32 %v213, %v177
  %v215 = vadd.f32 %v214, %v182
  %v216 = vadd.f32 %v215, %v185
  %v217 = vadd.f32 %v216, %v190
  %v218 = vadd.f32 %v217, %v193
  %v219 = vadd.f32 %v218, %v198
  %v220 = vadd.f32 %v219, %v201
  %v221 = vrot.slane %v220, 4
  %v222 = vadd.f32 %v220, %v221
  %v223 = vrot.slane %v222, 2
  %v224 = vadd.f32 %v222, %v223
  %v225 = vrot.slane %v224, 1
  %v226 = vadd.f32 %v224, %v225
  %v227 = vrcp.pop 128.0
  %v228 = vmul.f32 %v226, %v227
  %v229 = vsub.f32 %v142, %v228
  %v230 = vsub.f32 %v145, %v228
  %v231 = vsub.f32 %v150, %v228
  %v232 = vsub.f32 %v153, %v228
  %v233 = vsub.f32 %v158, %v228
  %v234 = vsub.f32 %v161, %v228
  %v235 = vsub.f32 %v166, %v228
  %v236 = vsub.f32 %v169, %v228
  %v237 = vsub.f32 %v174, %v228
  %v238 = vsub.f32 %v177, %v228
  %v239 = vsub.f32 %v182, %v228
  %v240 = vsub.f32 %v185, %v228
  %v241 = vsub.f32 %v190, %v228
  %v242 = vsub.f32 %v193, %v228
  %v243 = vsub.f32 %v198, %v228
  %v244 = vsub.f32 %v201, %v228
  %v245 = vmul.f32 %v229, %v229
  %v246 = vmul.f32 %v230, %v230
  %v247 = vmul.f32 %v231, %v231
  %v248 = vmul.f32 %v232, %v232
  %v249 = vmul.f32 %v233, %v233
  %v250 = vmul.f32 %v234, %v234
  %v251 = vmul.f32 %v235, %v235
  %v252 = vmul.f32 %v236, %v236
  %v253 = vmul.f32 %v237, %v237
  %v254 = vmul.f32 %v238, %v238
  %v255 = vmul.f32 %v239, %v239
  %v256 = vmul.f32 %v240, %v240
  %v257 = vmul.f32 %v241, %v241
  %v258 = vmul.f32 %v242, %v242
  %v259 = vmul.f32 %v243, %v243
  %v260 = vmul.f32 %v244, %v244
  %v261 = vadd.f32 %v245, %v246
  %v262 = vadd.f32 %v261, %v247
  %v263 = vadd.f32 %v262, %v248
  %v264 = vadd.f32 %v263, %v249
  %v265 = vadd.f32 %v264, %v250
  %v266 = vadd.f32 %v265, %v251
  %v267 = vadd.f32 %v266, %v252
  %v268 = vadd.f32 %v267, %v253
  %v269 = vadd.f32 %v268, %v254
  %v270 = vadd.f32 %v269, %v255
  %v271 = vadd.f32 %v270, %v256
  %v272 = vadd.f32 %v271, %v257
  %v273 = vadd.f32 %v272, %v258
  %v274 = vadd.f32 %v273, %v259
  %v275 = vadd.f32 %v274, %v260
  %v276 = vrot.slane %v275, 4
  %v277 = vadd.f32 %v275, %v276
  %v278 = vrot.slane %v277, 2
  %v279 = vadd.f32 %v277, %v278
  %v280 = vrot.slane %v279, 1
  %v281 = vadd.f32 %v279, %v280
  %v282 = vmul.f32 %v281, %v227
  %v283 = vadd.f32 %v282, 1e-05
  %v284 = vrsqrt.pop %v283
  %v285 = vmul.f32 %v229, %v284
  %v286 = vmul.f32 %v230, %v284
  %v287 = vmul.f32 %v231, %v284
  %v288 = vmul.f32 %v232, %v284
  %v289 = vmul.f32 %v233, %v284
  %v290 = vmul.f32 %v234, %v284
  %v291 = vmul.f32 %v235, %v284
  %v292 = vmul.f32 %v236, %v284
  %v293 = vmul.f32 %v237, %v284
  %v294 = vmul.f32 %v238, %v284
  %v295 = vmul.f32 %v239, %v284
  %v296 = vmul.f32 %v240, %v284
  %v297 = vmul.f32 %v241, %v284
  %v298 = vmul.f32 %v242, %v284
  %v299 = vmul.f32 %v243, %v284
  %v300 = vmul.f32 %v244, %v284
  %v302 = vlaneseq
  %v303 = vshrl.u32 %v302, 7
  %v304 = vsub.s32 0, %v303
  %v305 = vrot.slane %v204, %v304
  %v307 = vmul.f32 %v285, %v305
  %v308 = vmul.f32 %v286, %v305
  %v309 = vmul.f32 %v287, %v305
  %v310 = vmul.f32 %v288, %v305
  %v311 = vmul.f32 %v289, %v305
  %v312 = vmul.f32 %v290, %v305
  %v313 = vmul.f32 %v291, %v305
  %v314 = vmul.f32 %v292, %v305
  %v315 = vmul.f32 %v293, %v305
  %v316 = vmul.f32 %v294, %v305
  %v317 = vmul.f32 %v295, %v305
  %v318 = vmul.f32 %v296, %v305
  %v319 = vmul.f32 %v297, %v305
  %v320 = vmul.f32 %v298, %v305
  %v321 = vmul.f32 %v299, %v305
  %v322 = vmul.f32 %v300, %v305
  %v324 = vlaneseq
  %v325 = vshrl.u32 %v324, 7
  %v326 = vsub.s32 0, %v325
  %v327 = vrot.slane %v205, %v326
  %v329 = vadd.f32 %v307, %v327
  %v330 = vadd.f32 %v308, %v327
  %v331 = vadd.f32 %v309, %v327
  %v332 = vadd.f32 %v310, %v327
  %v333 = vadd.f32 %v311, %v327
  %v334 = vadd.f32 %v312, %v327
  %v335 = vadd.f32 %v313, %v327
  %v336 = vadd.f32 %v314, %v327
  %v337 = vadd.f32 %v315, %v327
  %v338 = vadd.f32 %v316, %v327
  %v339 = vadd.f32 %v317, %v327
  %v340 = vadd.f32 %v318, %v327
  %v341 = vadd.f32 %v319, %v327
  %v342 = vadd.f32 %v320, %v327
  %v343 = vadd.f32 %v321, %v327
  %v344 = vadd.f32 %v322, %v327
  %vm345 = vcmp.ge.f32.partialorder %v329, 0.0
  %vm346 = vcmp.ge.f32.partialorder %v330, 0.0
  %vm347 = vcmp.ge.f32.partialorder %v331, 0.0
  %vm348 = vcmp.ge.f32.partialorder %v332, 0.0
  %vm349 = vcmp.ge.f32.partialorder %v333, 0.0
  %vm350 = vcmp.ge.f32.partialorder %v334, 0.0
  %vm351 = vcmp.ge.f32.partialorder %v335, 0.0
  %vm352 = vcmp.ge.f32.partialorder %v336, 0.0
  %vm353 = vcmp.ge.f32.partialorder %v337, 0.0
  %vm354 = vcmp.ge.f32.partialorder %v338, 0.0
  %vm355 = vcmp.ge.f32.partialorder %v339, 0.0
  %vm356 = vcmp.ge.f32.partialorder %v340, 0.0
  %vm357 = vcmp.ge.f32.partialorder %v341, 0.0
  %vm358 = vcmp.ge.f32.partialorder %v342, 0.0
  %vm359 = vcmp.ge.f32.partialorder %v343, 0.0
  %vm360 = vcmp.ge.f32.partialorder %v344, 0.0
  %v361 = vmul.f32 %v329, 0.2
  %v362 = vmul.f32 %v330, 0.2
  %v363 = vmul.f32 %v331, 0.2
  %v364 = vmul.f32 %v332, 0.2
  %v365 = vmul.f32 %v333, 0.2
  %v366 = vmul.f32 %v334, 0.2
  %v367 = vmul.f32 %v335, 0.2
  %v368 = vmul.f32 %v336, 0.2
  %v369 = vmul.f32 %v337, 0.2
  %v370 = vmul.f32 %v338, 0.2
  %v371 = vmul.f32 %v339, 0.2
  %v372 = vmul.f32 %v340, 0.2
  %v373 = vmul.f32 %v341, 0.2
  %v374 = vmul.f32 %v342, 0.2
  %v375 = vmul.f32 %v343, 0.2
  %v376 = vmul.f32 %v344, 0.2
  %v377 = vsel %vm345, %v329, %v361
  %v378 = vsel %vm346, %v330, %v362
  %v379 = vsel %vm347, %v331, %v363
  %v380 = vsel %vm348, %v332, %v364
  %v381 = vsel %vm349, %v333, %v365
  %v382 = vsel %vm350, %v334, %v366
  %v383 = vsel %vm351, %v335, %v367
  %v384 = vsel %vm352, %v336, %v368
  %v385 = vsel %vm353, %v337, %v369
  %v386 = vsel %vm354, %v338, %v370
  %v387 = vsel %vm355, %v339, %v371
  %v388 = vsel %vm356, %v340, %v372
  %v389 = vsel %vm357, %v341, %v373
  %v390 = vsel %vm358, %v342, %v374
  %v391 = vsel %vm359, %v343, %v375
  %v392 = vsel %vm360, %v344, %v376
  %v393 = vpack.c.bf16 %v378, %v377
  %v394 = vpack.c.bf16 %v380, %v379
  %v395 = vpack.c.bf16 %v382, %v381
  %v396 = vpack.c.bf16 %v384, %v383
  %v397 = vpack.c.bf16 %v386, %v385
  %v398 = vpack.c.bf16 %v388, %v387
  %v399 = vpack.c.bf16 %v390, %v389
  %v400 = vpack.c.bf16 %v392, %v391
  %v409 = vunpack.c.l.b16 %v393
  %v410 = vunpack.c.h.b16 %v393
  %v411 = vunpack.c.l.b16 %v394
  %v412 = vunpack.c.h.b16 %v394
  %v413 = vunpack.c.l.b16 %v395
  %v414 = vunpack.c.h.b16 %v395
  %v415 = vunpack.c.l.b16 %v396
  %v416 = vunpack.c.h.b16 %v396
  %v417 = vunpack.c.l.b16 %v397
  %v418 = vunpack.c.h.b16 %v397
  %v419 = vunpack.c.l.b16 %v398
  %v420 = vunpack.c.h.b16 %v398
  %v421 = vunpack.c.l.b16 %v399
  %v422 = vunpack.c.h.b16 %v399
  %v423 = vunpack.c.l.b16 %v400
  %v424 = vunpack.c.h.b16 %v400
  %v425 = vpack.c.b16 %v409, %v409
  %v426 = vpack.c.b16 %v410, %v410
  %v427 = vpack.c.b16 %v411, %v411
  %v428 = vpack.c.b16 %v412, %v412
  %v429 = vpack.c.b16 %v413, %v413
  %v430 = vpack.c.b16 %v414, %v414
  %v431 = vpack.c.b16 %v415, %v415
  %v432 = vpack.c.b16 %v416, %v416
  %v433 = vpack.c.b16 %v417, %v417
  %v434 = vpack.c.b16 %v418, %v418
  %v435 = vpack.c.b16 %v419, %v419
  %v436 = vpack.c.b16 %v420, %v420
  %v437 = vpack.c.b16 %v421, %v421
  %v438 = vpack.c.b16 %v422, %v422
  %v439 = vpack.c.b16 %v423, %v423
  %v440 = vpack.c.b16 %v424, %v424
  %457 = vst [vmem:[%s4] sm:$0xf] %v425
  %458 = vst [vmem:[%s4 + $0x4] sm:$0xf] %v426
  %459 = vst [vmem:[%s4 + $0x8] sm:$0xf] %v427
  %460 = vst [vmem:[%s4 + $0xc] sm:$0xf] %v428
  %461 = vst [vmem:[%s4 + $0x10] sm:$0xf] %v429
  %462 = vst [vmem:[%s4 + $0x14] sm:$0xf] %v430
  %463 = vst [vmem:[%s4 + $0x18] sm:$0xf] %v431
  %464 = vst [vmem:[%s4 + $0x1c] sm:$0xf] %v432
  %465 = vst [vmem:[%s4 + $0x20] sm:$0xf] %v433
  %466 = vst [vmem:[%s4 + $0x24] sm:$0xf] %v434
  %467 = vst [vmem:[%s4 + $0x28] sm:$0xf] %v435
  %468 = vst [vmem:[%s4 + $0x2c] sm:$0xf] %v436
  %469 = vst [vmem:[%s4 + $0x30] sm:$0xf] %v437
  %470 = vst [vmem:[%s4 + $0x34] sm:$0xf] %v438
  %471 = vst [vmem:[%s4 + $0x38] sm:$0xf] %v439
  %472 = vst [vmem:[%s4 + $0x3c] sm:$0xf] %v440
  // Predicated region
  $region18: #{discriminator_forward.3} parent=0 // pred_check
    _
  $region19: #{discriminator_forward.3} parent=0 // pred_check_branch
    %474 = sbr.rel (0) target = $region21
  $region20: #{discriminator_forward.3} parent=0 // pred_region
    _
  $region21: #{discriminator_forward.3} parent=0 // pred_fallthru
    _
  // Predicated region
  $region22: #{discriminator_forward.3} parent=0 // pred_check
    _
  $region23: #{discriminator_forward.3} parent=0 // pred_check_branch
    %476 = sbr.rel (0) target = $region25
  $region24: #{discriminator_forward.3} parent=0 // pred_region
    _
  $region25: #{discriminator_forward.3} parent=0 // pred_fallthru
    _

// kernel: discriminator_forward.4
$region0: #{discriminator_forward.4}
  #allocation0 [shape = 'u32[]', space=smem, size = 0x4, offset = 0x4, fixed_abs, tag = 'smem constant byte address 0x4 - core index']
  #allocation1 [shape = 'u32[144,128]{1,0:T(1,128)}', space=vmem, size = 0x12000, scoped, tag = 'internal scratch']
  %s0 = inlined_call_operand.vmem [shape: bf16[32,1024], index: 0, kind: input, shape index: {}]
  %s1 = inlined_call_operand.vmem [shape: bf16[1024,128], index: 1, kind: input, shape index: {}]
  %s2 = inlined_call_operand.vmem [shape: f32[1,128], index: 2, kind: input, shape index: {}]
  %s3 = inlined_call_operand.vmem [shape: f32[1,128], index: 3, kind: input, shape index: {}]
  %s4 = inlined_call_operand.vmem [shape: bf16[32,128], index: 4, kind: output, shape index: {}]
  %s5 = sld [smem:[#allocation0]]
  $region26: #{discriminator_forward.4} parent=0
    _
  %s7 = ssub.s32 1, %s5
  %s8 = scalar_select 0, %s7, %s5
  // Predicated region
  $region2: #{discriminator_forward.4} parent=0 // pred_check
    _
  $region3: #{discriminator_forward.4} parent=0 // pred_check_branch
    %10 = sbr.rel (0) target = $region5
  $region4: #{discriminator_forward.4} parent=0 // pred_region
    _
  $region5: #{discriminator_forward.4} parent=0 // pred_fallthru
    _
  // Predicated region
  $region6: #{discriminator_forward.4} parent=0 // pred_check
    _
  $region7: #{discriminator_forward.4} parent=0 // pred_check_branch
    %12 = sbr.rel (0) target = $region9
  $region8: #{discriminator_forward.4} parent=0 // pred_region
    _
  $region9: #{discriminator_forward.4} parent=0 // pred_fallthru
    _
  // Predicated region
  $region10: #{discriminator_forward.4} parent=0 // pred_check
    _
  $region11: #{discriminator_forward.4} parent=0 // pred_check_branch
    %14 = sbr.rel (0) target = $region13
  $region12: #{discriminator_forward.4} parent=0 // pred_region
    _
  $region13: #{discriminator_forward.4} parent=0 // pred_fallthru
    _
  // Predicated region
  $region14: #{discriminator_forward.4} parent=0 // pred_check
    _
  $region15: #{discriminator_forward.4} parent=0 // pred_check_branch
    %16 = sbr.rel (0) target = $region17
  $region16: #{discriminator_forward.4} parent=0 // pred_region
    _
  $region17: #{discriminator_forward.4} parent=0 // pred_fallthru
    _
  %v18 = vld [vmem:[%s0] sm:$0xff]
  %v19 = vld [vmem:[%s0 + $0x8] sm:$0xff]
  %v20 = vld [vmem:[%s0 + $0x10] sm:$0xff]
  %v21 = vld [vmem:[%s0 + $0x18] sm:$0xff]
  %v22 = vld [vmem:[%s0 + $0x20] sm:$0xff]
  %v23 = vld [vmem:[%s0 + $0x28] sm:$0xff]
  %v24 = vld [vmem:[%s0 + $0x30] sm:$0xff]
  %v25 = vld [vmem:[%s0 + $0x38] sm:$0xff]
  %v26 = vld [vmem:[%s0 + $0x40] sm:$0xff]
  %v27 = vld [vmem:[%s0 + $0x48] sm:$0xff]
  %v28 = vld [vmem:[%s0 + $0x50] sm:$0xff]
  %v29 = vld [vmem:[%s0 + $0x58] sm:$0xff]
  %v30 = vld [vmem:[%s0 + $0x60] sm:$0xff]
  %v31 = vld [vmem:[%s0 + $0x68] sm:$0xff]
  %v32 = vld [vmem:[%s0 + $0x70] sm:$0xff]
  %v33 = vld [vmem:[%s0 + $0x78] sm:$0xff]
  %v34 = vld [vmem:[%s1] sm:$0xf]
  %v35 = vld [vmem:[%s1 + $0x4] sm:$0xf]
  %v36 = vld [vmem:[%s1 + $0x8] sm:$0xf]
  %v37 = vld [vmem:[%s1 + $0xc] sm:$0xf]
  %v38 = vld [vmem:[%s1 + $0x10] sm:$0xf]
  %v39 = vld [vmem:[%s1 + $0x14] sm:$0xf]
  %v40 = vld [vmem:[%s1 + $0x18] sm:$0xf]
  %v41 = vld [vmem:[%s1 + $0x1c] sm:$0xf]
  %v42 = vld [vmem:[%s1 + $0x20] sm:$0xf]
  %v43 = vld [vmem:[%s1 + $0x24] sm:$0xf]
  %v44 = vld [vmem:[%s1 + $0x28] sm:$0xf]
  %v45 = vld [vmem:[%s1 + $0x2c] sm:$0xf]
  %v46 = vld [vmem:[%s1 + $0x30] sm:$0xf]
  %v47 = vld [vmem:[%s1 + $0x34] sm:$0xf]
  %v48 = vld [vmem:[%s1 + $0x38] sm:$0xf]
  %v49 = vld [vmem:[%s1 + $0x3c] sm:$0xf]
  %v50 = vld [vmem:[%s1 + $0x40] sm:$0xf]
  %v51 = vld [vmem:[%s1 + $0x44] sm:$0xf]
  %v52 = vld [vmem:[%s1 + $0x48] sm:$0xf]
  %v53 = vld [vmem:[%s1 + $0x4c] sm:$0xf]
  %v54 = vld [vmem:[%s1 + $0x50] sm:$0xf]
  %v55 = vld [vmem:[%s1 + $0x54] sm:$0xf]
  %v56 = vld [vmem:[%s1 + $0x58] sm:$0xf]
  %v57 = vld [vmem:[%s1 + $0x5c] sm:$0xf]
  %v58 = vld [vmem:[%s1 + $0x60] sm:$0xf]
  %v59 = vld [vmem:[%s1 + $0x64] sm:$0xf]
  %v60 = vld [vmem:[%s1 + $0x68] sm:$0xf]
  %v61 = vld [vmem:[%s1 + $0x6c] sm:$0xf]
  %v62 = vld [vmem:[%s1 + $0x70] sm:$0xf]
  %v63 = vld [vmem:[%s1 + $0x74] sm:$0xf]
  %v64 = vld [vmem:[%s1 + $0x78] sm:$0xf]
  %v65 = vld [vmem:[%s1 + $0x7c] sm:$0xf]
  %v66 = vld [vmem:[%s1 + $0x80] sm:$0xf]
  %v67 = vld [vmem:[%s1 + $0x84] sm:$0xf]
  %v68 = vld [vmem:[%s1 + $0x88] sm:$0xf]
  %v69 = vld [vmem:[%s1 + $0x8c] sm:$0xf]
  %v70 = vld [vmem:[%s1 + $0x90] sm:$0xf]
  %v71 = vld [vmem:[%s1 + $0x94] sm:$0xf]
  %v72 = vld [vmem:[%s1 + $0x98] sm:$0xf]
  %v73 = vld [vmem:[%s1 + $0x9c] sm:$0xf]
  %v74 = vld [vmem:[%s1 + $0xa0] sm:$0xf]
  %v75 = vld [vmem:[%s1 + $0xa4] sm:$0xf]
  %v76 = vld [vmem:[%s1 + $0xa8] sm:$0xf]
  %v77 = vld [vmem:[%s1 + $0xac] sm:$0xf]
  %v78 = vld [vmem:[%s1 + $0xb0] sm:$0xf]
  %v79 = vld [vmem:[%s1 + $0xb4] sm:$0xf]
  %v80 = vld [vmem:[%s1 + $0xb8] sm:$0xf]
  %v81 = vld [vmem:[%s1 + $0xbc] sm:$0xf]
  %v82 = vld [vmem:[%s1 + $0xc0] sm:$0xf]
  %v83 = vld [vmem:[%s1 + $0xc4] sm:$0xf]
  %v84 = vld [vmem:[%s1 + $0xc8] sm:$0xf]
  %v85 = vld [vmem:[%s1 + $0xcc] sm:$0xf]
  %v86 = vld [vmem:[%s1 + $0xd0] sm:$0xf]
  %v87 = vld [vmem:[%s1 + $0xd4] sm:$0xf]
  %v88 = vld [vmem:[%s1 + $0xd8] sm:$0xf]
  %v89 = vld [vmem:[%s1 + $0xdc] sm:$0xf]
  %v90 = vld [vmem:[%s1 + $0xe0] sm:$0xf]
  %v91 = vld [vmem:[%s1 + $0xe4] sm:$0xf]
  %v92 = vld [vmem:[%s1 + $0xe8] sm:$0xf]
  %v93 = vld [vmem:[%s1 + $0xec] sm:$0xf]
  %v94 = vld [vmem:[%s1 + $0xf0] sm:$0xf]
  %v95 = vld [vmem:[%s1 + $0xf4] sm:$0xf]
  %v96 = vld [vmem:[%s1 + $0xf8] sm:$0xf]
  %v97 = vld [vmem:[%s1 + $0xfc] sm:$0xf]
  %v98 = vld [vmem:[%s1 + $0x100] sm:$0xf]
  %v99 = vld [vmem:[%s1 + $0x104] sm:$0xf]
  %v100 = vld [vmem:[%s1 + $0x108] sm:$0xf]
  %v101 = vld [vmem:[%s1 + $0x10c] sm:$0xf]
  %v102 = vld [vmem:[%s1 + $0x110] sm:$0xf]
  %v103 = vld [vmem:[%s1 + $0x114] sm:$0xf]
  %v104 = vld [vmem:[%s1 + $0x118] sm:$0xf]
  %v105 = vld [vmem:[%s1 + $0x11c] sm:$0xf]
  %v106 = vld [vmem:[%s1 + $0x120] sm:$0xf]
  %v107 = vld [vmem:[%s1 + $0x124] sm:$0xf]
  %v108 = vld [vmem:[%s1 + $0x128] sm:$0xf]
  %v109 = vld [vmem:[%s1 + $0x12c] sm:$0xf]
  %v110 = vld [vmem:[%s1 + $0x130] sm:$0xf]
  %v111 = vld [vmem:[%s1 + $0x134] sm:$0xf]
  %v112 = vld [vmem:[%s1 + $0x138] sm:$0xf]
  %v113 = vld [vmem:[%s1 + $0x13c] sm:$0xf]
  %v114 = vld [vmem:[%s1 + $0x140] sm:$0xf]
  %v115 = vld [vmem:[%s1 + $0x144] sm:$0xf]
  %v116 = vld [vmem:[%s1 + $0x148] sm:$0xf]
  %v117 = vld [vmem:[%s1 + $0x14c] sm:$0xf]
  %v118 = vld [vmem:[%s1 + $0x150] sm:$0xf]
  %v119 = vld [vmem:[%s1 + $0x154] sm:$0xf]
  %v120 = vld [vmem:[%s1 + $0x158] sm:$0xf]
  %v121 = vld [vmem:[%s1 + $0x15c] sm:$0xf]
  %v122 = vld [vmem:[%s1 + $0x160] sm:$0xf]
  %v123 = vld [vmem:[%s1 + $0x164] sm:$0xf]
  %v124 = vld [vmem:[%s1 + $0x168] sm:$0xf]
  %v125 = vld [vmem:[%s1 + $0x16c] sm:$0xf]
  %v126 = vld [vmem:[%s1 + $0x170] sm:$0xf]
  %v127 = vld [vmem:[%s1 + $0x174] sm:$0xf]
  %v128 = vld [vmem:[%s1 + $0x178] sm:$0xf]
  %v129 = vld [vmem:[%s1 + $0x17c] sm:$0xf]
  %v130 = vld [vmem:[%s1 + $0x180] sm:$0xf]
  %v131 = vld [vmem:[%s1 + $0x184] sm:$0xf]
  %v132 = vld [vmem:[%s1 + $0x188] sm:$0xf]
  %v133 = vld [vmem:[%s1 + $0x18c] sm:$0xf]
  %v134 = vld [vmem:[%s1 + $0x190] sm:$0xf]
  %v135 = vld [vmem:[%s1 + $0x194] sm:$0xf]
  %v136 = vld [vmem:[%s1 + $0x198] sm:$0xf]
  %v137 = vld [vmem:[%s1 + $0x19c] sm:$0xf]
  %v138 = vld [vmem:[%s1 + $0x1a0] sm:$0xf]
  %v139 = vld [vmem:[%s1 + $0x1a4] sm:$0xf]
  %v140 = vld [vmem:[%s1 + $0x1a8] sm:$0xf]
  %v141 = vld [vmem:[%s1 + $0x1ac] sm:$0xf]
  %v142 = vld [vmem:[%s1 + $0x1b0] sm:$0xf]
  %v143 = vld [vmem:[%s1 + $0x1b4] sm:$0xf]
  %v144 = vld [vmem:[%s1 + $0x1b8] sm:$0xf]
  %v145 = vld [vmem:[%s1 + $0x1bc] sm:$0xf]
  %v146 = vld [vmem:[%s1 + $0x1c0] sm:$0xf]
  %v147 = vld [vmem:[%s1 + $0x1c4] sm:$0xf]
  %v148 = vld [vmem:[%s1 + $0x1c8] sm:$0xf]
  %v149 = vld [vmem:[%s1 + $0x1cc] sm:$0xf]
  %v150 = vld [vmem:[%s1 + $0x1d0] sm:$0xf]
  %v151 = vld [vmem:[%s1 + $0x1d4] sm:$0xf]
  %v152 = vld [vmem:[%s1 + $0x1d8] sm:$0xf]
  %v153 = vld [vmem:[%s1 + $0x1dc] sm:$0xf]
  %v154 = vld [vmem:[%s1 + $0x1e0] sm:$0xf]
  %v155 = vld [vmem:[%s1 + $0x1e4] sm:$0xf]
  %v156 = vld [vmem:[%s1 + $0x1e8] sm:$0xf]
  %v157 = vld [vmem:[%s1 + $0x1ec] sm:$0xf]
  %v158 = vld [vmem:[%s1 + $0x1f0] sm:$0xf]
  %v159 = vld [vmem:[%s1 + $0x1f4] sm:$0xf]
  %v160 = vld [vmem:[%s1 + $0x1f8] sm:$0xf]
  %v161 = vld [vmem:[%s1 + $0x1fc] sm:$0xf]
  %v178 = vunpack.c.l.b16 %v18
  %v179 = vunpack.c.h.b16 %v18
  %v180 = vunpack.c.l.b16 %v19
  %v181 = vunpack.c.h.b16 %v19
  %v182 = vunpack.c.l.b16 %v20
  %v183 = vunpack.c.h.b16 %v20
  %v184 = vunpack.c.l.b16 %v21
  %v185 = vunpack.c.h.b16 %v21
  %v186 = vunpack.c.l.b16 %v22
  %v187 = vunpack.c.h.b16 %v22
  %v188 = vunpack.c.l.b16 %v23
  %v189 = vunpack.c.h.b16 %v23
  %v190 = vunpack.c.l.b16 %v24
  %v191 = vunpack.c.h.b16 %v24
  %v192 = vunpack.c.l.b16 %v25
  %v193 = vunpack.c.h.b16 %v25
  %v194 = vunpack.c.l.b16 %v26
  %v195 = vunpack.c.h.b16 %v26
  %v196 = vunpack.c.l.b16 %v27
  %v197 = vunpack.c.h.b16 %v27
  %v198 = vunpack.c.l.b16 %v28
  %v199 = vunpack.c.h.b16 %v28
  %v200 = vunpack.c.l.b16 %v29
  %v201 = vunpack.c.h.b16 %v29
  %v202 = vunpack.c.l.b16 %v30
  %v203 = vunpack.c.h.b16 %v30
  %v204 = vunpack.c.l.b16 %v31
  %v205 = vunpack.c.h.b16 %v31
  %v206 = vunpack.c.l.b16 %v32
  %v207 = vunpack.c.h.b16 %v32
  %v208 = vunpack.c.l.b16 %v33
  %v209 = vunpack.c.h.b16 %v33
  %v210 = vpack.c.b16 %v186, %v178
  %v211 = vpack.c.b16 %v187, %v179
  %v212 = vpack.c.b16 %v188, %v180
  %v213 = vpack.c.b16 %v189, %v181
  %v214 = vpack.c.b16 %v190, %v182
  %v215 = vpack.c.b16 %v191, %v183
  %v216 = vpack.c.b16 %v192, %v184
  %v217 = vpack.c.b16 %v193, %v185
  %v218 = vpack.c.b16 %v202, %v194
  %v219 = vpack.c.b16 %v203, %v195
  %v220 = vpack.c.b16 %v204, %v196
  %v221 = vpack.c.b16 %v205, %v197
  %v222 = vpack.c.b16 %v206, %v198
  %v223 = vpack.c.b16 %v207, %v199
  %v224 = vpack.c.b16 %v208, %v200
  %v225 = vpack.c.b16 %v209, %v201
  %v370 = vunpack.c.l.b16 %v34
  %v371 = vunpack.c.l.b16 %v35
  %v372 = vunpack.c.l.b16 %v36
  %v373 = vunpack.c.l.b16 %v37
  %v374 = vunpack.c.l.b16 %v38
  %v375 = vunpack.c.l.b16 %v39
  %v376 = vunpack.c.l.b16 %v40
  %v377 = vunpack.c.l.b16 %v41
  %v378 = vunpack.c.l.b16 %v42
  %v379 = vunpack.c.l.b16 %v43
  %v380 = vunpack.c.l.b16 %v44
  %v381 = vunpack.c.l.b16 %v45
  %v382 = vunpack.c.l.b16 %v46
  %v383 = vunpack.c.l.b16 %v47
  %v384 = vunpack.c.l.b16 %v48
  %v385 = vunpack.c.l.b16 %v49
  %v386 = vunpack.c.l.b16 %v50
  %v387 = vunpack.c.l.b16 %v51
  %v388 = vunpack.c.l.b16 %v52
  %v389 = vunpack.c.l.b16 %v53
  %v390 = vunpack.c.l.b16 %v54
  %v391 = vunpack.c.l.b16 %v55
  %v392 = vunpack.c.l.b16 %v56
  %v393 = vunpack.c.l.b16 %v57
  %v394 = vunpack.c.l.b16 %v58
  %v395 = vunpack.c.l.b16 %v59
  %v396 = vunpack.c.l.b16 %v60
  %v397 = vunpack.c.l.b16 %v61
  %v398 = vunpack.c.l.b16 %v62
  %v399 = vunpack.c.l.b16 %v63
  %v400 = vunpack.c.l.b16 %v64
  %v401 = vunpack.c.l.b16 %v65
  %v402 = vunpack.c.l.b16 %v66
  %v403 = vunpack.c.l.b16 %v67
  %v404 = vunpack.c.l.b16 %v68
  %v405 = vunpack.c.l.b16 %v69
  %v406 = vunpack.c.l.b16 %v70
  %v407 = vunpack.c.l.b16 %v71
  %v408 = vunpack.c.l.b16 %v72
  %v409 = vunpack.c.l.b16 %v73
  %v410 = vunpack.c.l.b16 %v74
  %v411 = vunpack.c.l.b16 %v75
  %v412 = vunpack.c.l.b16 %v76
  %v413 = vunpack.c.l.b16 %v77
  %v414 = vunpack.c.l.b16 %v78
  %v415 = vunpack.c.l.b16 %v79
  %v416 = vunpack.c.l.b16 %v80
  %v417 = vunpack.c.l.b16 %v81
  %v418 = vunpack.c.l.b16 %v82
  %v419 = vunpack.c.l.b16 %v83
  %v420 = vunpack.c.l.b16 %v84
  %v421 = vunpack.c.l.b16 %v85
  %v422 = vunpack.c.l.b16 %v86
  %v423 = vunpack.c.l.b16 %v87
  %v424 = vunpack.c.l.b16 %v88
  %v425 = vunpack.c.l.b16 %v89
  %v426 = vunpack.c.l.b16 %v90
  %v427 = vunpack.c.l.b16 %v91
  %v428 = vunpack.c.l.b16 %v92
  %v429 = vunpack.c.l.b16 %v93
  %v430 = vunpack.c.l.b16 %v94
  %v431 = vunpack.c.l.b16 %v95
  %v432 = vunpack.c.l.b16 %v96
  %v433 = vunpack.c.l.b16 %v97
  %v434 = vunpack.c.l.b16 %v98
  %v435 = vunpack.c.l.b16 %v99
  %v436 = vunpack.c.l.b16 %v100
  %v437 = vunpack.c.l.b16 %v101
  %v438 = vunpack.c.l.b16 %v102
  %v439 = vunpack.c.l.b16 %v103
  %v440 = vunpack.c.l.b16 %v104
  %v441 = vunpack.c.l.b16 %v105
  %v442 = vunpack.c.l.b16 %v106
  %v443 = vunpack.c.l.b16 %v107
  %v444 = vunpack.c.l.b16 %v108
  %v445 = vunpack.c.l.b16 %v109
  %v446 = vunpack.c.l.b16 %v110
  %v447 = vunpack.c.l.b16 %v111
  %v448 = vunpack.c.l.b16 %v112
  %v449 = vunpack.c.l.b16 %v113
  %v450 = vunpack.c.l.b16 %v114
  %v451 = vunpack.c.l.b16 %v115
  %v452 = vunpack.c.l.b16 %v116
  %v453 = vunpack.c.l.b16 %v117
  %v454 = vunpack.c.l.b16 %v118
  %v455 = vunpack.c.l.b16 %v119
  %v456 = vunpack.c.l.b16 %v120
  %v457 = vunpack.c.l.b16 %v121
  %v458 = vunpack.c.l.b16 %v122
  %v459 = vunpack.c.l.b16 %v123
  %v460 = vunpack.c.l.b16 %v124
  %v461 = vunpack.c.l.b16 %v125
  %v462 = vunpack.c.l.b16 %v126
  %v463 = vunpack.c.l.b16 %v127
  %v464 = vunpack.c.l.b16 %v128
  %v465 = vunpack.c.l.b16 %v129
  %v466 = vunpack.c.l.b16 %v130
  %v467 = vunpack.c.l.b16 %v131
  %v468 = vunpack.c.l.b16 %v132
  %v469 = vunpack.c.l.b16 %v133
  %v470 = vunpack.c.l.b16 %v134
  %v471 = vunpack.c.l.b16 %v135
  %v472 = vunpack.c.l.b16 %v136
  %v473 = vunpack.c.l.b16 %v137
  %v474 = vunpack.c.l.b16 %v138
  %v475 = vunpack.c.l.b16 %v139
  %v476 = vunpack.c.l.b16 %v140
  %v477 = vunpack.c.l.b16 %v141
  %v478 = vunpack.c.l.b16 %v142
  %v479 = vunpack.c.l.b16 %v143
  %v480 = vunpack.c.l.b16 %v144
  %v481 = vunpack.c.l.b16 %v145
  %v482 = vunpack.c.l.b16 %v146
  %v483 = vunpack.c.l.b16 %v147
  %v484 = vunpack.c.l.b16 %v148
  %v485 = vunpack.c.l.b16 %v149
  %v486 = vunpack.c.l.b16 %v150
  %v487 = vunpack.c.l.b16 %v151
  %v488 = vunpack.c.l.b16 %v152
  %v489 = vunpack.c.l.b16 %v153
  %v490 = vunpack.c.l.b16 %v154
  %v491 = vunpack.c.l.b16 %v155
  %v492 = vunpack.c.l.b16 %v156
  %v493 = vunpack.c.l.b16 %v157
  %v494 = vunpack.c.l.b16 %v158
  %v495 = vunpack.c.l.b16 %v159
  %v496 = vunpack.c.l.b16 %v160
  %v497 = vunpack.c.l.b16 %v161
  %v498 = vpack.c.b16 %v371, %v370
  %v499 = vpack.c.b16 %v373, %v372
  %v500 = vpack.c.b16 %v375, %v374
  %v501 = vpack.c.b16 %v377, %v376
  %v502 = vpack.c.b16 %v379, %v378
  %v503 = vpack.c.b16 %v381, %v380
  %v504 = vpack.c.b16 %v383, %v382
  %v505 = vpack.c.b16 %v385, %v384
  %v506 = vpack.c.b16 %v387, %v386
  %v507 = vpack.c.b16 %v389, %v388
  %v508 = vpack.c.b16 %v391, %v390
  %v509 = vpack.c.b16 %v393, %v392
  %v510 = vpack.c.b16 %v395, %v394
  %v511 = vpack.c.b16 %v397, %v396
  %v512 = vpack.c.b16 %v399, %v398
  %v513 = vpack.c.b16 %v401, %v400
  %v514 = vpack.c.b16 %v403, %v402
  %v515 = vpack.c.b16 %v405, %v404
  %v516 = vpack.c.b16 %v407, %v406
  %v517 = vpack.c.b16 %v409, %v408
  %v518 = vpack.c.b16 %v411, %v410
  %v519 = vpack.c.b16 %v413, %v412
  %v520 = vpack.c.b16 %v415, %v414
  %v521 = vpack.c.b16 %v417, %v416
  %v522 = vpack.c.b16 %v419, %v418
  %v523 = vpack.c.b16 %v421, %v420
  %v524 = vpack.c.b16 %v423, %v422
  %v525 = vpack.c.b16 %v425, %v424
  %v526 = vpack.c.b16 %v427, %v426
  %v527 = vpack.c.b16 %v429, %v428
  %v528 = vpack.c.b16 %v431, %v430
  %v529 = vpack.c.b16 %v433, %v432
  %v530 = vpack.c.b16 %v435, %v434
  %v531 = vpack.c.b16 %v437, %v436
  %v532 = vpack.c.b16 %v439, %v438
  %v533 = vpack.c.b16 %v441, %v440
  %v534 = vpack.c.b16 %v443, %v442
  %v535 = vpack.c.b16 %v445, %v444
  %v536 = vpack.c.b16 %v447, %v446
  %v537 = vpack.c.b16 %v449, %v448
  %v538 = vpack.c.b16 %v451, %v450
  %v539 = vpack.c.b16 %v453, %v452
  %v540 = vpack.c.b16 %v455, %v454
  %v541 = vpack.c.b16 %v457, %v456
  %v542 = vpack.c.b16 %v459, %v458
  %v543 = vpack.c.b16 %v461, %v460
  %v544 = vpack.c.b16 %v463, %v462
  %v545 = vpack.c.b16 %v465, %v464
  %v546 = vpack.c.b16 %v467, %v466
  %v547 = vpack.c.b16 %v469, %v468
  %v548 = vpack.c.b16 %v471, %v470
  %v549 = vpack.c.b16 %v473, %v472
  %v550 = vpack.c.b16 %v475, %v474
  %v551 = vpack.c.b16 %v477, %v476
  %v552 = vpack.c.b16 %v479, %v478
  %v553 = vpack.c.b16 %v481, %v480
  %v554 = vpack.c.b16 %v483, %v482
  %v555 = vpack.c.b16 %v485, %v484
  %v556 = vpack.c.b16 %v487, %v486
  %v557 = vpack.c.b16 %v489, %v488
  %v558 = vpack.c.b16 %v491, %v490
  %v559 = vpack.c.b16 %v493, %v492
  %v560 = vpack.c.b16 %v495, %v494
  %v561 = vpack.c.b16 %v497, %v496
  %626 = vmatprep.subr.bf16.mxu0 0
  %627 = vmatpush1.bf16.msra.mxu0 %v498
  %628 = vmatprep.subr.bf16.mxu0 0
  %629 = vmatpush1.bf16.msra.mxu0 %v499
  %630 = vmatprep.subr.bf16.mxu0 0
  %631 = vmatpush1.bf16.msra.mxu0 %v500
  %632 = vmatprep.subr.bf16.mxu0 0
  %633 = vmatpush1.bf16.msra.mxu0 %v501
  %634 = vmatprep.subr.bf16.mxu0 0
  %635 = vmatpush1.bf16.msra.mxu0 %v502
  %636 = vmatprep.subr.bf16.mxu0 0
  %637 = vmatpush1.bf16.msra.mxu0 %v503
  %638 = vmatprep.subr.bf16.mxu0 0
  %639 = vmatpush1.bf16.msra.mxu0 %v504
  %640 = vmatprep.subr.bf16.mxu0 0
  %641 = vmatpush1.bf16.msra.mxu0 %v505
  %642 = vmatprep.subr.bf16.mxu0 0
  %643 = vmatpush1.bf16.msra.mxu0 %v506
  %644 = vmatprep.subr.bf16.mxu0 0
  %645 = vmatpush1.bf16.msra.mxu0 %v507
  %646 = vmatprep.subr.bf16.mxu0 0
  %647 = vmatpush1.bf16.msra.mxu0 %v508
  %648 = vmatprep.subr.bf16.mxu0 0
  %649 = vmatpush1.bf16.msra.mxu0 %v509
  %650 = vmatprep.subr.bf16.mxu0 0
  %651 = vmatpush1.bf16.msra.mxu0 %v510
  %652 = vmatprep.subr.bf16.mxu0 0
  %653 = vmatpush1.bf16.msra.mxu0 %v511
  %654 = vmatprep.subr.bf16.mxu0 0
  %655 = vmatpush1.bf16.msra.mxu0 %v512
  %656 = vmatprep.subr.bf16.mxu0 0
  %657 = vmatpush1.bf16.msra.mxu0 %v513
  %658 = vmatprep.mubr.bf16.mxu0 %v211
  %659 = vmatmul.mubr.bf16.gmra.mrb[0].mxu0 %v210
  %v660 = vpop.f32.mrb[0].mxu0
  %v661 = vadd.f32 0.0, %v660
  %v662 = vpop.f32.mrb[0].mxu0
  %v663 = vpop.f32.mrb[0].mxu0
  %v664 = vadd.f32 0.0, %v663
  %v665 = vpop.f32.mrb[0].mxu0
  %666 = vmatprep.mubr.bf16.mxu0 %v219
  %667 = vmatmul.mubr.bf16.gmra.mrb[0].mxu0 %v218
  %v668 = vpop.f32.mrb[0].mxu0
  %v669 = vadd.f32 0.0, %v668
  %v670 = vpop.f32.mrb[0].mxu0
  %v671 = vpop.f32.mrb[0].mxu0
  %v672 = vadd.f32 0.0, %v671
  %v673 = vpop.f32.mrb[0].mxu0
  %674 = vdwg.mxu0
  %675 = vmatprep.subr.bf16.mxu0 0
  %676 = vmatpush1.bf16.msra.mxu0 %v514
  %677 = vmatprep.subr.bf16.mxu0 0
  %678 = vmatpush1.bf16.msra.mxu0 %v515
  %679 = vmatprep.subr.bf16.mxu0 0
  %680 = vmatpush1.bf16.msra.mxu0 %v516
  %681 = vmatprep.subr.bf16.mxu0 0
  %682 = vmatpush1.bf16.msra.mxu0 %v517
  %683 = vmatprep.subr.bf16.mxu0 0
  %684 = vmatpush1.bf16.msra.mxu0 %v518
  %685 = vmatprep.subr.bf16.mxu0 0
  %686 = vmatpush1.bf16.msra.mxu0 %v519
  %687 = vmatprep.subr.bf16.mxu0 0
  %688 = vmatpush1.bf16.msra.mxu0 %v520
  %689 = vmatprep.subr.bf16.mxu0 0
  %690 = vmatpush1.bf16.msra.mxu0 %v521
  %691 = vmatprep.subr.bf16.mxu0 0
  %692 = vmatpush1.bf16.msra.mxu0 %v522
  %693 = vmatprep.subr.bf16.mxu0 0
  %694 = vmatpush1.bf16.msra.mxu0 %v523
  %695 = vmatprep.subr.bf16.mxu0 0
  %696 = vmatpush1.bf16.msra.mxu0 %v524
  %697 = vmatprep.subr.bf16.mxu0 0
  %698 = vmatpush1.bf16.msra.mxu0 %v525
  %699 = vmatprep.subr.bf16.mxu0 0
  %700 = vmatpush1.bf16.msra.mxu0 %v526
  %701 = vmatprep.subr.bf16.mxu0 0
  %702 = vmatpush1.bf16.msra.mxu0 %v527
  %703 = vmatprep.subr.bf16.mxu0 0
  %704 = vmatpush1.bf16.msra.mxu0 %v528
  %705 = vmatprep.subr.bf16.mxu0 0
  %706 = vmatpush1.bf16.msra.mxu0 %v529
  %707 = vmatprep.mubr.bf16.mxu0 %v213
  %708 = vmatmul.mubr.bf16.gmra.mrb[0].mxu0 %v212
  %v709 = vpop.f32.mrb[0].mxu0
  %v710 = vadd.f32 %v661, %v709
  %v711 = vpop.f32.mrb[0].mxu0
  %v712 = vpop.f32.mrb[0].mxu0
  %v713 = vadd.f32 %v664, %v712
  %v714 = vpop.f32.mrb[0].mxu0
  %715 = vmatprep.mubr.bf16.mxu0 %v221
  %716 = vmatmul.mubr.bf16.gmra.mrb[0].mxu0 %v220
  %v717 = vpop.f32.mrb[0].mxu0
  %v718 = vadd.f32 %v669, %v717
  %v719 = vpop.f32.mrb[0].mxu0
  %v720 = vpop.f32.mrb[0].mxu0
  %v721 = vadd.f32 %v672, %v720
  %v722 = vpop.f32.mrb[0].mxu0
  %723 = vdwg.mxu0
  %724 = vmatprep.subr.bf16.mxu0 0
  %725 = vmatpush1.bf16.msra.mxu0 %v530
  %726 = vmatprep.subr.bf16.mxu0 0
  %727 = vmatpush1.bf16.msra.mxu0 %v531
  %728 = vmatprep.subr.bf16.mxu0 0
  %729 = vmatpush1.bf16.msra.mxu0 %v532
  %730 = vmatprep.subr.bf16.mxu0 0
  %731 = vmatpush1.bf16.msra.mxu0 %v533
  %732 = vmatprep.subr.bf16.mxu0 0
  %733 = vmatpush1.bf16.msra.mxu0 %v534
  %734 = vmatprep.subr.bf16.mxu0 0
  %735 = vmatpush1.bf16.msra.mxu0 %v535
  %736 = vmatprep.subr.bf16.mxu0 0
  %737 = vmatpush1.bf16.msra.mxu0 %v536
  %738 = vmatprep.subr.bf16.mxu0 0
  %739 = vmatpush1.bf16.msra.mxu0 %v537
  %740 = vmatprep.subr.bf16.mxu0 0
  %741 = vmatpush1.bf16.msra.mxu0 %v538
  %742 = vmatprep.subr.bf16.mxu0 0
  %743 = vmatpush1.bf16.msra.mxu0 %v539
  %744 = vmatprep.subr.bf16.mxu0 0
  %745 = vmatpush1.bf16.msra.mxu0 %v540
  %746 = vmatprep.subr.bf16.mxu0 0
  %747 = vmatpush1.bf16.msra.mxu0 %v541
  %748 = vmatprep.subr.bf16.mxu0 0
  %749 = vmatpush1.bf16.msra.mxu0 %v542
  %750 = vmatprep.subr.bf16.mxu0 0
  %751 = vmatpush1.bf16.msra.mxu0 %v543
  %752 = vmatprep.subr.bf16.mxu0 0
  %753 = vmatpush1.bf16.msra.mxu0 %v544
  %754 = vmatprep.subr.bf16.mxu0 0
  %755 = vmatpush1.bf16.msra.mxu0 %v545
  %756 = vmatprep.mubr.bf16.mxu0 %v215
  %757 = vmatmul.mubr.bf16.gmra.mrb[0].mxu0 %v214
  %v758 = vpop.f32.mrb[0].mxu0
  %v759 = vadd.f32 %v710, %v758
  %v760 = vpop.f32.mrb[0].mxu0
  %v761 = vpop.f32.mrb[0].mxu0
  %v762 = vadd.f32 %v713, %v761
  %v763 = vpop.f32.mrb[0].mxu0
  %764 = vmatprep.mubr.bf16.mxu0 %v223
  %765 = vmatmul.mubr.bf16.gmra.mrb[0].mxu0 %v222
  %v766 = vpop.f32.mrb[0].mxu0
  %v767 = vadd.f32 %v718, %v766
  %v768 = vpop.f32.mrb[0].mxu0
  %v769 = vpop.f32.mrb[0].mxu0
  %v770 = vadd.f32 %v721, %v769
  %v771 = vpop.f32.mrb[0].mxu0
  %772 = vdwg.mxu0
  %773 = vmatprep.subr.bf16.mxu0 0
  %774 = vmatpush1.bf16.msra.mxu0 %v546
  %775 = vmatprep.subr.bf16.mxu0 0
  %776 = vmatpush1.bf16.msra.mxu0 %v547
  %777 = vmatprep.subr.bf16.mxu0 0
  %778 = vmatpush1.bf16.msra.mxu0 %v548
  %779 = vmatprep.subr.bf16.mxu0 0
  %780 = vmatpush1.bf16.msra.mxu0 %v549
  %781 = vmatprep.subr.bf16.mxu0 0
  %782 = vmatpush1.bf16.msra.mxu0 %v550
  %783 = vmatprep.subr.bf16.mxu0 0
  %784 = vmatpush1.bf16.msra.mxu0 %v551
  %785 = vmatprep.subr.bf16.mxu0 0
  %786 = vmatpush1.bf16.msra.mxu0 %v552
  %787 = vmatprep.subr.bf16.mxu0 0
  %788 = vmatpush1.bf16.msra.mxu0 %v553
  %789 = vmatprep.subr.bf16.mxu0 0
  %790 = vmatpush1.bf16.msra.mxu0 %v554
  %791 = vmatprep.subr.bf16.mxu0 0
  %792 = vmatpush1.bf16.msra.mxu0 %v555
  %793 = vmatprep.subr.bf16.mxu0 0
  %794 = vmatpush1.bf16.msra.mxu0 %v556
  %795 = vmatprep.subr.bf16.mxu0 0
  %796 = vmatpush1.bf16.msra.mxu0 %v557
  %797 = vmatprep.subr.bf16.mxu0 0
  %798 = vmatpush1.bf16.msra.mxu0 %v558
  %799 = vmatprep.subr.bf16.mxu0 0
  %800 = vmatpush1.bf16.msra.mxu0 %v559
  %801 = vmatprep.subr.bf16.mxu0 0
  %802 = vmatpush1.bf16.msra.mxu0 %v560
  %803 = vmatprep.subr.bf16.mxu0 0
  %804 = vmatpush1.bf16.msra.mxu0 %v561
  %805 = vmatprep.mubr.bf16.mxu0 %v217
  %806 = vmatmul.mubr.bf16.gmra.mrb[0].mxu0 %v216
  %v807 = vpop.f32.mrb[0].mxu0
  %v808 = vadd.f32 %v759, %v807
  %v809 = vpop.f32.mrb[0].mxu0
  %v810 = vpop.f32.mrb[0].mxu0
  %v811 = vadd.f32 %v762, %v810
  %v812 = vpop.f32.mrb[0].mxu0
  %813 = vmatprep.mubr.bf16.mxu0 %v225
  %814 = vmatmul.mubr.bf16.gmra.mrb[0].mxu0 %v224
  %v815 = vpop.f32.mrb[0].mxu0
  %v816 = vadd.f32 %v767, %v815
  %v817 = vpop.f32.mrb[0].mxu0
  %v818 = vpop.f32.mrb[0].mxu0
  %v819 = vadd.f32 %v770, %v818
  %v820 = vpop.f32.mrb[0].mxu0
  %821 = vdwg.mxu0
  %v822 = vld [vmem:[%s2] sm:$0x1]
  %v823 = vld [vmem:[%s3] sm:$0x1]
  %v824 = vadd.f32 %v808, %v811
  %v825 = vadd.f32 %v824, %v816
  %v826 = vadd.f32 %v825, %v819
  %v827 = vrot.slane %v826, 4
  %v828 = vadd.f32 %v826, %v827
  %v829 = vrot.slane %v828, 2
  %v830 = vadd.f32 %v828, %v829
  %v831 = vrot.slane %v830, 1
  %v832 = vadd.f32 %v830, %v831
  %v833 = vrcp.pop 32.0
  %v834 = vmul.f32 %v832, %v833
  %v835 = vsub.f32 %v808, %v834
  %v836 = vsub.f32 %v811, %v834
  %v837 = vsub.f32 %v816, %v834
  %v838 = vsub.f32 %v819, %v834
  %v839 = vmul.f32 %v835, %v835
  %v840 = vmul.f32 %v836, %v836
  %v841 = vmul.f32 %v837, %v837
  %v842 = vmul.f32 %v838, %v838
  %v843 = vadd.f32 %v839, %v840
  %v844 = vadd.f32 %v843, %v841
  %v845 = vadd.f32 %v844, %v842
  %v846 = vrot.slane %v845, 4
  %v847 = vadd.f32 %v845, %v846
  %v848 = vrot.slane %v847, 2
  %v849 = vadd.f32 %v847, %v848
  %v850 = vrot.slane %v849, 1
  %v851 = vadd.f32 %v849, %v850
  %v852 = vmul.f32 %v851, %v833
  %v853 = vadd.f32 %v852, 1e-05
  %v854 = vrsqrt.pop %v853
  %v855 = vmul.f32 %v835, %v854
  %v856 = vmul.f32 %v836, %v854
  %v857 = vmul.f32 %v837, %v854
  %v858 = vmul.f32 %v838, %v854
  %v860 = vlaneseq
  %v861 = vshrl.u32 %v860, 7
  %v862 = vsub.s32 0, %v861
  %v863 = vrot.slane %v822, %v862
  %v865 = vmul.f32 %v855, %v863
  %v866 = vmul.f32 %v856, %v863
  %v867 = vmul.f32 %v857, %v863
  %v868 = vmul.f32 %v858, %v863
  %v870 = vlaneseq
  %v871 = vshrl.u32 %v870, 7
  %v872 = vsub.s32 0, %v871
  %v873 = vrot.slane %v823, %v872
  %v875 = vadd.f32 %v865, %v873
  %v876 = vadd.f32 %v866, %v873
  %v877 = vadd.f32 %v867, %v873
  %v878 = vadd.f32 %v868, %v873
  %vm879 = vcmp.ge.f32.partialorder %v875, 0.0
  %vm880 = vcmp.ge.f32.partialorder %v876, 0.0
  %vm881 = vcmp.ge.f32.partialorder %v877, 0.0
  %vm882 = vcmp.ge.f32.partialorder %v878, 0.0
  %v883 = vmul.f32 %v875, 0.2
  %v884 = vmul.f32 %v876, 0.2
  %v885 = vmul.f32 %v877, 0.2
  %v886 = vmul.f32 %v878, 0.2
  %v887 = vsel %vm879, %v875, %v883
  %v888 = vsel %vm880, %v876, %v884
  %v889 = vsel %vm881, %v877, %v885
  %v890 = vsel %vm882, %v878, %v886
  %v891 = vpack.c.bf16 %v888, %v887
  %v892 = vpack.c.bf16 %v890, %v889
  %v895 = vunpack.c.l.b16 %v891
  %v896 = vunpack.c.h.b16 %v891
  %v897 = vunpack.c.l.b16 %v892
  %v898 = vunpack.c.h.b16 %v892
  %v899 = vpack.c.b16 %v895, %v895
  %v900 = vpack.c.b16 %v896, %v896
  %v901 = vpack.c.b16 %v897, %v897
  %v902 = vpack.c.b16 %v898, %v898
  %907 = vst [vmem:[%s4] sm:$0xf] %v899
  %908 = vst [vmem:[%s4 + $0x4] sm:$0xf] %v900
  %909 = vst [vmem:[%s4 + $0x8] sm:$0xf] %v901
  %910 = vst [vmem:[%s4 + $0xc] sm:$0xf] %v902
  // Predicated region
  $region18: #{discriminator_forward.4} parent=0 // pred_check
    _
  $region19: #{discriminator_forward.4} parent=0 // pred_check_branch
    %912 = sbr.rel (0) target = $region21
  $region20: #{discriminator_forward.4} parent=0 // pred_region
    _
  $region21: #{discriminator_forward.4} parent=0 // pred_fallthru
    _
  // Predicated region
  $region22: #{discriminator_forward.4} parent=0 // pred_check
    _
  $region23: #{discriminator_forward.4} parent=0 // pred_check_branch
    %914 = sbr.rel (0) target = $region25
  $region24: #{discriminator_forward.4} parent=0 // pred_region
    _
  $region25: #{discriminator_forward.4} parent=0 // pred_fallthru
    _

// kernel: discriminator_forward.5
$region0: #{discriminator_forward.5}
  #allocation0 [shape = 'u32[]', space=smem, size = 0x4, offset = 0x4, fixed_abs, tag = 'smem constant byte address 0x4 - core index']
  #allocation1 [shape = 'u32[144,128]{1,0:T(1,128)}', space=vmem, size = 0x12000, scoped, tag = 'internal scratch']
  %s0 = inlined_call_operand.vmem [shape: bf16[8,2048], index: 0, kind: input, shape index: {}]
  %s1 = inlined_call_operand.vmem [shape: bf16[2048,256], index: 1, kind: input, shape index: {}]
  %s2 = inlined_call_operand.vmem [shape: f32[1,256], index: 2, kind: input, shape index: {}]
  %s3 = inlined_call_operand.vmem [shape: f32[1,256], index: 3, kind: input, shape index: {}]
  %s4 = inlined_call_operand.vmem [shape: f32[256,1], index: 4, kind: input, shape index: {}]
  %s5 = inlined_call_operand.vmem [shape: f32[2,8], index: 5, kind: input, shape index: {}]
  %s6 = inlined_call_operand.vmem [shape: f32[2,1], index: 6, kind: output, shape index: {}]
  %s7 = sld [smem:[#allocation0]]
  $region34: #{discriminator_forward.5} parent=0
    _
  %s9 = ssub.s32 1, %s7
  %s10 = scalar_select 0, %s9, %s7
  // Predicated region
  $region2: #{discriminator_forward.5} parent=0 // pred_check
    _
  $region3: #{discriminator_forward.5} parent=0 // pred_check_branch
    %12 = sbr.rel (0) target = $region5
  $region4: #{discriminator_forward.5} parent=0 // pred_region
    _
  $region5: #{discriminator_forward.5} parent=0 // pred_fallthru
    _
  // Predicated region
  $region6: #{discriminator_forward.5} parent=0 // pred_check
    _
  $region7: #{discriminator_forward.5} parent=0 // pred_check_branch
    %14 = sbr.rel (0) target = $region9
  $region8: #{discriminator_forward.5} parent=0 // pred_region
    _
  $region9: #{discriminator_forward.5} parent=0 // pred_fallthru
    _
  // Predicated region
  $region10: #{discriminator_forward.5} parent=0 // pred_check
    _
  $region11: #{discriminator_forward.5} parent=0 // pred_check_branch
    %16 = sbr.rel (0) target = $region13
  $region12: #{discriminator_forward.5} parent=0 // pred_region
    _
  $region13: #{discriminator_forward.5} parent=0 // pred_fallthru
    _
  // Predicated region
  $region14: #{discriminator_forward.5} parent=0 // pred_check
    _
  $region15: #{discriminator_forward.5} parent=0 // pred_check_branch
    %18 = sbr.rel (0) target = $region17
  $region16: #{discriminator_forward.5} parent=0 // pred_region
    _
  $region17: #{discriminator_forward.5} parent=0 // pred_fallthru
    _
  // Predicated region
  $region18: #{discriminator_forward.5} parent=0 // pred_check
    _
  $region19: #{discriminator_forward.5} parent=0 // pred_check_branch
    %20 = sbr.rel (0) target = $region21
  $region20: #{discriminator_forward.5} parent=0 // pred_region
    _
  $region21: #{discriminator_forward.5} parent=0 // pred_fallthru
    _
  // Predicated region
  $region22: #{discriminator_forward.5} parent=0 // pred_check
    _
  $region23: #{discriminator_forward.5} parent=0 // pred_check_branch
    %22 = sbr.rel (0) target = $region25
  $region24: #{discriminator_forward.5} parent=0 // pred_region
    _
  $region25: #{discriminator_forward.5} parent=0 // pred_fallthru
    _
  %v23 = vld [vmem:[%s0] sm:$0xff]
  %v24 = vld [vmem:[%s0 + $0x8] sm:$0xff]
  %v25 = vld [vmem:[%s0 + $0x10] sm:$0xff]
  %v26 = vld [vmem:[%s0 + $0x18] sm:$0xff]
  %v27 = vld [vmem:[%s0 + $0x20] sm:$0xff]
  %v28 = vld [vmem:[%s0 + $0x28] sm:$0xff]
  %v29 = vld [vmem:[%s0 + $0x30] sm:$0xff]
  %v30 = vld [vmem:[%s0 + $0x38] sm:$0xff]
  %v31 = vld [vmem:[%s1] sm:$0xff]
  %v32 = vld [vmem:[%s1 + $0x8] sm:$0xff]
  %v33 = vld [vmem:[%s1 + $0x10] sm:$0xff]
  %v34 = vld [vmem:[%s1 + $0x18] sm:$0xff]
  %v35 = vld [vmem:[%s1 + $0x20] sm:$0xff]
  %v36 = vld [vmem:[%s1 + $0x28] sm:$0xff]
  %v37 = vld [vmem:[%s1 + $0x30] sm:$0xff]
  %v38 = vld [vmem:[%s1 + $0x38] sm:$0xff]
  %v39 = vld [vmem:[%s1 + $0x40] sm:$0xff]
  %v40 = vld [vmem:[%s1 + $0x48] sm:$0xff]
  %v41 = vld [vmem:[%s1 + $0x50] sm:$0xff]
  %v42 = vld [vmem:[%s1 + $0x58] sm:$0xff]
  %v43 = vld [vmem:[%s1 + $0x60] sm:$0xff]
  %v44 = vld [vmem:[%s1 + $0x68] sm:$0xff]
  %v45 = vld [vmem:[%s1 + $0x70] sm:$0xff]
  %v46 = vld [vmem:[%s1 + $0x78] sm:$0xff]
  %v47 = vld [vmem:[%s1 + $0x80] sm:$0xff]
  %v48 = vld [vmem:[%s1 + $0x88] sm:$0xff]
  %v49 = vld [vmem:[%s1 + $0x90] sm:$0xff]
  %v50 = vld [vmem:[%s1 + $0x98] sm:$0xff]
  %v51 = vld [vmem:[%s1 + $0xa0] sm:$0xff]
  %v52 = vld [vmem:[%s1 + $0xa8] sm:$0xff]
  %v53 = vld [vmem:[%s1 + $0xb0] sm:$0xff]
  %v54 = vld [vmem:[%s1 + $0xb8] sm:$0xff]
  %v55 = vld [vmem:[%s1 + $0xc0] sm:$0xff]
  %v56 = vld [vmem:[%s1 + $0xc8] sm:$0xff]
  %v57 = vld [vmem:[%s1 + $0xd0] sm:$0xff]
  %v58 = vld [vmem:[%s1 + $0xd8] sm:$0xff]
  %v59 = vld [vmem:[%s1 + $0xe0] sm:$0xff]
  %v60 = vld [vmem:[%s1 + $0xe8] sm:$0xff]
  %v61 = vld [vmem:[%s1 + $0xf0] sm:$0xff]
  %v62 = vld [vmem:[%s1 + $0xf8] sm:$0xff]
  %v63 = vld [vmem:[%s1 + $0x100] sm:$0xff]
  %v64 = vld [vmem:[%s1 + $0x108] sm:$0xff]
  %v65 = vld [vmem:[%s1 + $0x110] sm:$0xff]
  %v66 = vld [vmem:[%s1 + $0x118] sm:$0xff]
  %v67 = vld [vmem:[%s1 + $0x120] sm:$0xff]
  %v68 = vld [vmem:[%s1 + $0x128] sm:$0xff]
  %v69 = vld [vmem:[%s1 + $0x130] sm:$0xff]
  %v70 = vld [vmem:[%s1 + $0x138] sm:$0xff]
  %v71 = vld [vmem:[%s1 + $0x140] sm:$0xff]
  %v72 = vld [vmem:[%s1 + $0x148] sm:$0xff]
  %v73 = vld [vmem:[%s1 + $0x150] sm:$0xff]
  %v74 = vld [vmem:[%s1 + $0x158] sm:$0xff]
  %v75 = vld [vmem:[%s1 + $0x160] sm:$0xff]
  %v76 = vld [vmem:[%s1 + $0x168] sm:$0xff]
  %v77 = vld [vmem:[%s1 + $0x170] sm:$0xff]
  %v78 = vld [vmem:[%s1 + $0x178] sm:$0xff]
  %v79 = vld [vmem:[%s1 + $0x180] sm:$0xff]
  %v80 = vld [vmem:[%s1 + $0x188] sm:$0xff]
  %v81 = vld [vmem:[%s1 + $0x190] sm:$0xff]
  %v82 = vld [vmem:[%s1 + $0x198] sm:$0xff]
  %v83 = vld [vmem:[%s1 + $0x1a0] sm:$0xff]
  %v84 = vld [vmem:[%s1 + $0x1a8] sm:$0xff]
  %v85 = vld [vmem:[%s1 + $0x1b0] sm:$0xff]
  %v86 = vld [vmem:[%s1 + $0x1b8] sm:$0xff]
  %v87 = vld [vmem:[%s1 + $0x1c0] sm:$0xff]
  %v88 = vld [vmem:[%s1 + $0x1c8] sm:$0xff]
  %v89 = vld [vmem:[%s1 + $0x1d0] sm:$0xff]
  %v90 = vld [vmem:[%s1 + $0x1d8] sm:$0xff]
  %v91 = vld [vmem:[%s1 + $0x1e0] sm:$0xff]
  %v92 = vld [vmem:[%s1 + $0x1e8] sm:$0xff]
  %v93 = vld [vmem:[%s1 + $0x1f0] sm:$0xff]
  %v94 = vld [vmem:[%s1 + $0x1f8] sm:$0xff]
  %v95 = vld [vmem:[%s1 + $0x200] sm:$0xff]
  %v96 = vld [vmem:[%s1 + $0x208] sm:$0xff]
  %v97 = vld [vmem:[%s1 + $0x210] sm:$0xff]
  %v98 = vld [vmem:[%s1 + $0x218] sm:$0xff]
  %v99 = vld [vmem:[%s1 + $0x220] sm:$0xff]
  %v100 = vld [vmem:[%s1 + $0x228] sm:$0xff]
  %v101 = vld [vmem:[%s1 + $0x230] sm:$0xff]
  %v102 = vld [vmem:[%s1 + $0x238] sm:$0xff]
  %v103 = vld [vmem:[%s1 + $0x240] sm:$0xff]
  %v104 = vld [vmem:[%s1 + $0x248] sm:$0xff]
  %v105 = vld [vmem:[%s1 + $0x250] sm:$0xff]
  %v106 = vld [vmem:[%s1 + $0x258] sm:$0xff]
  %v107 = vld [vmem:[%s1 + $0x260] sm:$0xff]
  %v108 = vld [vmem:[%s1 + $0x268] sm:$0xff]
  %v109 = vld [vmem:[%s1 + $0x270] sm:$0xff]
  %v110 = vld [vmem:[%s1 + $0x278] sm:$0xff]
  %v111 = vld [vmem:[%s1 + $0x280] sm:$0xff]
  %v112 = vld [vmem:[%s1 + $0x288] sm:$0xff]
  %v113 = vld [vmem:[%s1 + $0x290] sm:$0xff]
  %v114 = vld [vmem:[%s1 + $0x298] sm:$0xff]
  %v115 = vld [vmem:[%s1 + $0x2a0] sm:$0xff]
  %v116 = vld [vmem:[%s1 + $0x2a8] sm:$0xff]
  %v117 = vld [vmem:[%s1 + $0x2b0] sm:$0xff]
  %v118 = vld [vmem:[%s1 + $0x2b8] sm:$0xff]
  %v119 = vld [vmem:[%s1 + $0x2c0] sm:$0xff]
  %v120 = vld [vmem:[%s1 + $0x2c8] sm:$0xff]
  %v121 = vld [vmem:[%s1 + $0x2d0] sm:$0xff]
  %v122 = vld [vmem:[%s1 + $0x2d8] sm:$0xff]
  %v123 = vld [vmem:[%s1 + $0x2e0] sm:$0xff]
  %v124 = vld [vmem:[%s1 + $0x2e8] sm:$0xff]
  %v125 = vld [vmem:[%s1 + $0x2f0] sm:$0xff]
  %v126 = vld [vmem:[%s1 + $0x2f8] sm:$0xff]
  %v127 = vld [vmem:[%s1 + $0x300] sm:$0xff]
  %v128 = vld [vmem:[%s1 + $0x308] sm:$0xff]
  %v129 = vld [vmem:[%s1 + $0x310] sm:$0xff]
  %v130 = vld [vmem:[%s1 + $0x318] sm:$0xff]
  %v131 = vld [vmem:[%s1 + $0x320] sm:$0xff]
  %v132 = vld [vmem:[%s1 + $0x328] sm:$0xff]
  %v133 = vld [vmem:[%s1 + $0x330] sm:$0xff]
  %v134 = vld [vmem:[%s1 + $0x338] sm:$0xff]
  %v135 = vld [vmem:[%s1 + $0x340] sm:$0xff]
  %v136 = vld [vmem:[%s1 + $0x348] sm:$0xff]
  %v137 = vld [vmem:[%s1 + $0x350] sm:$0xff]
  %v138 = vld [vmem:[%s1 + $0x358] sm:$0xff]
  %v139 = vld [vmem:[%s1 + $0x360] sm:$0xff]
  %v140 = vld [vmem:[%s1 + $0x368] sm:$0xff]
  %v141 = vld [vmem:[%s1 + $0x370] sm:$0xff]
  %v142 = vld [vmem:[%s1 + $0x378] sm:$0xff]
  %v143 = vld [vmem:[%s1 + $0x380] sm:$0xff]
  %v144 = vld [vmem:[%s1 + $0x388] sm:$0xff]
  %v145 = vld [vmem:[%s1 + $0x390] sm:$0xff]
  %v146 = vld [vmem:[%s1 + $0x398] sm:$0xff]
  %v147 = vld [vmem:[%s1 + $0x3a0] sm:$0xff]
  %v148 = vld [vmem:[%s1 + $0x3a8] sm:$0xff]
  %v149 = vld [vmem:[%s1 + $0x3b0] sm:$0xff]
  %v150 = vld [vmem:[%s1 + $0x3b8] sm:$0xff]
  %v151 = vld [vmem:[%s1 + $0x3c0] sm:$0xff]
  %v152 = vld [vmem:[%s1 + $0x3c8] sm:$0xff]
  %v153 = vld [vmem:[%s1 + $0x3d0] sm:$0xff]
  %v154 = vld [vmem:[%s1 + $0x3d8] sm:$0xff]
  %v155 = vld [vmem:[%s1 + $0x3e0] sm:$0xff]
  %v156 = vld [vmem:[%s1 + $0x3e8] sm:$0xff]
  %v157 = vld [vmem:[%s1 + $0x3f0] sm:$0xff]
  %v158 = vld [vmem:[%s1 + $0x3f8] sm:$0xff]
  %v159 = vld [vmem:[%s1 + $0x400] sm:$0xff]
  %v160 = vld [vmem:[%s1 + $0x408] sm:$0xff]
  %v161 = vld [vmem:[%s1 + $0x410] sm:$0xff]
  %v162 = vld [vmem:[%s1 + $0x418] sm:$0xff]
  %v163 = vld [vmem:[%s1 + $0x420] sm:$0xff]
  %v164 = vld [vmem:[%s1 + $0x428] sm:$0xff]
  %v165 = vld [vmem:[%s1 + $0x430] sm:$0xff]
  %v166 = vld [vmem:[%s1 + $0x438] sm:$0xff]
  %v167 = vld [vmem:[%s1 + $0x440] sm:$0xff]
  %v168 = vld [vmem:[%s1 + $0x448] sm:$0xff]
  %v169 = vld [vmem:[%s1 + $0x450] sm:$0xff]
  %v170 = vld [vmem:[%s1 + $0x458] sm:$0xff]
  %v171 = vld [vmem:[%s1 + $0x460] sm:$0xff]
  %v172 = vld [vmem:[%s1 + $0x468] sm:$0xff]
  %v173 = vld [vmem:[%s1 + $0x470] sm:$0xff]
  %v174 = vld [vmem:[%s1 + $0x478] sm:$0xff]
  %v175 = vld [vmem:[%s1 + $0x480] sm:$0xff]
  %v176 = vld [vmem:[%s1 + $0x488] sm:$0xff]
  %v177 = vld [vmem:[%s1 + $0x490] sm:$0xff]
  %v178 = vld [vmem:[%s1 + $0x498] sm:$0xff]
  %v179 = vld [vmem:[%s1 + $0x4a0] sm:$0xff]
  %v180 = vld [vmem:[%s1 + $0x4a8] sm:$0xff]
  %v181 = vld [vmem:[%s1 + $0x4b0] sm:$0xff]
  %v182 = vld [vmem:[%s1 + $0x4b8] sm:$0xff]
  %v183 = vld [vmem:[%s1 + $0x4c0] sm:$0xff]
  %v184 = vld [vmem:[%s1 + $0x4c8] sm:$0xff]
  %v185 = vld [vmem:[%s1 + $0x4d0] sm:$0xff]
  %v186 = vld [vmem:[%s1 + $0x4d8] sm:$0xff]
  %v187 = vld [vmem:[%s1 + $0x4e0] sm:$0xff]
  %v188 = vld [vmem:[%s1 + $0x4e8] sm:$0xff]
  %v189 = vld [vmem:[%s1 + $0x4f0] sm:$0xff]
  %v190 = vld [vmem:[%s1 + $0x4f8] sm:$0xff]
  %v191 = vld [vmem:[%s1 + $0x500] sm:$0xff]
  %v192 = vld [vmem:[%s1 + $0x508] sm:$0xff]
  %v193 = vld [vmem:[%s1 + $0x510] sm:$0xff]
  %v194 = vld [vmem:[%s1 + $0x518] sm:$0xff]
  %v195 = vld [vmem:[%s1 + $0x520] sm:$0xff]
  %v196 = vld [vmem:[%s1 + $0x528] sm:$0xff]
  %v197 = vld [vmem:[%s1 + $0x530] sm:$0xff]
  %v198 = vld [vmem:[%s1 + $0x538] sm:$0xff]
  %v199 = vld [vmem:[%s1 + $0x540] sm:$0xff]
  %v200 = vld [vmem:[%s1 + $0x548] sm:$0xff]
  %v201 = vld [vmem:[%s1 + $0x550] sm:$0xff]
  %v202 = vld [vmem:[%s1 + $0x558] sm:$0xff]
  %v203 = vld [vmem:[%s1 + $0x560] sm:$0xff]
  %v204 = vld [vmem:[%s1 + $0x568] sm:$0xff]
  %v205 = vld [vmem:[%s1 + $0x570] sm:$0xff]
  %v206 = vld [vmem:[%s1 + $0x578] sm:$0xff]
  %v207 = vld [vmem:[%s1 + $0x580] sm:$0xff]
  %v208 = vld [vmem:[%s1 + $0x588] sm:$0xff]
  %v209 = vld [vmem:[%s1 + $0x590] sm:$0xff]
  %v210 = vld [vmem:[%s1 + $0x598] sm:$0xff]
  %v211 = vld [vmem:[%s1 + $0x5a0] sm:$0xff]
  %v212 = vld [vmem:[%s1 + $0x5a8] sm:$0xff]
  %v213 = vld [vmem:[%s1 + $0x5b0] sm:$0xff]
  %v214 = vld [vmem:[%s1 + $0x5b8] sm:$0xff]
  %v215 = vld [vmem:[%s1 + $0x5c0] sm:$0xff]
  %v216 = vld [vmem:[%s1 + $0x5c8] sm:$0xff]
  %v217 = vld [vmem:[%s1 + $0x5d0] sm:$0xff]
  %v218 = vld [vmem:[%s1 + $0x5d8] sm:$0xff]
  %v219 = vld [vmem:[%s1 + $0x5e0] sm:$0xff]
  %v220 = vld [vmem:[%s1 + $0x5e8] sm:$0xff]
  %v221 = vld [vmem:[%s1 + $0x5f0] sm:$0xff]
  %v222 = vld [vmem:[%s1 + $0x5f8] sm:$0xff]
  %v223 = vld [vmem:[%s1 + $0x600] sm:$0xff]
  %v224 = vld [vmem:[%s1 + $0x608] sm:$0xff]
  %v225 = vld [vmem:[%s1 + $0x610] sm:$0xff]
  %v226 = vld [vmem:[%s1 + $0x618] sm:$0xff]
  %v227 = vld [vmem:[%s1 + $0x620] sm:$0xff]
  %v228 = vld [vmem:[%s1 + $0x628] sm:$0xff]
  %v229 = vld [vmem:[%s1 + $0x630] sm:$0xff]
  %v230 = vld [vmem:[%s1 + $0x638] sm:$0xff]
  %v231 = vld [vmem:[%s1 + $0x640] sm:$0xff]
  %v232 = vld [vmem:[%s1 + $0x648] sm:$0xff]
  %v233 = vld [vmem:[%s1 + $0x650] sm:$0xff]
  %v234 = vld [vmem:[%s1 + $0x658] sm:$0xff]
  %v235 = vld [vmem:[%s1 + $0x660] sm:$0xff]
  %v236 = vld [vmem:[%s1 + $0x668] sm:$0xff]
  %v237 = vld [vmem:[%s1 + $0x670] sm:$0xff]
  %v238 = vld [vmem:[%s1 + $0x678] sm:$0xff]
  %v239 = vld [vmem:[%s1 + $0x680] sm:$0xff]
  %v240 = vld [vmem:[%s1 + $0x688] sm:$0xff]
  %v241 = vld [vmem:[%s1 + $0x690] sm:$0xff]
  %v242 = vld [vmem:[%s1 + $0x698] sm:$0xff]
  %v243 = vld [vmem:[%s1 + $0x6a0] sm:$0xff]
  %v244 = vld [vmem:[%s1 + $0x6a8] sm:$0xff]
  %v245 = vld [vmem:[%s1 + $0x6b0] sm:$0xff]
  %v246 = vld [vmem:[%s1 + $0x6b8] sm:$0xff]
  %v247 = vld [vmem:[%s1 + $0x6c0] sm:$0xff]
  %v248 = vld [vmem:[%s1 + $0x6c8] sm:$0xff]
  %v249 = vld [vmem:[%s1 + $0x6d0] sm:$0xff]
  %v250 = vld [vmem:[%s1 + $0x6d8] sm:$0xff]
  %v251 = vld [vmem:[%s1 + $0x6e0] sm:$0xff]
  %v252 = vld [vmem:[%s1 + $0x6e8] sm:$0xff]
  %v253 = vld [vmem:[%s1 + $0x6f0] sm:$0xff]
  %v254 = vld [vmem:[%s1 + $0x6f8] sm:$0xff]
  %v255 = vld [vmem:[%s1 + $0x700] sm:$0xff]
  %v256 = vld [vmem:[%s1 + $0x708] sm:$0xff]
  %v257 = vld [vmem:[%s1 + $0x710] sm:$0xff]
  %v258 = vld [vmem:[%s1 + $0x718] sm:$0xff]
  %v259 = vld [vmem:[%s1 + $0x720] sm:$0xff]
  %v260 = vld [vmem:[%s1 + $0x728] sm:$0xff]
  %v261 = vld [vmem:[%s1 + $0x730] sm:$0xff]
  %v262 = vld [vmem:[%s1 + $0x738] sm:$0xff]
  %v263 = vld [vmem:[%s1 + $0x740] sm:$0xff]
  %v264 = vld [vmem:[%s1 + $0x748] sm:$0xff]
  %v265 = vld [vmem:[%s1 + $0x750] sm:$0xff]
  %v266 = vld [vmem:[%s1 + $0x758] sm:$0xff]
  %v267 = vld [vmem:[%s1 + $0x760] sm:$0xff]
  %v268 = vld [vmem:[%s1 + $0x768] sm:$0xff]
  %v269 = vld [vmem:[%s1 + $0x770] sm:$0xff]
  %v270 = vld [vmem:[%s1 + $0x778] sm:$0xff]
  %v271 = vld [vmem:[%s1 + $0x780] sm:$0xff]
  %v272 = vld [vmem:[%s1 + $0x788] sm:$0xff]
  %v273 = vld [vmem:[%s1 + $0x790] sm:$0xff]
  %v274 = vld [vmem:[%s1 + $0x798] sm:$0xff]
  %v275 = vld [vmem:[%s1 + $0x7a0] sm:$0xff]
  %v276 = vld [vmem:[%s1 + $0x7a8] sm:$0xff]
  %v277 = vld [vmem:[%s1 + $0x7b0] sm:$0xff]
  %v278 = vld [vmem:[%s1 + $0x7b8] sm:$0xff]
  %v279 = vld [vmem:[%s1 + $0x7c0] sm:$0xff]
  %v280 = vld [vmem:[%s1 + $0x7c8] sm:$0xff]
  %v281 = vld [vmem:[%s1 + $0x7d0] sm:$0xff]
  %v282 = vld [vmem:[%s1 + $0x7d8] sm:$0xff]
  %v283 = vld [vmem:[%s1 + $0x7e0] sm:$0xff]
  %v284 = vld [vmem:[%s1 + $0x7e8] sm:$0xff]
  %v285 = vld [vmem:[%s1 + $0x7f0] sm:$0xff]
  %v286 = vld [vmem:[%s1 + $0x7f8] sm:$0xff]
  %v295 = vunpack.c.l.b16 %v23
  %v296 = vunpack.c.h.b16 %v23
  %v297 = vunpack.c.l.b16 %v24
  %v298 = vunpack.c.h.b16 %v24
  %v299 = vunpack.c.l.b16 %v25
  %v300 = vunpack.c.h.b16 %v25
  %v301 = vunpack.c.l.b16 %v26
  %v302 = vunpack.c.h.b16 %v26
  %v303 = vunpack.c.l.b16 %v27
  %v304 = vunpack.c.h.b16 %v27
  %v305 = vunpack.c.l.b16 %v28
  %v306 = vunpack.c.h.b16 %v28
  %v307 = vunpack.c.l.b16 %v29
  %v308 = vunpack.c.h.b16 %v29
  %v309 = vunpack.c.l.b16 %v30
  %v310 = vunpack.c.h.b16 %v30
  %v311 = vpack.c.b16 %v295, %v295
  %v312 = vpack.c.b16 %v296, %v296
  %v313 = vpack.c.b16 %v297, %v297
  %v314 = vpack.c.b16 %v298, %v298
  %v315 = vpack.c.b16 %v299, %v299
  %v316 = vpack.c.b16 %v300, %v300
  %v317 = vpack.c.b16 %v301, %v301
  %v318 = vpack.c.b16 %v302, %v302
  %v319 = vpack.c.b16 %v303, %v303
  %v320 = vpack.c.b16 %v304, %v304
  %v321 = vpack.c.b16 %v305, %v305
  %v322 = vpack.c.b16 %v306, %v306
  %v323 = vpack.c.b16 %v307, %v307
  %v324 = vpack.c.b16 %v308, %v308
  %v325 = vpack.c.b16 %v309, %v309
  %v326 = vpack.c.b16 %v310, %v310
  %v599 = vunpack.c.l.b16 %v31
  %v600 = vunpack.c.h.b16 %v31
  %v601 = vunpack.c.l.b16 %v32
  %v602 = vunpack.c.h.b16 %v32
  %v603 = vunpack.c.l.b16 %v33
  %v604 = vunpack.c.h.b16 %v33
  %v605 = vunpack.c.l.b16 %v34
  %v606 = vunpack.c.h.b16 %v34
  %v607 = vunpack.c.l.b16 %v35
  %v608 = vunpack.c.h.b16 %v35
  %v609 = vunpack.c.l.b16 %v36
  %v610 = vunpack.c.h.b16 %v36
  %v611 = vunpack.c.l.b16 %v37
  %v612 = vunpack.c.h.b16 %v37
  %v613 = vunpack.c.l.b16 %v38
  %v614 = vunpack.c.h.b16 %v38
  %v615 = vunpack.c.l.b16 %v39
  %v616 = vunpack.c.h.b16 %v39
  %v617 = vunpack.c.l.b16 %v40
  %v618 = vunpack.c.h.b16 %v40
  %v619 = vunpack.c.l.b16 %v41
  %v620 = vunpack.c.h.b16 %v41
  %v621 = vunpack.c.l.b16 %v42
  %v622 = vunpack.c.h.b16 %v42
  %v623 = vunpack.c.l.b16 %v43
  %v624 = vunpack.c.h.b16 %v43
  %v625 = vunpack.c.l.b16 %v44
  %v626 = vunpack.c.h.b16 %v44
  %v627 = vunpack.c.l.b16 %v45
  %v628 = vunpack.c.h.b16 %v45
  %v629 = vunpack.c.l.b16 %v46
  %v630 = vunpack.c.h.b16 %v46
  %v631 = vunpack.c.l.b16 %v47
  %v632 = vunpack.c.h.b16 %v47
  %v633 = vunpack.c.l.b16 %v48
  %v634 = vunpack.c.h.b16 %v48
  %v635 = vunpack.c.l.b16 %v49
  %v636 = vunpack.c.h.b16 %v49
  %v637 = vunpack.c.l.b16 %v50
  %v638 = vunpack.c.h.b16 %v50
  %v639 = vunpack.c.l.b16 %v51
  %v640 = vunpack.c.h.b16 %v51
  %v641 = vunpack.c.l.b16 %v52
  %v642 = vunpack.c.h.b16 %v52
  %v643 = vunpack.c.l.b16 %v53
  %v644 = vunpack.c.h.b16 %v53
  %v645 = vunpack.c.l.b16 %v54
  %v646 = vunpack.c.h.b16 %v54
  %v647 = vunpack.c.l.b16 %v55
  %v648 = vunpack.c.h.b16 %v55
  %v649 = vunpack.c.l.b16 %v56
  %v650 = vunpack.c.h.b16 %v56
  %v651 = vunpack.c.l.b16 %v57
  %v652 = vunpack.c.h.b16 %v57
  %v653 = vunpack.c.l.b16 %v58
  %v654 = vunpack.c.h.b16 %v58
  %v655 = vunpack.c.l.b16 %v59
  %v656 = vunpack.c.h.b16 %v59
  %v657 = vunpack.c.l.b16 %v60
  %v658 = vunpack.c.h.b16 %v60
  %v659 = vunpack.c.l.b16 %v61
  %v660 = vunpack.c.h.b16 %v61
  %v661 = vunpack.c.l.b16 %v62
  %v662 = vunpack.c.h.b16 %v62
  %v663 = vunpack.c.l.b16 %v63
  %v664 = vunpack.c.h.b16 %v63
  %v665 = vunpack.c.l.b16 %v64
  %v666 = vunpack.c.h.b16 %v64
  %v667 = vunpack.c.l.b16 %v65
  %v668 = vunpack.c.h.b16 %v65
  %v669 = vunpack.c.l.b16 %v66
  %v670 = vunpack.c.h.b16 %v66
  %v671 = vunpack.c.l.b16 %v67
  %v672 = vunpack.c.h.b16 %v67
  %v673 = vunpack.c.l.b16 %v68
  %v674 = vunpack.c.h.b16 %v68
  %v675 = vunpack.c.l.b16 %v69
  %v676 = vunpack.c.h.b16 %v69
  %v677 = vunpack.c.l.b16 %v70
  %v678 = vunpack.c.h.b16 %v70
  %v679 = vunpack.c.l.b16 %v71
  %v680 = vunpack.c.h.b16 %v71
  %v681 = vunpack.c.l.b16 %v72
  %v682 = vunpack.c.h.b16 %v72
  %v683 = vunpack.c.l.b16 %v73
  %v684 = vunpack.c.h.b16 %v73
  %v685 = vunpack.c.l.b16 %v74
  %v686 = vunpack.c.h.b16 %v74
  %v687 = vunpack.c.l.b16 %v75
  %v688 = vunpack.c.h.b16 %v75
  %v689 = vunpack.c.l.b16 %v76
  %v690 = vunpack.c.h.b16 %v76
  %v691 = vunpack.c.l.b16 %v77
  %v692 = vunpack.c.h.b16 %v77
  %v693 = vunpack.c.l.b16 %v78
  %v694 = vunpack.c.h.b16 %v78
  %v695 = vunpack.c.l.b16 %v79
  %v696 = vunpack.c.h.b16 %v79
  %v697 = vunpack.c.l.b16 %v80
  %v698 = vunpack.c.h.b16 %v80
  %v699 = vunpack.c.l.b16 %v81
  %v700 = vunpack.c.h.b16 %v81
  %v701 = vunpack.c.l.b16 %v82
  %v702 = vunpack.c.h.b16 %v82
  %v703 = vunpack.c.l.b16 %v83
  %v704 = vunpack.c.h.b16 %v83
  %v705 = vunpack.c.l.b16 %v84
  %v706 = vunpack.c.h.b16 %v84
  %v707 = vunpack.c.l.b16 %v85
  %v708 = vunpack.c.h.b16 %v85
  %v709 = vunpack.c.l.b16 %v86
  %v710 = vunpack.c.h.b16 %v86
  %v711 = vunpack.c.l.b16 %v87
  %v712 = vunpack.c.h.b16 %v87
  %v713 = vunpack.c.l.b16 %v88
  %v714 = vunpack.c.h.b16 %v88
  %v715 = vunpack.c.l.b16 %v89
  %v716 = vunpack.c.h.b16 %v89
  %v717 = vunpack.c.l.b16 %v90
  %v718 = vunpack.c.h.b16 %v90
  %v719 = vunpack.c.l.b16 %v91
  %v720 = vunpack.c.h.b16 %v91
  %v721 = vunpack.c.l.b16 %v92
  %v722 = vunpack.c.h.b16 %v92
  %v723 = vunpack.c.l.b16 %v93
  %v724 = vunpack.c.h.b16 %v93
  %v725 = vunpack.c.l.b16 %v94
  %v726 = vunpack.c.h.b16 %v94
  %v727 = vunpack.c.l.b16 %v95
  %v728 = vunpack.c.h.b16 %v95
  %v729 = vunpack.c.l.b16 %v96
  %v730 = vunpack.c.h.b16 %v96
  %v731 = vunpack.c.l.b16 %v97
  %v732 = vunpack.c.h.b16 %v97
  %v733 = vunpack.c.l.b16 %v98
  %v734 = vunpack.c.h.b16 %v98
  %v735 = vunpack.c.l.b16 %v99
  %v736 = vunpack.c.h.b16 %v99
  %v737 = vunpack.c.l.b16 %v100
  %v738 = vunpack.c.h.b16 %v100
  %v739 = vunpack.c.l.b16 %v101
  %v740 = vunpack.c.h.b16 %v101
  %v741 = vunpack.c.l.b16 %v102
  %v742 = vunpack.c.h.b16 %v102
  %v743 = vunpack.c.l.b16 %v103
  %v744 = vunpack.c.h.b16 %v103
  %v745 = vunpack.c.l.b16 %v104
  %v746 = vunpack.c.h.b16 %v104
  %v747 = vunpack.c.l.b16 %v105
  %v748 = vunpack.c.h.b16 %v105
  %v749 = vunpack.c.l.b16 %v106
  %v750 = vunpack.c.h.b16 %v106
  %v751 = vunpack.c.l.b16 %v107
  %v752 = vunpack.c.h.b16 %v107
  %v753 = vunpack.c.l.b16 %v108
  %v754 = vunpack.c.h.b16 %v108
  %v755 = vunpack.c.l.b16 %v109
  %v756 = vunpack.c.h.b16 %v109
  %v757 = vunpack.c.l.b16 %v110
  %v758 = vunpack.c.h.b16 %v110
  %v759 = vunpack.c.l.b16 %v111
  %v760 = vunpack.c.h.b16 %v111
  %v761 = vunpack.c.l.b16 %v112
  %v762 = vunpack.c.h.b16 %v112
  %v763 = vunpack.c.l.b16 %v113
  %v764 = vunpack.c.h.b16 %v113
  %v765 = vunpack.c.l.b16 %v114
  %v766 = vunpack.c.h.b16 %v114
  %v767 = vunpack.c.l.b16 %v115
  %v768 = vunpack.c.h.b16 %v115
  %v769 = vunpack.c.l.b16 %v116
  %v770 = vunpack.c.h.b16 %v116
  %v771 = vunpack.c.l.b16 %v117
  %v772 = vunpack.c.h.b16 %v117
  %v773 = vunpack.c.l.b16 %v118
  %v774 = vunpack.c.h.b16 %v118
  %v775 = vunpack.c.l.b16 %v119
  %v776 = vunpack.c.h.b16 %v119
  %v777 = vunpack.c.l.b16 %v120
  %v778 = vunpack.c.h.b16 %v120
  %v779 = vunpack.c.l.b16 %v121
  %v780 = vunpack.c.h.b16 %v121
  %v781 = vunpack.c.l.b16 %v122
  %v782 = vunpack.c.h.b16 %v122
  %v783 = vunpack.c.l.b16 %v123
  %v784 = vunpack.c.h.b16 %v123
  %v785 = vunpack.c.l.b16 %v124
  %v786 = vunpack.c.h.b16 %v124
  %v787 = vunpack.c.l.b16 %v125
  %v788 = vunpack.c.h.b16 %v125
  %v789 = vunpack.c.l.b16 %v126
  %v790 = vunpack.c.h.b16 %v126
  %v791 = vunpack.c.l.b16 %v127
  %v792 = vunpack.c.h.b16 %v127
  %v793 = vunpack.c.l.b16 %v128
  %v794 = vunpack.c.h.b16 %v128
  %v795 = vunpack.c.l.b16 %v129
  %v796 = vunpack.c.h.b16 %v129
  %v797 = vunpack.c.l.b16 %v130
  %v798 = vunpack.c.h.b16 %v130
  %v799 = vunpack.c.l.b16 %v131
  %v800 = vunpack.c.h.b16 %v131
  %v801 = vunpack.c.l.b16 %v132
  %v802 = vunpack.c.h.b16 %v132
  %v803 = vunpack.c.l.b16 %v133
  %v804 = vunpack.c.h.b16 %v133
  %v805 = vunpack.c.l.b16 %v134
  %v806 = vunpack.c.h.b16 %v134
  %v807 = vunpack.c.l.b16 %v135
  %v808 = vunpack.c.h.b16 %v135
  %v809 = vunpack.c.l.b16 %v136
  %v810 = vunpack.c.h.b16 %v136
  %v811 = vunpack.c.l.b16 %v137
  %v812 = vunpack.c.h.b16 %v137
  %v813 = vunpack.c.l.b16 %v138
  %v814 = vunpack.c.h.b16 %v138
  %v815 = vunpack.c.l.b16 %v139
  %v816 = vunpack.c.h.b16 %v139
  %v817 = vunpack.c.l.b16 %v140
  %v818 = vunpack.c.h.b16 %v140
  %v819 = vunpack.c.l.b16 %v141
  %v820 = vunpack.c.h.b16 %v141
  %v821 = vunpack.c.l.b16 %v142
  %v822 = vunpack.c.h.b16 %v142
  %v823 = vunpack.c.l.b16 %v143
  %v824 = vunpack.c.h.b16 %v143
  %v825 = vunpack.c.l.b16 %v144
  %v826 = vunpack.c.h.b16 %v144
  %v827 = vunpack.c.l.b16 %v145
  %v828 = vunpack.c.h.b16 %v145
  %v829 = vunpack.c.l.b16 %v146
  %v830 = vunpack.c.h.b16 %v146
  %v831 = vunpack.c.l.b16 %v147
  %v832 = vunpack.c.h.b16 %v147
  %v833 = vunpack.c.l.b16 %v148
  %v834 = vunpack.c.h.b16 %v148
  %v835 = vunpack.c.l.b16 %v149
  %v836 = vunpack.c.h.b16 %v149
  %v837 = vunpack.c.l.b16 %v150
  %v838 = vunpack.c.h.b16 %v150
  %v839 = vunpack.c.l.b16 %v151
  %v840 = vunpack.c.h.b16 %v151
  %v841 = vunpack.c.l.b16 %v152
  %v842 = vunpack.c.h.b16 %v152
  %v843 = vunpack.c.l.b16 %v153
  %v844 = vunpack.c.h.b16 %v153
  %v845 = vunpack.c.l.b16 %v154
  %v846 = vunpack.c.h.b16 %v154
  %v847 = vunpack.c.l.b16 %v155
  %v848 = vunpack.c.h.b16 %v155
  %v849 = vunpack.c.l.b16 %v156
  %v850 = vunpack.c.h.b16 %v156
  %v851 = vunpack.c.l.b16 %v157
  %v852 = vunpack.c.h.b16 %v157
  %v853 = vunpack.c.l.b16 %v158
  %v854 = vunpack.c.h.b16 %v158
  %v855 = vunpack.c.l.b16 %v159
  %v856 = vunpack.c.h.b16 %v159
  %v857 = vunpack.c.l.b16 %v160
  %v858 = vunpack.c.h.b16 %v160
  %v859 = vunpack.c.l.b16 %v161
  %v860 = vunpack.c.h.b16 %v161
  %v861 = vunpack.c.l.b16 %v162
  %v862 = vunpack.c.h.b16 %v162
  %v863 = vunpack.c.l.b16 %v163
  %v864 = vunpack.c.h.b16 %v163
  %v865 = vunpack.c.l.b16 %v164
  %v866 = vunpack.c.h.b16 %v164
  %v867 = vunpack.c.l.b16 %v165
  %v868 = vunpack.c.h.b16 %v165
  %v869 = vunpack.c.l.b16 %v166
  %v870 = vunpack.c.h.b16 %v166
  %v871 = vunpack.c.l.b16 %v167
  %v872 = vunpack.c.h.b16 %v167
  %v873 = vunpack.c.l.b16 %v168
  %v874 = vunpack.c.h.b16 %v168
  %v875 = vunpack.c.l.b16 %v169
  %v876 = vunpack.c.h.b16 %v169
  %v877 = vunpack.c.l.b16 %v170
  %v878 = vunpack.c.h.b16 %v170
  %v879 = vunpack.c.l.b16 %v171
  %v880 = vunpack.c.h.b16 %v171
  %v881 = vunpack.c.l.b16 %v172
  %v882 = vunpack.c.h.b16 %v172
  %v883 = vunpack.c.l.b16 %v173
  %v884 = vunpack.c.h.b16 %v173
  %v885 = vunpack.c.l.b16 %v174
  %v886 = vunpack.c.h.b16 %v174
  %v887 = vunpack.c.l.b16 %v175
  %v888 = vunpack.c.h.b16 %v175
  %v889 = vunpack.c.l.b16 %v176
  %v890 = vunpack.c.h.b16 %v176
  %v891 = vunpack.c.l.b16 %v177
  %v892 = vunpack.c.h.b16 %v177
  %v893 = vunpack.c.l.b16 %v178
  %v894 = vunpack.c.h.b16 %v178
  %v895 = vunpack.c.l.b16 %v179
  %v896 = vunpack.c.h.b16 %v179
  %v897 = vunpack.c.l.b16 %v180
  %v898 = vunpack.c.h.b16 %v180
  %v899 = vunpack.c.l.b16 %v181
  %v900 = vunpack.c.h.b16 %v181
  %v901 = vunpack.c.l.b16 %v182
  %v902 = vunpack.c.h.b16 %v182
  %v903 = vunpack.c.l.b16 %v183
  %v904 = vunpack.c.h.b16 %v183
  %v905 = vunpack.c.l.b16 %v184
  %v906 = vunpack.c.h.b16 %v184
  %v907 = vunpack.c.l.b16 %v185
  %v908 = vunpack.c.h.b16 %v185
  %v909 = vunpack.c.l.b16 %v186
  %v910 = vunpack.c.h.b16 %v186
  %v911 = vunpack.c.l.b16 %v187
  %v912 = vunpack.c.h.b16 %v187
  %v913 = vunpack.c.l.b16 %v188
  %v914 = vunpack.c.h.b16 %v188
  %v915 = vunpack.c.l.b16 %v189
  %v916 = vunpack.c.h.b16 %v189
  %v917 = vunpack.c.l.b16 %v190
  %v918 = vunpack.c.h.b16 %v190
  %v919 = vunpack.c.l.b16 %v191
  %v920 = vunpack.c.h.b16 %v191
  %v921 = vunpack.c.l.b16 %v192
  %v922 = vunpack.c.h.b16 %v192
  %v923 = vunpack.c.l.b16 %v193
  %v924 = vunpack.c.h.b16 %v193
  %v925 = vunpack.c.l.b16 %v194
  %v926 = vunpack.c.h.b16 %v194
  %v927 = vunpack.c.l.b16 %v195
  %v928 = vunpack.c.h.b16 %v195
  %v929 = vunpack.c.l.b16 %v196
  %v930 = vunpack.c.h.b16 %v196
  %v931 = vunpack.c.l.b16 %v197
  %v932 = vunpack.c.h.b16 %v197
  %v933 = vunpack.c.l.b16 %v198
  %v934 = vunpack.c.h.b16 %v198
  %v935 = vunpack.c.l.b16 %v199
  %v936 = vunpack.c.h.b16 %v199
  %v937 = vunpack.c.l.b16 %v200
  %v938 = vunpack.c.h.b16 %v200
  %v939 = vunpack.c.l.b16 %v201
  %v940 = vunpack.c.h.b16 %v201
  %v941 = vunpack.c.l.b16 %v202
  %v942 = vunpack.c.h.b16 %v202
  %v943 = vunpack.c.l.b16 %v203
  %v944 = vunpack.c.h.b16 %v203
  %v945 = vunpack.c.l.b16 %v204
  %v946 = vunpack.c.h.b16 %v204
  %v947 = vunpack.c.l.b16 %v205
  %v948 = vunpack.c.h.b16 %v205
  %v949 = vunpack.c.l.b16 %v206
  %v950 = vunpack.c.h.b16 %v206
  %v951 = vunpack.c.l.b16 %v207
  %v952 = vunpack.c.h.b16 %v207
  %v953 = vunpack.c.l.b16 %v208
  %v954 = vunpack.c.h.b16 %v208
  %v955 = vunpack.c.l.b16 %v209
  %v956 = vunpack.c.h.b16 %v209
  %v957 = vunpack.c.l.b16 %v210
  %v958 = vunpack.c.h.b16 %v210
  %v959 = vunpack.c.l.b16 %v211
  %v960 = vunpack.c.h.b16 %v211
  %v961 = vunpack.c.l.b16 %v212
  %v962 = vunpack.c.h.b16 %v212
  %v963 = vunpack.c.l.b16 %v213
  %v964 = vunpack.c.h.b16 %v213
  %v965 = vunpack.c.l.b16 %v214
  %v966 = vunpack.c.h.b16 %v214
  %v967 = vunpack.c.l.b16 %v215
  %v968 = vunpack.c.h.b16 %v215
  %v969 = vunpack.c.l.b16 %v216
  %v970 = vunpack.c.h.b16 %v216
  %v971 = vunpack.c.l.b16 %v217
  %v972 = vunpack.c.h.b16 %v217
  %v973 = vunpack.c.l.b16 %v218
  %v974 = vunpack.c.h.b16 %v218
  %v975 = vunpack.c.l.b16 %v219
  %v976 = vunpack.c.h.b16 %v219
  %v977 = vunpack.c.l.b16 %v220
  %v978 = vunpack.c.h.b16 %v220
  %v979 = vunpack.c.l.b16 %v221
  %v980 = vunpack.c.h.b16 %v221
  %v981 = vunpack.c.l.b16 %v222
  %v982 = vunpack.c.h.b16 %v222
  %v983 = vunpack.c.l.b16 %v223
  %v984 = vunpack.c.h.b16 %v223
  %v985 = vunpack.c.l.b16 %v224
  %v986 = vunpack.c.h.b16 %v224
  %v987 = vunpack.c.l.b16 %v225
  %v988 = vunpack.c.h.b16 %v225
  %v989 = vunpack.c.l.b16 %v226
  %v990 = vunpack.c.h.b16 %v226
  %v991 = vunpack.c.l.b16 %v227
  %v992 = vunpack.c.h.b16 %v227
  %v993 = vunpack.c.l.b16 %v228
  %v994 = vunpack.c.h.b16 %v228
  %v995 = vunpack.c.l.b16 %v229
  %v996 = vunpack.c.h.b16 %v229
  %v997 = vunpack.c.l.b16 %v230
  %v998 = vunpack.c.h.b16 %v230
  %v999 = vunpack.c.l.b16 %v231
  %v1000 = vunpack.c.h.b16 %v231
  %v1001 = vunpack.c.l.b16 %v232
  %v1002 = vunpack.c.h.b16 %v232
  %v1003 = vunpack.c.l.b16 %v233
  %v1004 = vunpack.c.h.b16 %v233
  %v1005 = vunpack.c.l.b16 %v234
  %v1006 = vunpack.c.h.b16 %v234
  %v1007 = vunpack.c.l.b16 %v235
  %v1008 = vunpack.c.h.b16 %v235
  %v1009 = vunpack.c.l.b16 %v236
  %v1010 = vunpack.c.h.b16 %v236
  %v1011 = vunpack.c.l.b16 %v237
  %v1012 = vunpack.c.h.b16 %v237
  %v1013 = vunpack.c.l.b16 %v238
  %v1014 = vunpack.c.h.b16 %v238
  %v1015 = vunpack.c.l.b16 %v239
  %v1016 = vunpack.c.h.b16 %v239
  %v1017 = vunpack.c.l.b16 %v240
  %v1018 = vunpack.c.h.b16 %v240
  %v1019 = vunpack.c.l.b16 %v241
  %v1020 = vunpack.c.h.b16 %v241
  %v1021 = vunpack.c.l.b16 %v242
  %v1022 = vunpack.c.h.b16 %v242
  %v1023 = vunpack.c.l.b16 %v243
  %v1024 = vunpack.c.h.b16 %v243
  %v1025 = vunpack.c.l.b16 %v244
  %v1026 = vunpack.c.h.b16 %v244
  %v1027 = vunpack.c.l.b16 %v245
  %v1028 = vunpack.c.h.b16 %v245
  %v1029 = vunpack.c.l.b16 %v246
  %v1030 = vunpack.c.h.b16 %v246
  %v1031 = vunpack.c.l.b16 %v247
  %v1032 = vunpack.c.h.b16 %v247
  %v1033 = vunpack.c.l.b16 %v248
  %v1034 = vunpack.c.h.b16 %v248
  %v1035 = vunpack.c.l.b16 %v249
  %v1036 = vunpack.c.h.b16 %v249
  %v1037 = vunpack.c.l.b16 %v250
  %v1038 = vunpack.c.h.b16 %v250
  %v1039 = vunpack.c.l.b16 %v251
  %v1040 = vunpack.c.h.b16 %v251
  %v1041 = vunpack.c.l.b16 %v252
  %v1042 = vunpack.c.h.b16 %v252
  %v1043 = vunpack.c.l.b16 %v253
  %v1044 = vunpack.c.h.b16 %v253
  %v1045 = vunpack.c.l.b16 %v254
  %v1046 = vunpack.c.h.b16 %v254
  %v1047 = vunpack.c.l.b16 %v255
  %v1048 = vunpack.c.h.b16 %v255
  %v1049 = vunpack.c.l.b16 %v256
  %v1050 = vunpack.c.h.b16 %v256
  %v1051 = vunpack.c.l.b16 %v257
  %v1052 = vunpack.c.h.b16 %v257
  %v1053 = vunpack.c.l.b16 %v258
  %v1054 = vunpack.c.h.b16 %v258
  %v1055 = vunpack.c.l.b16 %v259
  %v1056 = vunpack.c.h.b16 %v259
  %v1057 = vunpack.c.l.b16 %v260
  %v1058 = vunpack.c.h.b16 %v260
  %v1059 = vunpack.c.l.b16 %v261
  %v1060 = vunpack.c.h.b16 %v261
  %v1061 = vunpack.c.l.b16 %v262
  %v1062 = vunpack.c.h.b16 %v262
  %v1063 = vunpack.c.l.b16 %v263
  %v1064 = vunpack.c.h.b16 %v263
  %v1065 = vunpack.c.l.b16 %v264
  %v1066 = vunpack.c.h.b16 %v264
  %v1067 = vunpack.c.l.b16 %v265
  %v1068 = vunpack.c.h.b16 %v265
  %v1069 = vunpack.c.l.b16 %v266
  %v1070 = vunpack.c.h.b16 %v266
  %v1071 = vunpack.c.l.b16 %v267
  %v1072 = vunpack.c.h.b16 %v267
  %v1073 = vunpack.c.l.b16 %v268
  %v1074 = vunpack.c.h.b16 %v268
  %v1075 = vunpack.c.l.b16 %v269
  %v1076 = vunpack.c.h.b16 %v269
  %v1077 = vunpack.c.l.b16 %v270
  %v1078 = vunpack.c.h.b16 %v270
  %v1079 = vunpack.c.l.b16 %v271
  %v1080 = vunpack.c.h.b16 %v271
  %v1081 = vunpack.c.l.b16 %v272
  %v1082 = vunpack.c.h.b16 %v272
  %v1083 = vunpack.c.l.b16 %v273
  %v1084 = vunpack.c.h.b16 %v273
  %v1085 = vunpack.c.l.b16 %v274
  %v1086 = vunpack.c.h.b16 %v274
  %v1087 = vunpack.c.l.b16 %v275
  %v1088 = vunpack.c.h.b16 %v275
  %v1089 = vunpack.c.l.b16 %v276
  %v1090 = vunpack.c.h.b16 %v276
  %v1091 = vunpack.c.l.b16 %v277
  %v1092 = vunpack.c.h.b16 %v277
  %v1093 = vunpack.c.l.b16 %v278
  %v1094 = vunpack.c.h.b16 %v278
  %v1095 = vunpack.c.l.b16 %v279
  %v1096 = vunpack.c.h.b16 %v279
  %v1097 = vunpack.c.l.b16 %v280
  %v1098 = vunpack.c.h.b16 %v280
  %v1099 = vunpack.c.l.b16 %v281
  %v1100 = vunpack.c.h.b16 %v281
  %v1101 = vunpack.c.l.b16 %v282
  %v1102 = vunpack.c.h.b16 %v282
  %v1103 = vunpack.c.l.b16 %v283
  %v1104 = vunpack.c.h.b16 %v283
  %v1105 = vunpack.c.l.b16 %v284
  %v1106 = vunpack.c.h.b16 %v284
  %v1107 = vunpack.c.l.b16 %v285
  %v1108 = vunpack.c.h.b16 %v285
  %v1109 = vunpack.c.l.b16 %v286
  %v1110 = vunpack.c.h.b16 %v286
  %v1111 = vpack.c.b16 %v601, %v599
  %v1112 = vpack.c.b16 %v602, %v600
  %v1113 = vpack.c.b16 %v605, %v603
  %v1114 = vpack.c.b16 %v606, %v604
  %v1115 = vpack.c.b16 %v609, %v607
  %v1116 = vpack.c.b16 %v610, %v608
  %v1117 = vpack.c.b16 %v613, %v611
  %v1118 = vpack.c.b16 %v614, %v612
  %v1119 = vpack.c.b16 %v617, %v615
  %v1120 = vpack.c.b16 %v618, %v616
  %v1121 = vpack.c.b16 %v621, %v619
  %v1122 = vpack.c.b16 %v622, %v620
  %v1123 = vpack.c.b16 %v625, %v623
  %v1124 = vpack.c.b16 %v626, %v624
  %v1125 = vpack.c.b16 %v629, %v627
  %v1126 = vpack.c.b16 %v630, %v628
  %v1127 = vpack.c.b16 %v633, %v631
  %v1128 = vpack.c.b16 %v634, %v632
  %v1129 = vpack.c.b16 %v637, %v635
  %v1130 = vpack.c.b16 %v638, %v636
  %v1131 = vpack.c.b16 %v641, %v639
  %v1132 = vpack.c.b16 %v642, %v640
  %v1133 = vpack.c.b16 %v645, %v643
  %v1134 = vpack.c.b16 %v646, %v644
  %v1135 = vpack.c.b16 %v649, %v647
  %v1136 = vpack.c.b16 %v650, %v648
  %v1137 = vpack.c.b16 %v653, %v651
  %v1138 = vpack.c.b16 %v654, %v652
  %v1139 = vpack.c.b16 %v657, %v655
  %v1140 = vpack.c.b16 %v658, %v656
  %v1141 = vpack.c.b16 %v661, %v659
  %v1142 = vpack.c.b16 %v662, %v660
  %v1143 = vpack.c.b16 %v665, %v663
  %v1144 = vpack.c.b16 %v666, %v664
  %v1145 = vpack.c.b16 %v669, %v667
  %v1146 = vpack.c.b16 %v670, %v668
  %v1147 = vpack.c.b16 %v673, %v671
  %v1148 = vpack.c.b16 %v674, %v672
  %v1149 = vpack.c.b16 %v677, %v675
  %v1150 = vpack.c.b16 %v678, %v676
  %v1151 = vpack.c.b16 %v681, %v679
  %v1152 = vpack.c.b16 %v682, %v680
  %v1153 = vpack.c.b16 %v685, %v683
  %v1154 = vpack.c.b16 %v686, %v684
  %v1155 = vpack.c.b16 %v689, %v687
  %v1156 = vpack.c.b16 %v690, %v688
  %v1157 = vpack.c.b16 %v693, %v691
  %v1158 = vpack.c.b16 %v694, %v692
  %v1159 = vpack.c.b16 %v697, %v695
  %v1160 = vpack.c.b16 %v698, %v696
  %v1161 = vpack.c.b16 %v701, %v699
  %v1162 = vpack.c.b16 %v702, %v700
  %v1163 = vpack.c.b16 %v705, %v703
  %v1164 = vpack.c.b16 %v706, %v704
  %v1165 = vpack.c.b16 %v709, %v707
  %v1166 = vpack.c.b16 %v710, %v708
  %v1167 = vpack.c.b16 %v713, %v711
  %v1168 = vpack.c.b16 %v714, %v712
  %v1169 = vpack.c.b16 %v717, %v715
  %v1170 = vpack.c.b16 %v718, %v716
  %v1171 = vpack.c.b16 %v721, %v719
  %v1172 = vpack.c.b16 %v722, %v720
  %v1173 = vpack.c.b16 %v725, %v723
  %v1174 = vpack.c.b16 %v726, %v724
  %v1175 = vpack.c.b16 %v729, %v727
  %v1176 = vpack.c.b16 %v730, %v728
  %v1177 = vpack.c.b16 %v733, %v731
  %v1178 = vpack.c.b16 %v734, %v732
  %v1179 = vpack.c.b16 %v737, %v735
  %v1180 = vpack.c.b16 %v738, %v736
  %v1181 = vpack.c.b16 %v741, %v739
  %v1182 = vpack.c.b16 %v742, %v740
  %v1183 = vpack.c.b16 %v745, %v743
  %v1184 = vpack.c.b16 %v746, %v744
  %v1185 = vpack.c.b16 %v749, %v747
  %v1186 = vpack.c.b16 %v750, %v748
  %v1187 = vpack.c.b16 %v753, %v751
  %v1188 = vpack.c.b16 %v754, %v752
  %v1189 = vpack.c.b16 %v757, %v755
  %v1190 = vpack.c.b16 %v758, %v756
  %v1191 = vpack.c.b16 %v761, %v759
  %v1192 = vpack.c.b16 %v762, %v760
  %v1193 = vpack.c.b16 %v765, %v763
  %v1194 = vpack.c.b16 %v766, %v764
  %v1195 = vpack.c.b16 %v769, %v767
  %v1196 = vpack.c.b16 %v770, %v768
  %v1197 = vpack.c.b16 %v773, %v771
  %v1198 = vpack.c.b16 %v774, %v772
  %v1199 = vpack.c.b16 %v777, %v775
  %v1200 = vpack.c.b16 %v778, %v776
  %v1201 = vpack.c.b16 %v781, %v779
  %v1202 = vpack.c.b16 %v782, %v780
  %v1203 = vpack.c.b16 %v785, %v783
  %v1204 = vpack.c.b16 %v786, %v784
  %v1205 = vpack.c.b16 %v789, %v787
  %v1206 = vpack.c.b16 %v790, %v788
  %v1207 = vpack.c.b16 %v793, %v791
  %v1208 = vpack.c.b16 %v794, %v792
  %v1209 = vpack.c.b16 %v797, %v795
  %v1210 = vpack.c.b16 %v798, %v796
  %v1211 = vpack.c.b16 %v801, %v799
  %v1212 = vpack.c.b16 %v802, %v800
  %v1213 = vpack.c.b16 %v805, %v803
  %v1214 = vpack.c.b16 %v806, %v804
  %v1215 = vpack.c.b16 %v809, %v807
  %v1216 = vpack.c.b16 %v810, %v808
  %v1217 = vpack.c.b16 %v813, %v811
  %v1218 = vpack.c.b16 %v814, %v812
  %v1219 = vpack.c.b16 %v817, %v815
  %v1220 = vpack.c.b16 %v818, %v816
  %v1221 = vpack.c.b16 %v821, %v819
  %v1222 = vpack.c.b16 %v822, %v820
  %v1223 = vpack.c.b16 %v825, %v823
  %v1224 = vpack.c.b16 %v826, %v824
  %v1225 = vpack.c.b16 %v829, %v827
  %v1226 = vpack.c.b16 %v830, %v828
  %v1227 = vpack.c.b16 %v833, %v831
  %v1228 = vpack.c.b16 %v834, %v832
  %v1229 = vpack.c.b16 %v837, %v835
  %v1230 = vpack.c.b16 %v838, %v836
  %v1231 = vpack.c.b16 %v841, %v839
  %v1232 = vpack.c.b16 %v842, %v840
  %v1233 = vpack.c.b16 %v845, %v843
  %v1234 = vpack.c.b16 %v846, %v844
  %v1235 = vpack.c.b16 %v849, %v847
  %v1236 = vpack.c.b16 %v850, %v848
  %v1237 = vpack.c.b16 %v853, %v851
  %v1238 = vpack.c.b16 %v854, %v852
  %v1239 = vpack.c.b16 %v857, %v855
  %v1240 = vpack.c.b16 %v858, %v856
  %v1241 = vpack.c.b16 %v861, %v859
  %v1242 = vpack.c.b16 %v862, %v860
  %v1243 = vpack.c.b16 %v865, %v863
  %v1244 = vpack.c.b16 %v866, %v864
  %v1245 = vpack.c.b16 %v869, %v867
  %v1246 = vpack.c.b16 %v870, %v868
  %v1247 = vpack.c.b16 %v873, %v871
  %v1248 = vpack.c.b16 %v874, %v872
  %v1249 = vpack.c.b16 %v877, %v875
  %v1250 = vpack.c.b16 %v878, %v876
  %v1251 = vpack.c.b16 %v881, %v879
  %v1252 = vpack.c.b16 %v882, %v880
  %v1253 = vpack.c.b16 %v885, %v883
  %v1254 = vpack.c.b16 %v886, %v884
  %v1255 = vpack.c.b16 %v889, %v887
  %v1256 = vpack.c.b16 %v890, %v888
  %v1257 = vpack.c.b16 %v893, %v891
  %v1258 = vpack.c.b16 %v894, %v892
  %v1259 = vpack.c.b16 %v897, %v895
  %v1260 = vpack.c.b16 %v898, %v896
  %v1261 = vpack.c.b16 %v901, %v899
  %v1262 = vpack.c.b16 %v902, %v900
  %v1263 = vpack.c.b16 %v905, %v903
  %v1264 = vpack.c.b16 %v906, %v904
  %v1265 = vpack.c.b16 %v909, %v907
  %v1266 = vpack.c.b16 %v910, %v908
  %v1267 = vpack.c.b16 %v913, %v911
  %v1268 = vpack.c.b16 %v914, %v912
  %v1269 = vpack.c.b16 %v917, %v915
  %v1270 = vpack.c.b16 %v918, %v916
  %v1271 = vpack.c.b16 %v921, %v919
  %v1272 = vpack.c.b16 %v922, %v920
  %v1273 = vpack.c.b16 %v925, %v923
  %v1274 = vpack.c.b16 %v926, %v924
  %v1275 = vpack.c.b16 %v929, %v927
  %v1276 = vpack.c.b16 %v930, %v928
  %v1277 = vpack.c.b16 %v933, %v931
  %v1278 = vpack.c.b16 %v934, %v932
  %v1279 = vpack.c.b16 %v937, %v935
  %v1280 = vpack.c.b16 %v938, %v936
  %v1281 = vpack.c.b16 %v941, %v939
  %v1282 = vpack.c.b16 %v942, %v940
  %v1283 = vpack.c.b16 %v945, %v943
  %v1284 = vpack.c.b16 %v946, %v944
  %v1285 = vpack.c.b16 %v949, %v947
  %v1286 = vpack.c.b16 %v950, %v948
  %v1287 = vpack.c.b16 %v953, %v951
  %v1288 = vpack.c.b16 %v954, %v952
  %v1289 = vpack.c.b16 %v957, %v955
  %v1290 = vpack.c.b16 %v958, %v956
  %v1291 = vpack.c.b16 %v961, %v959
  %v1292 = vpack.c.b16 %v962, %v960
  %v1293 = vpack.c.b16 %v965, %v963
  %v1294 = vpack.c.b16 %v966, %v964
  %v1295 = vpack.c.b16 %v969, %v967
  %v1296 = vpack.c.b16 %v970, %v968
  %v1297 = vpack.c.b16 %v973, %v971
  %v1298 = vpack.c.b16 %v974, %v972
  %v1299 = vpack.c.b16 %v977, %v975
  %v1300 = vpack.c.b16 %v978, %v976
  %v1301 = vpack.c.b16 %v981, %v979
  %v1302 = vpack.c.b16 %v982, %v980
  %v1303 = vpack.c.b16 %v985, %v983
  %v1304 = vpack.c.b16 %v986, %v984
  %v1305 = vpack.c.b16 %v989, %v987
  %v1306 = vpack.c.b16 %v990, %v988
  %v1307 = vpack.c.b16 %v993, %v991
  %v1308 = vpack.c.b16 %v994, %v992
  %v1309 = vpack.c.b16 %v997, %v995
  %v1310 = vpack.c.b16 %v998, %v996
  %v1311 = vpack.c.b16 %v1001, %v999
  %v1312 = vpack.c.b16 %v1002, %v1000
  %v1313 = vpack.c.b16 %v1005, %v1003
  %v1314 = vpack.c.b16 %v1006, %v1004
  %v1315 = vpack.c.b16 %v1009, %v1007
  %v1316 = vpack.c.b16 %v1010, %v1008
  %v1317 = vpack.c.b16 %v1013, %v1011
  %v1318 = vpack.c.b16 %v1014, %v1012
  %v1319 = vpack.c.b16 %v1017, %v1015
  %v1320 = vpack.c.b16 %v1018, %v1016
  %v1321 = vpack.c.b16 %v1021, %v1019
  %v1322 = vpack.c.b16 %v1022, %v1020
  %v1323 = vpack.c.b16 %v1025, %v1023
  %v1324 = vpack.c.b16 %v1026, %v1024
  %v1325 = vpack.c.b16 %v1029, %v1027
  %v1326 = vpack.c.b16 %v1030, %v1028
  %v1327 = vpack.c.b16 %v1033, %v1031
  %v1328 = vpack.c.b16 %v1034, %v1032
  %v1329 = vpack.c.b16 %v1037, %v1035
  %v1330 = vpack.c.b16 %v1038, %v1036
  %v1331 = vpack.c.b16 %v1041, %v1039
  %v1332 = vpack.c.b16 %v1042, %v1040
  %v1333 = vpack.c.b16 %v1045, %v1043
  %v1334 = vpack.c.b16 %v1046, %v1044
  %v1335 = vpack.c.b16 %v1049, %v1047
  %v1336 = vpack.c.b16 %v1050, %v1048
  %v1337 = vpack.c.b16 %v1053, %v1051
  %v1338 = vpack.c.b16 %v1054, %v1052
  %v1339 = vpack.c.b16 %v1057, %v1055
  %v1340 = vpack.c.b16 %v1058, %v1056
  %v1341 = vpack.c.b16 %v1061, %v1059
  %v1342 = vpack.c.b16 %v1062, %v1060
  %v1343 = vpack.c.b16 %v1065, %v1063
  %v1344 = vpack.c.b16 %v1066, %v1064
  %v1345 = vpack.c.b16 %v1069, %v1067
  %v1346 = vpack.c.b16 %v1070, %v1068
  %v1347 = vpack.c.b16 %v1073, %v1071
  %v1348 = vpack.c.b16 %v1074, %v1072
  %v1349 = vpack.c.b16 %v1077, %v1075
  %v1350 = vpack.c.b16 %v1078, %v1076
  %v1351 = vpack.c.b16 %v1081, %v1079
  %v1352 = vpack.c.b16 %v1082, %v1080
  %v1353 = vpack.c.b16 %v1085, %v1083
  %v1354 = vpack.c.b16 %v1086, %v1084
  %v1355 = vpack.c.b16 %v1089, %v1087
  %v1356 = vpack.c.b16 %v1090, %v1088
  %v1357 = vpack.c.b16 %v1093, %v1091
  %v1358 = vpack.c.b16 %v1094, %v1092
  %v1359 = vpack.c.b16 %v1097, %v1095
  %v1360 = vpack.c.b16 %v1098, %v1096
  %v1361 = vpack.c.b16 %v1101, %v1099
  %v1362 = vpack.c.b16 %v1102, %v1100
  %v1363 = vpack.c.b16 %v1105, %v1103
  %v1364 = vpack.c.b16 %v1106, %v1104
  %v1365 = vpack.c.b16 %v1109, %v1107
  %v1366 = vpack.c.b16 %v1110, %v1108
  %1623 = vmatprep.subr.bf16.mxu0 %v1112
  %1624 = vmatpush1.bf16.msra.mxu0 %v1111
  %1625 = vmatprep.subr.bf16.mxu0 %v1114
  %1626 = vmatpush1.bf16.msra.mxu0 %v1113
  %1627 = vmatprep.subr.bf16.mxu0 %v1116
  %1628 = vmatpush1.bf16.msra.mxu0 %v1115
  %1629 = vmatprep.subr.bf16.mxu0 %v1118
  %1630 = vmatpush1.bf16.msra.mxu0 %v1117
  %1631 = vmatprep.subr.bf16.mxu0 %v1120
  %1632 = vmatpush1.bf16.msra.mxu0 %v1119
  %1633 = vmatprep.subr.bf16.mxu0 %v1122
  %1634 = vmatpush1.bf16.msra.mxu0 %v1121
  %1635 = vmatprep.subr.bf16.mxu0 %v1124
  %1636 = vmatpush1.bf16.msra.mxu0 %v1123
  %1637 = vmatprep.subr.bf16.mxu0 %v1126
  %1638 = vmatpush1.bf16.msra.mxu0 %v1125
  %1639 = vmatprep.subr.bf16.mxu0 %v1128
  %1640 = vmatpush1.bf16.msra.mxu0 %v1127
  %1641 = vmatprep.subr.bf16.mxu0 %v1130
  %1642 = vmatpush1.bf16.msra.mxu0 %v1129
  %1643 = vmatprep.subr.bf16.mxu0 %v1132
  %1644 = vmatpush1.bf16.msra.mxu0 %v1131
  %1645 = vmatprep.subr.bf16.mxu0 %v1134
  %1646 = vmatpush1.bf16.msra.mxu0 %v1133
  %1647 = vmatprep.subr.bf16.mxu0 %v1136
  %1648 = vmatpush1.bf16.msra.mxu0 %v1135
  %1649 = vmatprep.subr.bf16.mxu0 %v1138
  %1650 = vmatpush1.bf16.msra.mxu0 %v1137
  %1651 = vmatprep.subr.bf16.mxu0 %v1140
  %1652 = vmatpush1.bf16.msra.mxu0 %v1139
  %1653 = vmatprep.subr.bf16.mxu0 %v1142
  %1654 = vmatpush1.bf16.msra.mxu0 %v1141
  %1655 = vmatprep.mubr.bf16.mxu0 %v312
  %1656 = vmatmul.mubr.bf16.gmra.mrb[0].mxu0 %v311
  %v1657 = vpop.f32.mrb[0].mxu0
  %v1658 = vadd.f32 0.0, %v1657
  %v1659 = vpop.f32.mrb[0].mxu0
  %v1660 = vadd.f32 0.0, %v1659
  %v1661 = vpop.f32.mrb[0].mxu0
  %v1662 = vpop.f32.mrb[0].mxu0
  %1663 = vdwg.mxu0
  %1664 = vmatprep.subr.bf16.mxu0 %v1144
  %1665 = vmatpush1.bf16.msra.mxu0 %v1143
  %1666 = vmatprep.subr.bf16.mxu0 %v1146
  %1667 = vmatpush1.bf16.msra.mxu0 %v1145
  %1668 = vmatprep.subr.bf16.mxu0 %v1148
  %1669 = vmatpush1.bf16.msra.mxu0 %v1147
  %1670 = vmatprep.subr.bf16.mxu0 %v1150
  %1671 = vmatpush1.bf16.msra.mxu0 %v1149
  %1672 = vmatprep.subr.bf16.mxu0 %v1152
  %1673 = vmatpush1.bf16.msra.mxu0 %v1151
  %1674 = vmatprep.subr.bf16.mxu0 %v1154
  %1675 = vmatpush1.bf16.msra.mxu0 %v1153
  %1676 = vmatprep.subr.bf16.mxu0 %v1156
  %1677 = vmatpush1.bf16.msra.mxu0 %v1155
  %1678 = vmatprep.subr.bf16.mxu0 %v1158
  %1679 = vmatpush1.bf16.msra.mxu0 %v1157
  %1680 = vmatprep.subr.bf16.mxu0 %v1160
  %1681 = vmatpush1.bf16.msra.mxu0 %v1159
  %1682 = vmatprep.subr.bf16.mxu0 %v1162
  %1683 = vmatpush1.bf16.msra.mxu0 %v1161
  %1684 = vmatprep.subr.bf16.mxu0 %v1164
  %1685 = vmatpush1.bf16.msra.mxu0 %v1163
  %1686 = vmatprep.subr.bf16.mxu0 %v1166
  %1687 = vmatpush1.bf16.msra.mxu0 %v1165
  %1688 = vmatprep.subr.bf16.mxu0 %v1168
  %1689 = vmatpush1.bf16.msra.mxu0 %v1167
  %1690 = vmatprep.subr.bf16.mxu0 %v1170
  %1691 = vmatpush1.bf16.msra.mxu0 %v1169
  %1692 = vmatprep.subr.bf16.mxu0 %v1172
  %1693 = vmatpush1.bf16.msra.mxu0 %v1171
  %1694 = vmatprep.subr.bf16.mxu0 %v1174
  %1695 = vmatpush1.bf16.msra.mxu0 %v1173
  %1696 = vmatprep.mubr.bf16.mxu0 %v314
  %1697 = vmatmul.mubr.bf16.gmra.mrb[0].mxu0 %v313
  %v1698 = vpop.f32.mrb[0].mxu0
  %v1699 = vadd.f32 %v1658, %v1698
  %v1700 = vpop.f32.mrb[0].mxu0
  %v1701 = vadd.f32 %v1660, %v1700
  %v1702 = vpop.f32.mrb[0].mxu0
  %v1703 = vpop.f32.mrb[0].mxu0
  %1704 = vdwg.mxu0
  %1705 = vmatprep.subr.bf16.mxu0 %v1176
  %1706 = vmatpush1.bf16.msra.mxu0 %v1175
  %1707 = vmatprep.subr.bf16.mxu0 %v1178
  %1708 = vmatpush1.bf16.msra.mxu0 %v1177
  %1709 = vmatprep.subr.bf16.mxu0 %v1180
  %1710 = vmatpush1.bf16.msra.mxu0 %v1179
  %1711 = vmatprep.subr.bf16.mxu0 %v1182
  %1712 = vmatpush1.bf16.msra.mxu0 %v1181
  %1713 = vmatprep.subr.bf16.mxu0 %v1184
  %1714 = vmatpush1.bf16.msra.mxu0 %v1183
  %1715 = vmatprep.subr.bf16.mxu0 %v1186
  %1716 = vmatpush1.bf16.msra.mxu0 %v1185
  %1717 = vmatprep.subr.bf16.mxu0 %v1188
  %1718 = vmatpush1.bf16.msra.mxu0 %v1187
  %1719 = vmatprep.subr.bf16.mxu0 %v1190
  %1720 = vmatpush1.bf16.msra.mxu0 %v1189
  %1721 = vmatprep.subr.bf16.mxu0 %v1192
  %1722 = vmatpush1.bf16.msra.mxu0 %v1191
  %1723 = vmatprep.subr.bf16.mxu0 %v1194
  %1724 = vmatpush1.bf16.msra.mxu0 %v1193
  %1725 = vmatprep.subr.bf16.mxu0 %v1196
  %1726 = vmatpush1.bf16.msra.mxu0 %v1195
  %1727 = vmatprep.subr.bf16.mxu0 %v1198
  %1728 = vmatpush1.bf16.msra.mxu0 %v1197
  %1729 = vmatprep.subr.bf16.mxu0 %v1200
  %1730 = vmatpush1.bf16.msra.mxu0 %v1199
  %1731 = vmatprep.subr.bf16.mxu0 %v1202
  %1732 = vmatpush1.bf16.msra.mxu0 %v1201
  %1733 = vmatprep.subr.bf16.mxu0 %v1204
  %1734 = vmatpush1.bf16.msra.mxu0 %v1203
  %1735 = vmatprep.subr.bf16.mxu0 %v1206
  %1736 = vmatpush1.bf16.msra.mxu0 %v1205
  %1737 = vmatprep.mubr.bf16.mxu0 %v316
  %1738 = vmatmul.mubr.bf16.gmra.mrb[0].mxu0 %v315
  %v1739 = vpop.f32.mrb[0].mxu0
  %v1740 = vadd.f32 %v1699, %v1739
  %v1741 = vpop.f32.mrb[0].mxu0
  %v1742 = vadd.f32 %v1701, %v1741
  %v1743 = vpop.f32.mrb[0].mxu0
  %v1744 = vpop.f32.mrb[0].mxu0
  %1745 = vdwg.mxu0
  %1746 = vmatprep.subr.bf16.mxu0 %v1208
  %1747 = vmatpush1.bf16.msra.mxu0 %v1207
  %1748 = vmatprep.subr.bf16.mxu0 %v1210
  %1749 = vmatpush1.bf16.msra.mxu0 %v1209
  %1750 = vmatprep.subr.bf16.mxu0 %v1212
  %1751 = vmatpush1.bf16.msra.mxu0 %v1211
  %1752 = vmatprep.subr.bf16.mxu0 %v1214
  %1753 = vmatpush1.bf16.msra.mxu0 %v1213
  %1754 = vmatprep.subr.bf16.mxu0 %v1216
  %1755 = vmatpush1.bf16.msra.mxu0 %v1215
  %1756 = vmatprep.subr.bf16.mxu0 %v1218
  %1757 = vmatpush1.bf16.msra.mxu0 %v1217
  %1758 = vmatprep.subr.bf16.mxu0 %v1220
  %1759 = vmatpush1.bf16.msra.mxu0 %v1219
  %1760 = vmatprep.subr.bf16.mxu0 %v1222
  %1761 = vmatpush1.bf16.msra.mxu0 %v1221
  %1762 = vmatprep.subr.bf16.mxu0 %v1224
  %1763 = vmatpush1.bf16.msra.mxu0 %v1223
  %1764 = vmatprep.subr.bf16.mxu0 %v1226
  %1765 = vmatpush1.bf16.msra.mxu0 %v1225
  %1766 = vmatprep.subr.bf16.mxu0 %v1228
  %1767 = vmatpush1.bf16.msra.mxu0 %v1227
  %1768 = vmatprep.subr.bf16.mxu0 %v1230
  %1769 = vmatpush1.bf16.msra.mxu0 %v1229
  %1770 = vmatprep.subr.bf16.mxu0 %v1232
  %1771 = vmatpush1.bf16.msra.mxu0 %v1231
  %1772 = vmatprep.subr.bf16.mxu0 %v1234
  %1773 = vmatpush1.bf16.msra.mxu0 %v1233
  %1774 = vmatprep.subr.bf16.mxu0 %v1236
  %1775 = vmatpush1.bf16.msra.mxu0 %v1235
  %1776 = vmatprep.subr.bf16.mxu0 %v1238
  %1777 = vmatpush1.bf16.msra.mxu0 %v1237
  %1778 = vmatprep.mubr.bf16.mxu0 %v318
  %1779 = vmatmul.mubr.bf16.gmra.mrb[0].mxu0 %v317
  %v1780 = vpop.f32.mrb[0].mxu0
  %v1781 = vadd.f32 %v1740, %v1780
  %v1782 = vpop.f32.mrb[0].mxu0
  %v1783 = vadd.f32 %v1742, %v1782
  %v1784 = vpop.f32.mrb[0].mxu0
  %v1785 = vpop.f32.mrb[0].mxu0
  %1786 = vdwg.mxu0
  %1787 = vmatprep.subr.bf16.mxu0 %v1240
  %1788 = vmatpush1.bf16.msra.mxu0 %v1239
  %1789 = vmatprep.subr.bf16.mxu0 %v1242
  %1790 = vmatpush1.bf16.msra.mxu0 %v1241
  %1791 = vmatprep.subr.bf16.mxu0 %v1244
  %1792 = vmatpush1.bf16.msra.mxu0 %v1243
  %1793 = vmatprep.subr.bf16.mxu0 %v1246
  %1794 = vmatpush1.bf16.msra.mxu0 %v1245
  %1795 = vmatprep.subr.bf16.mxu0 %v1248
  %1796 = vmatpush1.bf16.msra.mxu0 %v1247
  %1797 = vmatprep.subr.bf16.mxu0 %v1250
  %1798 = vmatpush1.bf16.msra.mxu0 %v1249
  %1799 = vmatprep.subr.bf16.mxu0 %v1252
  %1800 = vmatpush1.bf16.msra.mxu0 %v1251
  %1801 = vmatprep.subr.bf16.mxu0 %v1254
  %1802 = vmatpush1.bf16.msra.mxu0 %v1253
  %1803 = vmatprep.subr.bf16.mxu0 %v1256
  %1804 = vmatpush1.bf16.msra.mxu0 %v1255
  %1805 = vmatprep.subr.bf16.mxu0 %v1258
  %1806 = vmatpush1.bf16.msra.mxu0 %v1257
  %1807 = vmatprep.subr.bf16.mxu0 %v1260
  %1808 = vmatpush1.bf16.msra.mxu0 %v1259
  %1809 = vmatprep.subr.bf16.mxu0 %v1262
  %1810 = vmatpush1.bf16.msra.mxu0 %v1261
  %1811 = vmatprep.subr.bf16.mxu0 %v1264
  %1812 = vmatpush1.bf16.msra.mxu0 %v1263
  %1813 = vmatprep.subr.bf16.mxu0 %v1266
  %1814 = vmatpush1.bf16.msra.mxu0 %v1265
  %1815 = vmatprep.subr.bf16.mxu0 %v1268
  %1816 = vmatpush1.bf16.msra.mxu0 %v1267
  %1817 = vmatprep.subr.bf16.mxu0 %v1270
  %1818 = vmatpush1.bf16.msra.mxu0 %v1269
  %1819 = vmatprep.mubr.bf16.mxu0 %v320
  %1820 = vmatmul.mubr.bf16.gmra.mrb[0].mxu0 %v319
  %v1821 = vpop.f32.mrb[0].mxu0
  %v1822 = vadd.f32 %v1781, %v1821
  %v1823 = vpop.f32.mrb[0].mxu0
  %v1824 = vadd.f32 %v1783, %v1823
  %v1825 = vpop.f32.mrb[0].mxu0
  %v1826 = vpop.f32.mrb[0].mxu0
  %1827 = vdwg.mxu0
  %1828 = vmatprep.subr.bf16.mxu0 %v1272
  %1829 = vmatpush1.bf16.msra.mxu0 %v1271
  %1830 = vmatprep.subr.bf16.mxu0 %v1274
  %1831 = vmatpush1.bf16.msra.mxu0 %v1273
  %1832 = vmatprep.subr.bf16.mxu0 %v1276
  %1833 = vmatpush1.bf16.msra.mxu0 %v1275
  %1834 = vmatprep.subr.bf16.mxu0 %v1278
  %1835 = vmatpush1.bf16.msra.mxu0 %v1277
  %1836 = vmatprep.subr.bf16.mxu0 %v1280
  %1837 = vmatpush1.bf16.msra.mxu0 %v1279
  %1838 = vmatprep.subr.bf16.mxu0 %v1282
  %1839 = vmatpush1.bf16.msra.mxu0 %v1281
  %1840 = vmatprep.subr.bf16.mxu0 %v1284
  %1841 = vmatpush1.bf16.msra.mxu0 %v1283
  %1842 = vmatprep.subr.bf16.mxu0 %v1286
  %1843 = vmatpush1.bf16.msra.mxu0 %v1285
  %1844 = vmatprep.subr.bf16.mxu0 %v1288
  %1845 = vmatpush1.bf16.msra.mxu0 %v1287
  %1846 = vmatprep.subr.bf16.mxu0 %v1290
  %1847 = vmatpush1.bf16.msra.mxu0 %v1289
  %1848 = vmatprep.subr.bf16.mxu0 %v1292
  %1849 = vmatpush1.bf16.msra.mxu0 %v1291
  %1850 = vmatprep.subr.bf16.mxu0 %v1294
  %1851 = vmatpush1.bf16.msra.mxu0 %v1293
  %1852 = vmatprep.subr.bf16.mxu0 %v1296
  %1853 = vmatpush1.bf16.msra.mxu0 %v1295
  %1854 = vmatprep.subr.bf16.mxu0 %v1298
  %1855 = vmatpush1.bf16.msra.mxu0 %v1297
  %1856 = vmatprep.subr.bf16.mxu0 %v1300
  %1857 = vmatpush1.bf16.msra.mxu0 %v1299
  %1858 = vmatprep.subr.bf16.mxu0 %v1302
  %1859 = vmatpush1.bf16.msra.mxu0 %v1301
  %1860 = vmatprep.mubr.bf16.mxu0 %v322
  %1861 = vmatmul.mubr.bf16.gmra.mrb[0].mxu0 %v321
  %v1862 = vpop.f32.mrb[0].mxu0
  %v1863 = vadd.f32 %v1822, %v1862
  %v1864 = vpop.f32.mrb[0].mxu0
  %v1865 = vadd.f32 %v1824, %v1864
  %v1866 = vpop.f32.mrb[0].mxu0
  %v1867 = vpop.f32.mrb[0].mxu0
  %1868 = vdwg.mxu0
  %1869 = vmatprep.subr.bf16.mxu0 %v1304
  %1870 = vmatpush1.bf16.msra.mxu0 %v1303
  %1871 = vmatprep.subr.bf16.mxu0 %v1306
  %1872 = vmatpush1.bf16.msra.mxu0 %v1305
  %1873 = vmatprep.subr.bf16.mxu0 %v1308
  %1874 = vmatpush1.bf16.msra.mxu0 %v1307
  %1875 = vmatprep.subr.bf16.mxu0 %v1310
  %1876 = vmatpush1.bf16.msra.mxu0 %v1309
  %1877 = vmatprep.subr.bf16.mxu0 %v1312
  %1878 = vmatpush1.bf16.msra.mxu0 %v1311
  %1879 = vmatprep.subr.bf16.mxu0 %v1314
  %1880 = vmatpush1.bf16.msra.mxu0 %v1313
  %1881 = vmatprep.subr.bf16.mxu0 %v1316
  %1882 = vmatpush1.bf16.msra.mxu0 %v1315
  %1883 = vmatprep.subr.bf16.mxu0 %v1318
  %1884 = vmatpush1.bf16.msra.mxu0 %v1317
  %1885 = vmatprep.subr.bf16.mxu0 %v1320
  %1886 = vmatpush1.bf16.msra.mxu0 %v1319
  %1887 = vmatprep.subr.bf16.mxu0 %v1322
  %1888 = vmatpush1.bf16.msra.mxu0 %v1321
  %1889 = vmatprep.subr.bf16.mxu0 %v1324
  %1890 = vmatpush1.bf16.msra.mxu0 %v1323
  %1891 = vmatprep.subr.bf16.mxu0 %v1326
  %1892 = vmatpush1.bf16.msra.mxu0 %v1325
  %1893 = vmatprep.subr.bf16.mxu0 %v1328
  %1894 = vmatpush1.bf16.msra.mxu0 %v1327
  %1895 = vmatprep.subr.bf16.mxu0 %v1330
  %1896 = vmatpush1.bf16.msra.mxu0 %v1329
  %1897 = vmatprep.subr.bf16.mxu0 %v1332
  %1898 = vmatpush1.bf16.msra.mxu0 %v1331
  %1899 = vmatprep.subr.bf16.mxu0 %v1334
  %1900 = vmatpush1.bf16.msra.mxu0 %v1333
  %1901 = vmatprep.mubr.bf16.mxu0 %v324
  %1902 = vmatmul.mubr.bf16.gmra.mrb[0].mxu0 %v323
  %v1903 = vpop.f32.mrb[0].mxu0
  %v1904 = vadd.f32 %v1863, %v1903
  %v1905 = vpop.f32.mrb[0].mxu0
  %v1906 = vadd.f32 %v1865, %v1905
  %v1907 = vpop.f32.mrb[0].mxu0
  %v1908 = vpop.f32.mrb[0].mxu0
  %1909 = vdwg.mxu0
  %1910 = vmatprep.subr.bf16.mxu0 %v1336
  %1911 = vmatpush1.bf16.msra.mxu0 %v1335
  %1912 = vmatprep.subr.bf16.mxu0 %v1338
  %1913 = vmatpush1.bf16.msra.mxu0 %v1337
  %1914 = vmatprep.subr.bf16.mxu0 %v1340
  %1915 = vmatpush1.bf16.msra.mxu0 %v1339
  %1916 = vmatprep.subr.bf16.mxu0 %v1342
  %1917 = vmatpush1.bf16.msra.mxu0 %v1341
  %1918 = vmatprep.subr.bf16.mxu0 %v1344
  %1919 = vmatpush1.bf16.msra.mxu0 %v1343
  %1920 = vmatprep.subr.bf16.mxu0 %v1346
  %1921 = vmatpush1.bf16.msra.mxu0 %v1345
  %1922 = vmatprep.subr.bf16.mxu0 %v1348
  %1923 = vmatpush1.bf16.msra.mxu0 %v1347
  %1924 = vmatprep.subr.bf16.mxu0 %v1350
  %1925 = vmatpush1.bf16.msra.mxu0 %v1349
  %1926 = vmatprep.subr.bf16.mxu0 %v1352
  %1927 = vmatpush1.bf16.msra.mxu0 %v1351
  %1928 = vmatprep.subr.bf16.mxu0 %v1354
  %1929 = vmatpush1.bf16.msra.mxu0 %v1353
  %1930 = vmatprep.subr.bf16.mxu0 %v1356
  %1931 = vmatpush1.bf16.msra.mxu0 %v1355
  %1932 = vmatprep.subr.bf16.mxu0 %v1358
  %1933 = vmatpush1.bf16.msra.mxu0 %v1357
  %1934 = vmatprep.subr.bf16.mxu0 %v1360
  %1935 = vmatpush1.bf16.msra.mxu0 %v1359
  %1936 = vmatprep.subr.bf16.mxu0 %v1362
  %1937 = vmatpush1.bf16.msra.mxu0 %v1361
  %1938 = vmatprep.subr.bf16.mxu0 %v1364
  %1939 = vmatpush1.bf16.msra.mxu0 %v1363
  %1940 = vmatprep.subr.bf16.mxu0 %v1366
  %1941 = vmatpush1.bf16.msra.mxu0 %v1365
  %1942 = vmatprep.mubr.bf16.mxu0 %v326
  %1943 = vmatmul.mubr.bf16.gmra.mrb[0].mxu0 %v325
  %v1944 = vpop.f32.mrb[0].mxu0
  %v1945 = vadd.f32 %v1904, %v1944
  %v1946 = vpop.f32.mrb[0].mxu0
  %v1947 = vadd.f32 %v1906, %v1946
  %v1948 = vpop.f32.mrb[0].mxu0
  %v1949 = vpop.f32.mrb[0].mxu0
  %1950 = vdwg.mxu0
  %v1951 = vld [vmem:[%s2] sm:$0x3]
  %v1952 = vld [vmem:[%s3] sm:$0x3]
  %v1953 = vrot.slane %v1945, 4
  %v1954 = vadd.f32 %v1945, %v1953
  %v1955 = vrot.slane %v1954, 2
  %v1956 = vadd.f32 %v1954, %v1955
  %v1957 = vrot.slane %v1956, 1
  %v1958 = vadd.f32 %v1956, %v1957
  %v1959 = vrot.slane %v1947, 4
  %v1960 = vadd.f32 %v1947, %v1959
  %v1961 = vrot.slane %v1960, 2
  %v1962 = vadd.f32 %v1960, %v1961
  %v1963 = vrot.slane %v1962, 1
  %v1964 = vadd.f32 %v1962, %v1963
  %v1965 = vrcp.pop 8.0
  %v1966 = vmul.f32 %v1958, %v1965
  %v1967 = vmul.f32 %v1964, %v1965
  %v1968 = vsub.f32 %v1945, %v1966
  %v1969 = vsub.f32 %v1947, %v1967
  %v1970 = vmul.f32 %v1968, %v1968
  %v1971 = vmul.f32 %v1969, %v1969
  %v1972 = vrot.slane %v1970, 4
  %v1973 = vadd.f32 %v1970, %v1972
  %v1974 = vrot.slane %v1973, 2
  %v1975 = vadd.f32 %v1973, %v1974
  %v1976 = vrot.slane %v1975, 1
  %v1977 = vadd.f32 %v1975, %v1976
  %v1978 = vrot.slane %v1971, 4
  %v1979 = vadd.f32 %v1971, %v1978
  %v1980 = vrot.slane %v1979, 2
  %v1981 = vadd.f32 %v1979, %v1980
  %v1982 = vrot.slane %v1981, 1
  %v1983 = vadd.f32 %v1981, %v1982
  %v1984 = vmul.f32 %v1977, %v1965
  %v1985 = vmul.f32 %v1983, %v1965
  %v1986 = vadd.f32 %v1984, 1e-05
  %v1987 = vadd.f32 %v1985, 1e-05
  %v1988 = vrsqrt.pop %v1986
  %v1989 = vrsqrt.pop %v1987
  %v1990 = vmul.f32 %v1968, %v1988
  %v1991 = vmul.f32 %v1969, %v1989
  %v1993 = vlaneseq
  %v1994 = vshrl.u32 %v1993, 7
  %v1995 = vsub.s32 0, %v1994
  %v1996 = vrot.slane %v1951, %v1995
  %v1997 = vlaneseq
  %v1998 = vshrl.u32 %v1997, 7
  %v1999 = vsub.s32 1, %v1998
  %v2000 = vrot.slane %v1951, %v1999
  %v2003 = vmul.f32 %v1990, %v1996
  %v2004 = vmul.f32 %v1991, %v2000
  %v2006 = vlaneseq
  %v2007 = vshrl.u32 %v2006, 7
  %v2008 = vsub.s32 0, %v2007
  %v2009 = vrot.slane %v1952, %v2008
  %v2010 = vlaneseq
  %v2011 = vshrl.u32 %v2010, 7
  %v2012 = vsub.s32 1, %v2011
  %v2013 = vrot.slane %v1952, %v2012
  %v2016 = vadd.f32 %v2003, %v2009
  %v2017 = vadd.f32 %v2004, %v2013
  %vm2018 = vcmp.ge.f32.partialorder %v2016, 0.0
  %vm2019 = vcmp.ge.f32.partialorder %v2017, 0.0
  %v2020 = vmul.f32 %v2016, 0.2
  %v2021 = vmul.f32 %v2017, 0.2
  %v2022 = vsel %vm2018, %v2016, %v2020
  %v2023 = vsel %vm2019, %v2017, %v2021
  %v2024 = vld [vmem:[%s4] sm:$0xff]
  %v2025 = vld [vmem:[%s4 + $0x8] sm:$0xff]
  %v2026 = vld [vmem:[%s4 + $0x10] sm:$0xff]
  %v2027 = vld [vmem:[%s4 + $0x18] sm:$0xff]
  %v2028 = vld [vmem:[%s4 + $0x20] sm:$0xff]
  %v2029 = vld [vmem:[%s4 + $0x28] sm:$0xff]
  %v2030 = vld [vmem:[%s4 + $0x30] sm:$0xff]
  %v2031 = vld [vmem:[%s4 + $0x38] sm:$0xff]
  %v2032 = vld [vmem:[%s4 + $0x40] sm:$0xff]
  %v2033 = vld [vmem:[%s4 + $0x48] sm:$0xff]
  %v2034 = vld [vmem:[%s4 + $0x50] sm:$0xff]
  %v2035 = vld [vmem:[%s4 + $0x58] sm:$0xff]
  %v2036 = vld [vmem:[%s4 + $0x60] sm:$0xff]
  %v2037 = vld [vmem:[%s4 + $0x68] sm:$0xff]
  %v2038 = vld [vmem:[%s4 + $0x70] sm:$0xff]
  %v2039 = vld [vmem:[%s4 + $0x78] sm:$0xff]
  %v2040 = vld [vmem:[%s4 + $0x80] sm:$0xff]
  %v2041 = vld [vmem:[%s4 + $0x88] sm:$0xff]
  %v2042 = vld [vmem:[%s4 + $0x90] sm:$0xff]
  %v2043 = vld [vmem:[%s4 + $0x98] sm:$0xff]
  %v2044 = vld [vmem:[%s4 + $0xa0] sm:$0xff]
  %v2045 = vld [vmem:[%s4 + $0xa8] sm:$0xff]
  %v2046 = vld [vmem:[%s4 + $0xb0] sm:$0xff]
  %v2047 = vld [vmem:[%s4 + $0xb8] sm:$0xff]
  %v2048 = vld [vmem:[%s4 + $0xc0] sm:$0xff]
  %v2049 = vld [vmem:[%s4 + $0xc8] sm:$0xff]
  %v2050 = vld [vmem:[%s4 + $0xd0] sm:$0xff]
  %v2051 = vld [vmem:[%s4 + $0xd8] sm:$0xff]
  %v2052 = vld [vmem:[%s4 + $0xe0] sm:$0xff]
  %v2053 = vld [vmem:[%s4 + $0xe8] sm:$0xff]
  %v2054 = vld [vmem:[%s4 + $0xf0] sm:$0xff]
  %v2055 = vld [vmem:[%s4 + $0xf8] sm:$0xff]
  %v2056 = vld [vmem:[%s5] sm:$0x3]
  %2057 = vmatprep.subr.mxu0 0.0
  %2058 = vmatpush1.msra.mxu0 %v2024
  %2059 = vmatprep.subr.mxu0 0.0
  %2060 = vmatpush1.msra.mxu0 %v2025
  %2061 = vmatprep.subr.mxu0 0.0
  %2062 = vmatpush1.msra.mxu0 %v2026
  %2063 = vmatprep.subr.mxu0 0.0
  %2064 = vmatpush1.msra.mxu0 %v2027
  %2065 = vmatprep.subr.mxu0 0.0
  %2066 = vmatpush1.msra.mxu0 %v2028
  %2067 = vmatprep.subr.mxu0 0.0
  %2068 = vmatpush1.msra.mxu0 %v2029
  %2069 = vmatprep.subr.mxu0 0.0
  %2070 = vmatpush1.msra.mxu0 %v2030
  %2071 = vmatprep.subr.mxu0 0.0
  %2072 = vmatpush1.msra.mxu0 %v2031
  %2073 = vmatprep.subr.mxu0 0.0
  %2074 = vmatpush1.msra.mxu0 %v2032
  %2075 = vmatprep.subr.mxu0 0.0
  %2076 = vmatpush1.msra.mxu0 %v2033
  %2077 = vmatprep.subr.mxu0 0.0
  %2078 = vmatpush1.msra.mxu0 %v2034
  %2079 = vmatprep.subr.mxu0 0.0
  %2080 = vmatpush1.msra.mxu0 %v2035
  %2081 = vmatprep.subr.mxu0 0.0
  %2082 = vmatpush1.msra.mxu0 %v2036
  %2083 = vmatprep.subr.mxu0 0.0
  %2084 = vmatpush1.msra.mxu0 %v2037
  %2085 = vmatprep.subr.mxu0 0.0
  %2086 = vmatpush1.msra.mxu0 %v2038
  %2087 = vmatprep.subr.mxu0 0.0
  %2088 = vmatpush1.msra.mxu0 %v2039
  %2089 = vmatprep.subr.mxu0 0.0
  %2090 = vmatpush1.msra.mxu0 %v2040
  %2091 = vmatprep.subr.mxu0 0.0
  %2092 = vmatpush1.msra.mxu0 %v2041
  %2093 = vmatprep.subr.mxu0 0.0
  %2094 = vmatpush1.msra.mxu0 %v2042
  %2095 = vmatprep.subr.mxu0 0.0
  %2096 = vmatpush1.msra.mxu0 %v2043
  %2097 = vmatprep.subr.mxu0 0.0
  %2098 = vmatpush1.msra.mxu0 %v2044
  %2099 = vmatprep.subr.mxu0 0.0
  %2100 = vmatpush1.msra.mxu0 %v2045
  %2101 = vmatprep.subr.mxu0 0.0
  %2102 = vmatpush1.msra.mxu0 %v2046
  %2103 = vmatprep.subr.mxu0 0.0
  %2104 = vmatpush1.msra.mxu0 %v2047
  %2105 = vmatprep.subr.mxu0 0.0
  %2106 = vmatpush1.msra.mxu0 %v2048
  %2107 = vmatprep.subr.mxu0 0.0
  %2108 = vmatpush1.msra.mxu0 %v2049
  %2109 = vmatprep.subr.mxu0 0.0
  %2110 = vmatpush1.msra.mxu0 %v2050
  %2111 = vmatprep.subr.mxu0 0.0
  %2112 = vmatpush1.msra.mxu0 %v2051
  %2113 = vmatprep.subr.mxu0 0.0
  %2114 = vmatpush1.msra.mxu0 %v2052
  %2115 = vmatprep.subr.mxu0 0.0
  %2116 = vmatpush1.msra.mxu0 %v2053
  %2117 = vmatprep.subr.mxu0 0.0
  %2118 = vmatpush1.msra.mxu0 %v2054
  %2119 = vmatprep.subr.mxu0 0.0
  %2120 = vmatpush1.msra.mxu0 %v2055
  %2121 = vmatprep.mubr.f32.mxu0 %v2023
  %2122 = vmatmul.mubr.f32.gmra.mrb[0].mxu0 %v2022
  %v2123 = vpop.f32.mrb[0].mxu0
  %v2124 = vadd.f32 0.0, %v2123
  %v2125 = vpop.f32.mrb[0].mxu0
  %2126 = vdwg.mxu0
  %vm2127 = vcmask 64512
  %v2129 = vsel %vm2127, %v2056, 0
  %2131 = vmatprep.subr.mxu0 0.0
  %2132 = vmatpush1.msra.mxu0 %v2124
  %2133 = vmatprep.subr.mxu0 0.0
  %2134 = vmatpush1.msra.mxu0 0.0
  %2135 = vmatprep.subr.mxu0 0.0
  %2136 = vmatpush1.msra.mxu0 0.0
  %2137 = vmatprep.subr.mxu0 0.0
  %2138 = vmatpush1.msra.mxu0 0.0
  %2139 = vmatprep.subr.mxu0 0.0
  %2140 = vmatpush1.msra.mxu0 0.0
  %2141 = vmatprep.subr.mxu0 0.0
  %2142 = vmatpush1.msra.mxu0 0.0
  %2143 = vmatprep.subr.mxu0 0.0
  %2144 = vmatpush1.msra.mxu0 0.0
  %2145 = vmatprep.subr.mxu0 0.0
  %2146 = vmatpush1.msra.mxu0 0.0
  %2147 = vmatprep.subr.mxu0 0.0
  %2148 = vmatpush1.msra.mxu0 0.0
  %2149 = vmatprep.subr.mxu0 0.0
  %2150 = vmatpush1.msra.mxu0 0.0
  %2151 = vmatprep.subr.mxu0 0.0
  %2152 = vmatpush1.msra.mxu0 0.0
  %2153 = vmatprep.subr.mxu0 0.0
  %2154 = vmatpush1.msra.mxu0 0.0
  %2155 = vmatprep.subr.mxu0 0.0
  %2156 = vmatpush1.msra.mxu0 0.0
  %2157 = vmatprep.subr.mxu0 0.0
  %2158 = vmatpush1.msra.mxu0 0.0
  %2159 = vmatprep.subr.mxu0 0.0
  %2160 = vmatpush1.msra.mxu0 0.0
  %2161 = vmatprep.subr.mxu0 0.0
  %2162 = vmatpush1.msra.mxu0 0.0
  %2163 = vmatprep.subr.mxu0 0.0
  %2164 = vmatpush1.msra.mxu0 0.0
  %2165 = vmatprep.subr.mxu0 0.0
  %2166 = vmatpush1.msra.mxu0 0.0
  %2167 = vmatprep.subr.mxu0 0.0
  %2168 = vmatpush1.msra.mxu0 0.0
  %2169 = vmatprep.subr.mxu0 0.0
  %2170 = vmatpush1.msra.mxu0 0.0
  %2171 = vmatprep.subr.mxu0 0.0
  %2172 = vmatpush1.msra.mxu0 0.0
  %2173 = vmatprep.subr.mxu0 0.0
  %2174 = vmatpush1.msra.mxu0 0.0
  %2175 = vmatprep.subr.mxu0 0.0
  %2176 = vmatpush1.msra.mxu0 0.0
  %2177 = vmatprep.subr.mxu0 0.0
  %2178 = vmatpush1.msra.mxu0 0.0
  %2179 = vmatprep.subr.mxu0 0.0
  %2180 = vmatpush1.msra.mxu0 0.0
  %2181 = vmatprep.subr.mxu0 0.0
  %2182 = vmatpush1.msra.mxu0 0.0
  %2183 = vmatprep.subr.mxu0 0.0
  %2184 = vmatpush1.msra.mxu0 0.0
  %2185 = vmatprep.subr.mxu0 0.0
  %2186 = vmatpush1.msra.mxu0 0.0
  %2187 = vmatprep.subr.mxu0 0.0
  %2188 = vmatpush1.msra.mxu0 0.0
  %2189 = vmatprep.subr.mxu0 0.0
  %2190 = vmatpush1.msra.mxu0 0.0
  %2191 = vmatprep.subr.mxu0 0.0
  %2192 = vmatpush1.msra.mxu0 0.0
  %2193 = vmatprep.subr.mxu0 0.0
  %2194 = vmatpush1.msra.mxu0 0.0
  %2195 = vmatprep.mubr.f32.mxu0 0.0
  %2196 = vmatmul.mubr.f32.gmra.mrb[0].mxu0 %v2129
  %v2197 = vpop.f32.mrb[0].mxu0
  %v2198 = vadd.f32 0.0, %v2197
  %v2199 = vpop.f32.mrb[0].mxu0
  %2200 = vdwg.mxu0
  %v2201 = vxor.u32 %v2198, 2147483648
  %v2202 = vmul.f32 %v2201, 1.442695
  %v2203 = vpow.pop %v2202
  %v2204 = vadd.f32 %v2203, 1.0
  %v2205 = vrcp.pop %v2204
  %v2206 = vmul.f32 1.0, %v2205
  %vm2207 = vcmask 1024
  %2208 = vst.msk [vmem:[%s6] sm:$0x3] %vm2207, %v2206
  // Predicated region
  $region26: #{discriminator_forward.5} parent=0 // pred_check
    _
  $region27: #{discriminator_forward.5} parent=0 // pred_check_branch
    %2210 = sbr.rel (0) target = $region29
  $region28: #{discriminator_forward.5} parent=0 // pred_region
    _
  $region29: #{discriminator_forward.5} parent=0 // pred_fallthru
    _
  // Predicated region
  $region30: #{discriminator_forward.5} parent=0 // pred_check
    _
  $region31: #{discriminator_forward.5} parent=0 // pred_check_branch
    %2212 = sbr.rel (0) target = $region33
  $region32: #{discriminator_forward.5} parent=0 // pred_region
    _
  $region33: #{discriminator_forward.5} parent=0 // pred_fallthru
    _

</llo_original>
